<compile_context>
chip_gen: v7x
topology: tpu7x:2x2x1
jax: 0.10.0
libtpu: 0.0.40
codegen_flags: <defaults>
</compile_context>

<pallas_src>
import functools

import jax
import jax.numpy as jnp
import numpy as np
from jax.experimental import pallas as pl
from jax.experimental.pallas import tpu as pltpu

HIDDEN = 128
FC1 = 500


def _round_up(x, m):
    return (x + m - 1) // m * m


# ---------------------------------------------------------------------------
# Kernel
# ---------------------------------------------------------------------------
def lm_kernel(ids_ref, gi0_ref, whh0_ref, wl1_ref, bias_ref, w1_ref, w2_ref,
              out_ref, *, seq_len, batch, batch_pad):
    H = HIDDEN
    T, B, Bp = seq_len, batch, batch_pad
    F1pad = w1_ref.shape[1]

    # Hoisted bias broadcasts (no per-step broadcast_in_dim inside the loop).
    bhn0 = jnp.broadcast_to(bias_ref[:, 0:H], (Bp, H))
    brz1 = jnp.broadcast_to(bias_ref[:, H:3 * H], (Bp, 2 * H))
    bin1 = jnp.broadcast_to(bias_ref[:, 3 * H:4 * H], (Bp, H))
    bhn1 = jnp.broadcast_to(bias_ref[:, 4 * H:5 * H], (Bp, H))
    pad_rows = jnp.zeros((Bp - B, 3 * H), jnp.float32) if Bp > B else None

    h0 = jnp.zeros((Bp, H), jnp.float32)
    h1 = jnp.zeros((Bp, H), jnp.float32)

    # Short, statically known sequence -> fully unrolled recurrence.
    for t in range(T):
        # Scalar-indexed gather of the precomputed layer-0 input gates
        # gi0[id] = emb[id] @ Wih0^T + [brz0 | bin0]  (ids come from SMEM).
        rows = [gi0_ref[ids_ref[t * B + b]] for b in range(B)]   # each (1, 3H)
        if pad_rows is not None:
            rows.append(pad_rows)
        gi0_t = jnp.concatenate(rows, axis=0)                    # (Bp, 3H)

        # ---- layer 0: only the h-dependent matmul remains ----
        gh0 = jnp.dot(h0, whh0_ref[...], preferred_element_type=jnp.float32)
        rz0 = jax.nn.sigmoid(gi0_t[:, :2 * H] + gh0[:, :2 * H])
        n0 = jnp.tanh(gi0_t[:, 2 * H:] + rz0[:, :H] * (gh0[:, 2 * H:] + bhn0))
        h0 = n0 + rz0[:, H:] * (h0 - n0)          # == (1-z)*n + z*h

        # ---- layer 1: single fused 256-deep matmul ----
        # columns: [gi_rz + gh_rz (2H) | gi_n (H) | gh_n (H)]
        x1 = jnp.concatenate([h0, h1], axis=1)                   # (Bp, 2H)
        g1 = jnp.dot(x1, wl1_ref[...], preferred_element_type=jnp.float32)
        rz1 = jax.nn.sigmoid(g1[:, :2 * H] + brz1)
        n1 = jnp.tanh(g1[:, 2 * H:3 * H] + bin1
                      + rz1[:, :H] * (g1[:, 3 * H:] + bhn1))
        h1 = n1 + rz1[:, H:] * (h1 - n1)

    # out.permute(1,2,0)[:, :, -1] == top-layer output at the last time step.
    out = jnp.maximum(h1, 0.0)                                            # relu
    out = jnp.maximum(
        jnp.dot(out, w1_ref[...], preferred_element_type=jnp.float32)
        + bias_ref[:, 5 * H:5 * H + F1pad], 0.0)                          # (Bp, F1pad)
    logits = (jnp.dot(out, w2_ref[...], preferred_element_type=jnp.float32)
              + bias_ref[:, 5 * H + F1pad:])                              # (Bp, Vpad)

    # Numerically stable softmax; padded columns carry a -1e30 bias -> exp==0.
    m = jnp.max(logits, axis=1, keepdims=True)
    e = jnp.exp(logits - m)
    denom = jnp.sum(e, axis=1, keepdims=True)
    inv = pl.reciprocal(denom, approx=True)       # EUP slot (idle here)
    inv = inv * (2.0 - denom * inv)               # one NR step -> full f32 accuracy
    out_ref[...] = e * inv


# ---------------------------------------------------------------------------
# Host-side parameter packing (done once)
# ---------------------------------------------------------------------------
def pack_params(params, vocab_size):
    """Fold emb @ Wih0^T (+ input-side and r/z hidden-side biases) into a
    gather table, fuse layer-1's two weights into one (2H,4H) matrix with
    zero blocks, pack all small biases into one lane-aligned array, and pad
    FC1->512 / vocab->multiple of 128 for lane-dense tiles."""
    H = HIDDEN
    V = vocab_size
    Vpad = _round_up(V, 128)
    F1pad = _round_up(FC1, 128)
    hi = jax.lax.Precision.HIGHEST

    # ---- layer 0: gi0 table ----
    brz0 = params["bih0"][:2 * H] + params["bhh0"][:2 * H]   # combined r/z bias
    bin0 = params["bih0"][2 * H:]
    gi0 = (jnp.dot(params["emb"], params["wih0"].T, precision=hi)
           + jnp.concatenate([brz0, bin0])[None, :])          # (V, 3H)
    gi0_tab = jnp.zeros((Vpad, 1, 3 * H), jnp.float32).at[:V, 0, :].set(gi0)

    # ---- layer 1: fused weight [[Wih1_rz, Wih1_n, 0], [Whh1_rz, 0, Whh1_n]] ----
    wih1_t = params["wih1"].T
    whh1_t = params["whh1"].T
    wl1 = jnp.zeros((2 * H, 4 * H), jnp.float32)
    wl1 = wl1.at[:H, :2 * H].set(wih1_t[:, :2 * H])
    wl1 = wl1.at[H:, :2 * H].set(whh1_t[:, :2 * H])
    wl1 = wl1.at[:H, 2 * H:3 * H].set(wih1_t[:, 2 * H:])
    wl1 = wl1.at[H:, 3 * H:].set(whh1_t[:, 2 * H:])

    bhn0 = params["bhh0"][2 * H:]
    brz1 = params["bih1"][:2 * H] + params["bhh1"][:2 * H]
    bin1 = params["bih1"][2 * H:]
    bhn1 = params["bhh1"][2 * H:]

    w1_t = jnp.zeros((H, F1pad), jnp.float32).at[:, :FC1].set(params["w1"].T)
    b1 = jnp.zeros((F1pad,), jnp.float32).at[:FC1].set(params["b1"])
    w2_t = jnp.zeros((F1pad, Vpad), jnp.float32).at[:FC1, :V].set(params["w2"].T)
    b2 = jnp.full((Vpad,), -1e30, jnp.float32).at[:V].set(params["b2"])

    # single combined bias input: [bhn0 | brz1 | bin1 | bhn1 | b1 | b2]
    biases = jnp.concatenate([bhn0, brz1, bin1, bhn1, b1, b2])[None, :]

    return dict(
        gi0_tab=gi0_tab,
        whh0_t=jnp.asarray(params["whh0"].T, jnp.float32),
        wl1=wl1,
        biases=biases,
        w1_t=w1_t,
        w2_t=w2_t,
    )


# ---------------------------------------------------------------------------
# Forward wrapper
# ---------------------------------------------------------------------------
@functools.partial(jax.jit, static_argnames=("vocab_size",))
def lm_forward(reply, packed, vocab_size):
    """reply: (B, T) int32 token ids  ->  (B, vocab_size) softmax probs."""
    B, T = reply.shape
    Bp = _round_up(max(B, 8), 8)                 # sublane-dense recurrence
    Vpad = packed["w2_t"].shape[1]

    # time-major flat ids: entry t*B + b == reply[b, t] (matches .permute(1,0,2))
    ids = jnp.transpose(reply).reshape(T * B).astype(jnp.int32)

    args = (ids, packed["gi0_tab"], packed["whh0_t"], packed["wl1"],
            packed["biases"], packed["w1_t"], packed["w2_t"])
    vmem = pl.BlockSpec(memory_space=pltpu.MemorySpace.VMEM)
    smem = pl.BlockSpec(memory_space=pltpu.MemorySpace.SMEM)
    kernel = functools.partial(lm_kernel, seq_len=T, batch=B, batch_pad=Bp)
    probs_pad = pl.pallas_call(
        kernel,
        out_shape=jax.ShapeDtypeStruct((Bp, Vpad), jnp.float32),
        in_specs=[smem] + [vmem] * (len(args) - 1),
        out_specs=vmem,
        compiler_params=pltpu.CompilerParams(
            vmem_limit_bytes=32 * 1024 * 1024),
    )(*args)
    return probs_pad[:B, :vocab_size]


# ---------------------------------------------------------------------------
# Parameter init + pure-JAX reference (mirrors torch semantics)
# ---------------------------------------------------------------------------
def init_params(key, vocab_size, embedding_dim):
    ks = jax.random.split(key, 16)
    H = HIDDEN
    u = lambda k, shape, bound: jax.random.uniform(
        k, shape, jnp.float32, minval=-bound, maxval=bound)
    bh = 1.0 / np.sqrt(H)
    b1 = 1.0 / np.sqrt(H)
    b2 = 1.0 / np.sqrt(FC1)
    return dict(
        emb=jax.random.normal(ks[0], (vocab_size, embedding_dim), jnp.float32),
        wih0=u(ks[1], (3 * H, embedding_dim), bh),
        whh0=u(ks[2], (3 * H, H), bh),
        bih0=u(ks[3], (3 * H,), bh),
        bhh0=u(ks[4], (3 * H,), bh),
        wih1=u(ks[5], (3 * H, H), bh),
        whh1=u(ks[6], (3 * H, H), bh),
        bih1=u(ks[7], (3 * H,), bh),
        bhh1=u(ks[8], (3 * H,), bh),
        w1=u(ks[9], (FC1, H), b1),
        b1=u(ks[10], (FC1,), b1),
        w2=u(ks[11], (vocab_size, FC1), b2),
        b2=u(ks[12], (vocab_size,), b2),
    )


def lm_forward_ref(reply, params):
    H = HIDDEN
    embed = jnp.transpose(params["emb"][reply], (1, 0, 2))  # (T, B, E)

    def cell(x, h, wih, whh, bih, bhh):
        gi = x @ wih.T + bih
        gh = h @ whh.T + bhh
        r = jax.nn.sigmoid(gi[:, :H] + gh[:, :H])
        z = jax.nn.sigmoid(gi[:, H:2 * H] + gh[:, H:2 * H])
        n = jnp.tanh(gi[:, 2 * H:] + r * gh[:, 2 * H:])
        return (1 - z) * n + z * h

    B = reply.shape[0]
    h0 = jnp.zeros((B, H), jnp.float32)
    h1 = jnp.zeros((B, H), jnp.float32)
    for t in range(embed.shape[0]):
        h0 = cell(embed[t], h0, params["wih0"], params["whh0"],
                  params["bih0"], params["bhh0"])
        h1 = cell(h0, h1, params["wih1"], params["whh1"],
                  params["bih1"], params["bhh1"])
    out = jax.nn.relu(h1)
    out = jax.nn.relu(out @ params["w1"].T + params["b1"])
    logits = out @ params["w2"].T + params["b2"]
    return jax.nn.softmax(logits, axis=1)


if __name__ == "__main__":
    # Small deterministic config: batch=2, seq=8, embedding_dim=32, vocab=50.
    B, T, E, V = 2, 8, 32, 50
    key = jax.random.PRNGKey(0)
    k_param, k_tok = jax.random.split(key)
    params = init_params(k_param, vocab_size=V, embedding_dim=E)
    packed = pack_params(params, vocab_size=V)
    reply = jax.random.randint(k_tok, (B, T), 0, V, dtype=jnp.int32)

    probs = lm_forward(reply, packed, vocab_size=V)
    jax.block_until_ready(probs)

    ref = lm_forward_ref(reply, params)
    np.testing.assert_allclose(np.asarray(probs), np.asarray(ref),
                               rtol=1e-4, atol=1e-5)
    np.testing.assert_allclose(np.asarray(probs).sum(axis=1),
                               np.ones(B), rtol=1e-4, atol=1e-5)
    print("KERNEL_OK")
</pallas_src>

<mosaic_0001>
module attributes {stable_mosaic.version = 11 : i64} {
  func.func @lm_kernel(%arg0: memref<16xi32, #tpu.memory_space<smem>>, %arg1: memref<128x1x384xf32, #tpu.memory_space<vmem>>, %arg2: memref<128x384xf32, #tpu.memory_space<vmem>>, %arg3: memref<256x512xf32, #tpu.memory_space<vmem>>, %arg4: memref<1x1280xf32, #tpu.memory_space<vmem>>, %arg5: memref<128x512xf32, #tpu.memory_space<vmem>>, %arg6: memref<512x128xf32, #tpu.memory_space<vmem>>, %arg7: memref<8x128xf32, #tpu.memory_space<vmem>>) attributes {dimension_semantics = [], scalar_prefetch = 0 : i64, scratch_operands = 0 : i64, tpu.core_type = #tpu.core_type<tc>} {
    %c0 = arith.constant 0 : index
    %c0_0 = arith.constant 0 : index
    %0 = vector.load %arg4[%c0, %c0_0] : memref<1x1280xf32, #tpu.memory_space<vmem>>, vector<1x128xf32>
    %1 = vector.shape_cast %0 : vector<1x128xf32> to vector<1x128xf32>
    %2 = vector.broadcast %1 : vector<1x128xf32> to vector<8x128xf32>
    %c0_1 = arith.constant 0 : index
    %c128 = arith.constant 128 : index
    %3 = vector.load %arg4[%c0_1, %c128] : memref<1x1280xf32, #tpu.memory_space<vmem>>, vector<1x256xf32>
    %4 = vector.shape_cast %3 : vector<1x256xf32> to vector<1x256xf32>
    %5 = vector.broadcast %4 : vector<1x256xf32> to vector<8x256xf32>
    %c0_2 = arith.constant 0 : index
    %c384 = arith.constant 384 : index
    %6 = vector.load %arg4[%c0_2, %c384] : memref<1x1280xf32, #tpu.memory_space<vmem>>, vector<1x128xf32>
    %7 = vector.shape_cast %6 : vector<1x128xf32> to vector<1x128xf32>
    %8 = vector.broadcast %7 : vector<1x128xf32> to vector<8x128xf32>
    %c0_3 = arith.constant 0 : index
    %c512 = arith.constant 512 : index
    %9 = vector.load %arg4[%c0_3, %c512] : memref<1x1280xf32, #tpu.memory_space<vmem>>, vector<1x128xf32>
    %10 = vector.shape_cast %9 : vector<1x128xf32> to vector<1x128xf32>
    %11 = vector.broadcast %10 : vector<1x128xf32> to vector<8x128xf32>
    %cst = arith.constant 0.000000e+00 : f32
    %12 = vector.broadcast %cst : f32 to vector<6x384xf32>
    %cst_4 = arith.constant 0.000000e+00 : f32
    %13 = vector.broadcast %cst_4 : f32 to vector<8x128xf32>
    %cst_5 = arith.constant 0.000000e+00 : f32
    %14 = vector.broadcast %cst_5 : f32 to vector<8x128xf32>
    %c0_6 = arith.constant 0 : index
    %15 = memref.load %arg0[%c0_6] : memref<16xi32, #tpu.memory_space<smem>>
    %16 = arith.index_cast %15 : i32 to index
    %c0_7 = arith.constant 0 : index
    %c0_8 = arith.constant 0 : index
    %17 = vector.load %arg1[%16, %c0_7, %c0_8] : memref<128x1x384xf32, #tpu.memory_space<vmem>>, vector<1x1x384xf32>
    %18 = vector.shape_cast %17 : vector<1x1x384xf32> to vector<1x384xf32>
    %c1 = arith.constant 1 : index
    %19 = memref.load %arg0[%c1] : memref<16xi32, #tpu.memory_space<smem>>
    %20 = arith.index_cast %19 : i32 to index
    %c0_9 = arith.constant 0 : index
    %c0_10 = arith.constant 0 : index
    %21 = vector.load %arg1[%20, %c0_9, %c0_10] : memref<128x1x384xf32, #tpu.memory_space<vmem>>, vector<1x1x384xf32>
    %22 = vector.shape_cast %21 : vector<1x1x384xf32> to vector<1x384xf32>
    %23 = tpu.concatenate %18, %22, %12 in 0 : vector<1x384xf32>, vector<1x384xf32>, vector<6x384xf32> -> vector<8x384xf32>
    %c0_11 = arith.constant 0 : index
    %c0_12 = arith.constant 0 : index
    %24 = vector.load %arg2[%c0_11, %c0_12] : memref<128x384xf32, #tpu.memory_space<vmem>>, vector<128x384xf32>
    %cst_13 = arith.constant dense<0.000000e+00> : vector<8x384xf32>
    %25 = tpu.matmul %13, %24, %cst_13 {dimension_numbers = #tpu.dot_dimension_numbers<[1], [0], [0], [1], [0, 0, 1, 1], [], []>} : vector<8x128xf32>, vector<128x384xf32>, vector<8x384xf32> -> vector<8x384xf32>
    %26 = vector.extract_strided_slice %23 {offsets = [0, 0], sizes = [8, 256], strides = [1, 1]} : vector<8x384xf32> to vector<8x256xf32>
    %27 = vector.extract_strided_slice %25 {offsets = [0, 0], sizes = [8, 256], strides = [1, 1]} : vector<8x384xf32> to vector<8x256xf32>
    %28 = arith.addf %26, %27 : vector<8x256xf32>
    %29 = arith.negf %28 : vector<8x256xf32>
    %30 = math.exp %29 : vector<8x256xf32>
    %cst_14 = arith.constant 1.000000e+00 : f32
    %31 = vector.broadcast %cst_14 : f32 to vector<8x256xf32>
    %32 = arith.addf %31, %30 : vector<8x256xf32>
    %33 = arith.divf %31, %32 : vector<8x256xf32>
    %34 = vector.extract_strided_slice %23 {offsets = [0, 256], sizes = [8, 128], strides = [1, 1]} : vector<8x384xf32> to vector<8x128xf32>
    %35 = vector.extract_strided_slice %33 {offsets = [0, 0], sizes = [8, 128], strides = [1, 1]} : vector<8x256xf32> to vector<8x128xf32>
    %36 = vector.extract_strided_slice %25 {offsets = [0, 256], sizes = [8, 128], strides = [1, 1]} : vector<8x384xf32> to vector<8x128xf32>
    %37 = arith.addf %36, %2 : vector<8x128xf32>
    %38 = arith.mulf %35, %37 : vector<8x128xf32>
    %39 = arith.addf %34, %38 : vector<8x128xf32>
    %40 = math.tanh %39 : vector<8x128xf32>
    %41 = vector.extract_strided_slice %33 {offsets = [0, 128], sizes = [8, 128], strides = [1, 1]} : vector<8x256xf32> to vector<8x128xf32>
    %42 = arith.subf %13, %40 : vector<8x128xf32>
    %43 = arith.mulf %41, %42 : vector<8x128xf32>
    %44 = arith.addf %40, %43 : vector<8x128xf32>
    %45 = tpu.concatenate %44, %14 in 1 : vector<8x128xf32>, vector<8x128xf32> -> vector<8x256xf32>
    %c0_15 = arith.constant 0 : index
    %c0_16 = arith.constant 0 : index
    %46 = vector.load %arg3[%c0_15, %c0_16] : memref<256x512xf32, #tpu.memory_space<vmem>>, vector<256x512xf32>
    %cst_17 = arith.constant dense<0.000000e+00> : vector<8x512xf32>
    %47 = tpu.matmul %45, %46, %cst_17 {dimension_numbers = #tpu.dot_dimension_numbers<[1], [0], [0], [1], [0, 0, 1, 1], [], []>} : vector<8x256xf32>, vector<256x512xf32>, vector<8x512xf32> -> vector<8x512xf32>
    %48 = vector.extract_strided_slice %47 {offsets = [0, 0], sizes = [8, 256], strides = [1, 1]} : vector<8x512xf32> to vector<8x256xf32>
    %49 = arith.addf %48, %5 : vector<8x256xf32>
    %50 = arith.negf %49 : vector<8x256xf32>
    %51 = math.exp %50 : vector<8x256xf32>
    %cst_18 = arith.constant 1.000000e+00 : f32
    %52 = vector.broadcast %cst_18 : f32 to vector<8x256xf32>
    %53 = arith.addf %52, %51 : vector<8x256xf32>
    %54 = arith.divf %52, %53 : vector<8x256xf32>
    %55 = vector.extract_strided_slice %47 {offsets = [0, 256], sizes = [8, 128], strides = [1, 1]} : vector<8x512xf32> to vector<8x128xf32>
    %56 = arith.addf %55, %8 : vector<8x128xf32>
    %57 = vector.extract_strided_slice %54 {offsets = [0, 0], sizes = [8, 128], strides = [1, 1]} : vector<8x256xf32> to vector<8x128xf32>
    %58 = vector.extract_strided_slice %47 {offsets = [0, 384], sizes = [8, 128], strides = [1, 1]} : vector<8x512xf32> to vector<8x128xf32>
    %59 = arith.addf %58, %11 : vector<8x128xf32>
    %60 = arith.mulf %57, %59 : vector<8x128xf32>
    %61 = arith.addf %56, %60 : vector<8x128xf32>
    %62 = math.tanh %61 : vector<8x128xf32>
    %63 = vector.extract_strided_slice %54 {offsets = [0, 128], sizes = [8, 128], strides = [1, 1]} : vector<8x256xf32> to vector<8x128xf32>
    %64 = arith.subf %14, %62 : vector<8x128xf32>
    %65 = arith.mulf %63, %64 : vector<8x128xf32>
    %66 = arith.addf %62, %65 : vector<8x128xf32>
    %c2 = arith.constant 2 : index
    %67 = memref.load %arg0[%c2] : memref<16xi32, #tpu.memory_space<smem>>
    %68 = arith.index_cast %67 : i32 to index
    %c0_19 = arith.constant 0 : index
    %c0_20 = arith.constant 0 : index
    %69 = vector.load %arg1[%68, %c0_19, %c0_20] : memref<128x1x384xf32, #tpu.memory_space<vmem>>, vector<1x1x384xf32>
    %70 = vector.shape_cast %69 : vector<1x1x384xf32> to vector<1x384xf32>
    %c3 = arith.constant 3 : index
    %71 = memref.load %arg0[%c3] : memref<16xi32, #tpu.memory_space<smem>>
    %72 = arith.index_cast %71 : i32 to index
    %c0_21 = arith.constant 0 : index
    %c0_22 = arith.constant 0 : index
    %73 = vector.load %arg1[%72, %c0_21, %c0_22] : memref<128x1x384xf32, #tpu.memory_space<vmem>>, vector<1x1x384xf32>
    %74 = vector.shape_cast %73 : vector<1x1x384xf32> to vector<1x384xf32>
    %75 = tpu.concatenate %70, %74, %12 in 0 : vector<1x384xf32>, vector<1x384xf32>, vector<6x384xf32> -> vector<8x384xf32>
    %c0_23 = arith.constant 0 : index
    %c0_24 = arith.constant 0 : index
    %76 = vector.load %arg2[%c0_23, %c0_24] : memref<128x384xf32, #tpu.memory_space<vmem>>, vector<128x384xf32>
    %cst_25 = arith.constant dense<0.000000e+00> : vector<8x384xf32>
    %77 = tpu.matmul %44, %76, %cst_25 {dimension_numbers = #tpu.dot_dimension_numbers<[1], [0], [0], [1], [0, 0, 1, 1], [], []>} : vector<8x128xf32>, vector<128x384xf32>, vector<8x384xf32> -> vector<8x384xf32>
    %78 = vector.extract_strided_slice %75 {offsets = [0, 0], sizes = [8, 256], strides = [1, 1]} : vector<8x384xf32> to vector<8x256xf32>
    %79 = vector.extract_strided_slice %77 {offsets = [0, 0], sizes = [8, 256], strides = [1, 1]} : vector<8x384xf32> to vector<8x256xf32>
    %80 = arith.addf %78, %79 : vector<8x256xf32>
    %81 = arith.negf %80 : vector<8x256xf32>
    %82 = math.exp %81 : vector<8x256xf32>
    %cst_26 = arith.constant 1.000000e+00 : f32
    %83 = vector.broadcast %cst_26 : f32 to vector<8x256xf32>
    %84 = arith.addf %83, %82 : vector<8x256xf32>
    %85 = arith.divf %83, %84 : vector<8x256xf32>
    %86 = vector.extract_strided_slice %75 {offsets = [0, 256], sizes = [8, 128], strides = [1, 1]} : vector<8x384xf32> to vector<8x128xf32>
    %87 = vector.extract_strided_slice %85 {offsets = [0, 0], sizes = [8, 128], strides = [1, 1]} : vector<8x256xf32> to vector<8x128xf32>
    %88 = vector.extract_strided_slice %77 {offsets = [0, 256], sizes = [8, 128], strides = [1, 1]} : vector<8x384xf32> to vector<8x128xf32>
    %89 = arith.addf %88, %2 : vector<8x128xf32>
    %90 = arith.mulf %87, %89 : vector<8x128xf32>
    %91 = arith.addf %86, %90 : vector<8x128xf32>
    %92 = math.tanh %91 : vector<8x128xf32>
    %93 = vector.extract_strided_slice %85 {offsets = [0, 128], sizes = [8, 128], strides = [1, 1]} : vector<8x256xf32> to vector<8x128xf32>
    %94 = arith.subf %44, %92 : vector<8x128xf32>
    %95 = arith.mulf %93, %94 : vector<8x128xf32>
    %96 = arith.addf %92, %95 : vector<8x128xf32>
    %97 = tpu.concatenate %96, %66 in 1 : vector<8x128xf32>, vector<8x128xf32> -> vector<8x256xf32>
    %c0_27 = arith.constant 0 : index
    %c0_28 = arith.constant 0 : index
    %98 = vector.load %arg3[%c0_27, %c0_28] : memref<256x512xf32, #tpu.memory_space<vmem>>, vector<256x512xf32>
    %cst_29 = arith.constant dense<0.000000e+00> : vector<8x512xf32>
    %99 = tpu.matmul %97, %98, %cst_29 {dimension_numbers = #tpu.dot_dimension_numbers<[1], [0], [0], [1], [0, 0, 1, 1], [], []>} : vector<8x256xf32>, vector<256x512xf32>, vector<8x512xf32> -> vector<8x512xf32>
    %100 = vector.extract_strided_slice %99 {offsets = [0, 0], sizes = [8, 256], strides = [1, 1]} : vector<8x512xf32> to vector<8x256xf32>
    %101 = arith.addf %100, %5 : vector<8x256xf32>
    %102 = arith.negf %101 : vector<8x256xf32>
    %103 = math.exp %102 : vector<8x256xf32>
    %cst_30 = arith.constant 1.000000e+00 : f32
    %104 = vector.broadcast %cst_30 : f32 to vector<8x256xf32>
    %105 = arith.addf %104, %103 : vector<8x256xf32>
    %106 = arith.divf %104, %105 : vector<8x256xf32>
    %107 = vector.extract_strided_slice %99 {offsets = [0, 256], sizes = [8, 128], strides = [1, 1]} : vector<8x512xf32> to vector<8x128xf32>
    %108 = arith.addf %107, %8 : vector<8x128xf32>
    %109 = vector.extract_strided_slice %106 {offsets = [0, 0], sizes = [8, 128], strides = [1, 1]} : vector<8x256xf32> to vector<8x128xf32>
    %110 = vector.extract_strided_slice %99 {offsets = [0, 384], sizes = [8, 128], strides = [1, 1]} : vector<8x512xf32> to vector<8x128xf32>
    %111 = arith.addf %110, %11 : vector<8x128xf32>
    %112 = arith.mulf %109, %111 : vector<8x128xf32>
    %113 = arith.addf %108, %112 : vector<8x128xf32>
    %114 = math.tanh %113 : vector<8x128xf32>
    %115 = vector.extract_strided_slice %106 {offsets = [0, 128], sizes = [8, 128], strides = [1, 1]} : vector<8x256xf32> to vector<8x128xf32>
    %116 = arith.subf %66, %114 : vector<8x128xf32>
    %117 = arith.mulf %115, %116 : vector<8x128xf32>
    %118 = arith.addf %114, %117 : vector<8x128xf32>
    %c4 = arith.constant 4 : index
    %119 = memref.load %arg0[%c4] : memref<16xi32, #tpu.memory_space<smem>>
    %120 = arith.index_cast %119 : i32 to index
    %c0_31 = arith.constant 0 : index
    %c0_32 = arith.constant 0 : index
    %121 = vector.load %arg1[%120, %c0_31, %c0_32] : memref<128x1x384xf32, #tpu.memory_space<vmem>>, vector<1x1x384xf32>
    %122 = vector.shape_cast %121 : vector<1x1x384xf32> to vector<1x384xf32>
    %c5 = arith.constant 5 : index
    %123 = memref.load %arg0[%c5] : memref<16xi32, #tpu.memory_space<smem>>
    %124 = arith.index_cast %123 : i32 to index
    %c0_33 = arith.constant 0 : index
    %c0_34 = arith.constant 0 : index
    %125 = vector.load %arg1[%124, %c0_33, %c0_34] : memref<128x1x384xf32, #tpu.memory_space<vmem>>, vector<1x1x384xf32>
    %126 = vector.shape_cast %125 : vector<1x1x384xf32> to vector<1x384xf32>
    %127 = tpu.concatenate %122, %126, %12 in 0 : vector<1x384xf32>, vector<1x384xf32>, vector<6x384xf32> -> vector<8x384xf32>
    %c0_35 = arith.constant 0 : index
    %c0_36 = arith.constant 0 : index
    %128 = vector.load %arg2[%c0_35, %c0_36] : memref<128x384xf32, #tpu.memory_space<vmem>>, vector<128x384xf32>
    %cst_37 = arith.constant dense<0.000000e+00> : vector<8x384xf32>
    %129 = tpu.matmul %96, %128, %cst_37 {dimension_numbers = #tpu.dot_dimension_numbers<[1], [0], [0], [1], [0, 0, 1, 1], [], []>} : vector<8x128xf32>, vector<128x384xf32>, vector<8x384xf32> -> vector<8x384xf32>
    %130 = vector.extract_strided_slice %127 {offsets = [0, 0], sizes = [8, 256], strides = [1, 1]} : vector<8x384xf32> to vector<8x256xf32>
    %131 = vector.extract_strided_slice %129 {offsets = [0, 0], sizes = [8, 256], strides = [1, 1]} : vector<8x384xf32> to vector<8x256xf32>
    %132 = arith.addf %130, %131 : vector<8x256xf32>
    %133 = arith.negf %132 : vector<8x256xf32>
    %134 = math.exp %133 : vector<8x256xf32>
    %cst_38 = arith.constant 1.000000e+00 : f32
    %135 = vector.broadcast %cst_38 : f32 to vector<8x256xf32>
    %136 = arith.addf %135, %134 : vector<8x256xf32>
    %137 = arith.divf %135, %136 : vector<8x256xf32>
    %138 = vector.extract_strided_slice %127 {offsets = [0, 256], sizes = [8, 128], strides = [1, 1]} : vector<8x384xf32> to vector<8x128xf32>
    %139 = vector.extract_strided_slice %137 {offsets = [0, 0], sizes = [8, 128], strides = [1, 1]} : vector<8x256xf32> to vector<8x128xf32>
    %140 = vector.extract_strided_slice %129 {offsets = [0, 256], sizes = [8, 128], strides = [1, 1]} : vector<8x384xf32> to vector<8x128xf32>
    %141 = arith.addf %140, %2 : vector<8x128xf32>
    %142 = arith.mulf %139, %141 : vector<8x128xf32>
    %143 = arith.addf %138, %142 : vector<8x128xf32>
    %144 = math.tanh %143 : vector<8x128xf32>
    %145 = vector.extract_strided_slice %137 {offsets = [0, 128], sizes = [8, 128], strides = [1, 1]} : vector<8x256xf32> to vector<8x128xf32>
    %146 = arith.subf %96, %144 : vector<8x128xf32>
    %147 = arith.mulf %145, %146 : vector<8x128xf32>
    %148 = arith.addf %144, %147 : vector<8x128xf32>
    %149 = tpu.concatenate %148, %118 in 1 : vector<8x128xf32>, vector<8x128xf32> -> vector<8x256xf32>
    %c0_39 = arith.constant 0 : index
    %c0_40 = arith.constant 0 : index
    %150 = vector.load %arg3[%c0_39, %c0_40] : memref<256x512xf32, #tpu.memory_space<vmem>>, vector<256x512xf32>
    %cst_41 = arith.constant dense<0.000000e+00> : vector<8x512xf32>
    %151 = tpu.matmul %149, %150, %cst_41 {dimension_numbers = #tpu.dot_dimension_numbers<[1], [0], [0], [1], [0, 0, 1, 1], [], []>} : vector<8x256xf32>, vector<256x512xf32>, vector<8x512xf32> -> vector<8x512xf32>
    %152 = vector.extract_strided_slice %151 {offsets = [0, 0], sizes = [8, 256], strides = [1, 1]} : vector<8x512xf32> to vector<8x256xf32>
    %153 = arith.addf %152, %5 : vector<8x256xf32>
    %154 = arith.negf %153 : vector<8x256xf32>
    %155 = math.exp %154 : vector<8x256xf32>
    %cst_42 = arith.constant 1.000000e+00 : f32
    %156 = vector.broadcast %cst_42 : f32 to vector<8x256xf32>
    %157 = arith.addf %156, %155 : vector<8x256xf32>
    %158 = arith.divf %156, %157 : vector<8x256xf32>
    %159 = vector.extract_strided_slice %151 {offsets = [0, 256], sizes = [8, 128], strides = [1, 1]} : vector<8x512xf32> to vector<8x128xf32>
    %160 = arith.addf %159, %8 : vector<8x128xf32>
    %161 = vector.extract_strided_slice %158 {offsets = [0, 0], sizes = [8, 128], strides = [1, 1]} : vector<8x256xf32> to vector<8x128xf32>
    %162 = vector.extract_strided_slice %151 {offsets = [0, 384], sizes = [8, 128], strides = [1, 1]} : vector<8x512xf32> to vector<8x128xf32>
    %163 = arith.addf %162, %11 : vector<8x128xf32>
    %164 = arith.mulf %161, %163 : vector<8x128xf32>
    %165 = arith.addf %160, %164 : vector<8x128xf32>
    %166 = math.tanh %165 : vector<8x128xf32>
    %167 = vector.extract_strided_slice %158 {offsets = [0, 128], sizes = [8, 128], strides = [1, 1]} : vector<8x256xf32> to vector<8x128xf32>
    %168 = arith.subf %118, %166 : vector<8x128xf32>
    %169 = arith.mulf %167, %168 : vector<8x128xf32>
    %170 = arith.addf %166, %169 : vector<8x128xf32>
    %c6 = arith.constant 6 : index
    %171 = memref.load %arg0[%c6] : memref<16xi32, #tpu.memory_space<smem>>
    %172 = arith.index_cast %171 : i32 to index
    %c0_43 = arith.constant 0 : index
    %c0_44 = arith.constant 0 : index
    %173 = vector.load %arg1[%172, %c0_43, %c0_44] : memref<128x1x384xf32, #tpu.memory_space<vmem>>, vector<1x1x384xf32>
    %174 = vector.shape_cast %173 : vector<1x1x384xf32> to vector<1x384xf32>
    %c7 = arith.constant 7 : index
    %175 = memref.load %arg0[%c7] : memref<16xi32, #tpu.memory_space<smem>>
    %176 = arith.index_cast %175 : i32 to index
    %c0_45 = arith.constant 0 : index
    %c0_46 = arith.constant 0 : index
    %177 = vector.load %arg1[%176, %c0_45, %c0_46] : memref<128x1x384xf32, #tpu.memory_space<vmem>>, vector<1x1x384xf32>
    %178 = vector.shape_cast %177 : vector<1x1x384xf32> to vector<1x384xf32>
    %179 = tpu.concatenate %174, %178, %12 in 0 : vector<1x384xf32>, vector<1x384xf32>, vector<6x384xf32> -> vector<8x384xf32>
    %c0_47 = arith.constant 0 : index
    %c0_48 = arith.constant 0 : index
    %180 = vector.load %arg2[%c0_47, %c0_48] : memref<128x384xf32, #tpu.memory_space<vmem>>, vector<128x384xf32>
    %cst_49 = arith.constant dense<0.000000e+00> : vector<8x384xf32>
    %181 = tpu.matmul %148, %180, %cst_49 {dimension_numbers = #tpu.dot_dimension_numbers<[1], [0], [0], [1], [0, 0, 1, 1], [], []>} : vector<8x128xf32>, vector<128x384xf32>, vector<8x384xf32> -> vector<8x384xf32>
    %182 = vector.extract_strided_slice %179 {offsets = [0, 0], sizes = [8, 256], strides = [1, 1]} : vector<8x384xf32> to vector<8x256xf32>
    %183 = vector.extract_strided_slice %181 {offsets = [0, 0], sizes = [8, 256], strides = [1, 1]} : vector<8x384xf32> to vector<8x256xf32>
    %184 = arith.addf %182, %183 : vector<8x256xf32>
    %185 = arith.negf %184 : vector<8x256xf32>
    %186 = math.exp %185 : vector<8x256xf32>
    %cst_50 = arith.constant 1.000000e+00 : f32
    %187 = vector.broadcast %cst_50 : f32 to vector<8x256xf32>
    %188 = arith.addf %187, %186 : vector<8x256xf32>
    %189 = arith.divf %187, %188 : vector<8x256xf32>
    %190 = vector.extract_strided_slice %179 {offsets = [0, 256], sizes = [8, 128], strides = [1, 1]} : vector<8x384xf32> to vector<8x128xf32>
    %191 = vector.extract_strided_slice %189 {offsets = [0, 0], sizes = [8, 128], strides = [1, 1]} : vector<8x256xf32> to vector<8x128xf32>
    %192 = vector.extract_strided_slice %181 {offsets = [0, 256], sizes = [8, 128], strides = [1, 1]} : vector<8x384xf32> to vector<8x128xf32>
    %193 = arith.addf %192, %2 : vector<8x128xf32>
    %194 = arith.mulf %191, %193 : vector<8x128xf32>
    %195 = arith.addf %190, %194 : vector<8x128xf32>
    %196 = math.tanh %195 : vector<8x128xf32>
    %197 = vector.extract_strided_slice %189 {offsets = [0, 128], sizes = [8, 128], strides = [1, 1]} : vector<8x256xf32> to vector<8x128xf32>
    %198 = arith.subf %148, %196 : vector<8x128xf32>
    %199 = arith.mulf %197, %198 : vector<8x128xf32>
    %200 = arith.addf %196, %199 : vector<8x128xf32>
    %201 = tpu.concatenate %200, %170 in 1 : vector<8x128xf32>, vector<8x128xf32> -> vector<8x256xf32>
    %c0_51 = arith.constant 0 : index
    %c0_52 = arith.constant 0 : index
    %202 = vector.load %arg3[%c0_51, %c0_52] : memref<256x512xf32, #tpu.memory_space<vmem>>, vector<256x512xf32>
    %cst_53 = arith.constant dense<0.000000e+00> : vector<8x512xf32>
    %203 = tpu.matmul %201, %202, %cst_53 {dimension_numbers = #tpu.dot_dimension_numbers<[1], [0], [0], [1], [0, 0, 1, 1], [], []>} : vector<8x256xf32>, vector<256x512xf32>, vector<8x512xf32> -> vector<8x512xf32>
    %204 = vector.extract_strided_slice %203 {offsets = [0, 0], sizes = [8, 256], strides = [1, 1]} : vector<8x512xf32> to vector<8x256xf32>
    %205 = arith.addf %204, %5 : vector<8x256xf32>
    %206 = arith.negf %205 : vector<8x256xf32>
    %207 = math.exp %206 : vector<8x256xf32>
    %cst_54 = arith.constant 1.000000e+00 : f32
    %208 = vector.broadcast %cst_54 : f32 to vector<8x256xf32>
    %209 = arith.addf %208, %207 : vector<8x256xf32>
    %210 = arith.divf %208, %209 : vector<8x256xf32>
    %211 = vector.extract_strided_slice %203 {offsets = [0, 256], sizes = [8, 128], strides = [1, 1]} : vector<8x512xf32> to vector<8x128xf32>
    %212 = arith.addf %211, %8 : vector<8x128xf32>
    %213 = vector.extract_strided_slice %210 {offsets = [0, 0], sizes = [8, 128], strides = [1, 1]} : vector<8x256xf32> to vector<8x128xf32>
    %214 = vector.extract_strided_slice %203 {offsets = [0, 384], sizes = [8, 128], strides = [1, 1]} : vector<8x512xf32> to vector<8x128xf32>
    %215 = arith.addf %214, %11 : vector<8x128xf32>
    %216 = arith.mulf %213, %215 : vector<8x128xf32>
    %217 = arith.addf %212, %216 : vector<8x128xf32>
    %218 = math.tanh %217 : vector<8x128xf32>
    %219 = vector.extract_strided_slice %210 {offsets = [0, 128], sizes = [8, 128], strides = [1, 1]} : vector<8x256xf32> to vector<8x128xf32>
    %220 = arith.subf %170, %218 : vector<8x128xf32>
    %221 = arith.mulf %219, %220 : vector<8x128xf32>
    %222 = arith.addf %218, %221 : vector<8x128xf32>
    %c8 = arith.constant 8 : index
    %223 = memref.load %arg0[%c8] : memref<16xi32, #tpu.memory_space<smem>>
    %224 = arith.index_cast %223 : i32 to index
    %c0_55 = arith.constant 0 : index
    %c0_56 = arith.constant 0 : index
    %225 = vector.load %arg1[%224, %c0_55, %c0_56] : memref<128x1x384xf32, #tpu.memory_space<vmem>>, vector<1x1x384xf32>
    %226 = vector.shape_cast %225 : vector<1x1x384xf32> to vector<1x384xf32>
    %c9 = arith.constant 9 : index
    %227 = memref.load %arg0[%c9] : memref<16xi32, #tpu.memory_space<smem>>
    %228 = arith.index_cast %227 : i32 to index
    %c0_57 = arith.constant 0 : index
    %c0_58 = arith.constant 0 : index
    %229 = vector.load %arg1[%228, %c0_57, %c0_58] : memref<128x1x384xf32, #tpu.memory_space<vmem>>, vector<1x1x384xf32>
    %230 = vector.shape_cast %229 : vector<1x1x384xf32> to vector<1x384xf32>
    %231 = tpu.concatenate %226, %230, %12 in 0 : vector<1x384xf32>, vector<1x384xf32>, vector<6x384xf32> -> vector<8x384xf32>
    %c0_59 = arith.constant 0 : index
    %c0_60 = arith.constant 0 : index
    %232 = vector.load %arg2[%c0_59, %c0_60] : memref<128x384xf32, #tpu.memory_space<vmem>>, vector<128x384xf32>
    %cst_61 = arith.constant dense<0.000000e+00> : vector<8x384xf32>
    %233 = tpu.matmul %200, %232, %cst_61 {dimension_numbers = #tpu.dot_dimension_numbers<[1], [0], [0], [1], [0, 0, 1, 1], [], []>} : vector<8x128xf32>, vector<128x384xf32>, vector<8x384xf32> -> vector<8x384xf32>
    %234 = vector.extract_strided_slice %231 {offsets = [0, 0], sizes = [8, 256], strides = [1, 1]} : vector<8x384xf32> to vector<8x256xf32>
    %235 = vector.extract_strided_slice %233 {offsets = [0, 0], sizes = [8, 256], strides = [1, 1]} : vector<8x384xf32> to vector<8x256xf32>
    %236 = arith.addf %234, %235 : vector<8x256xf32>
    %237 = arith.negf %236 : vector<8x256xf32>
    %238 = math.exp %237 : vector<8x256xf32>
    %cst_62 = arith.constant 1.000000e+00 : f32
    %239 = vector.broadcast %cst_62 : f32 to vector<8x256xf32>
    %240 = arith.addf %239, %238 : vector<8x256xf32>
    %241 = arith.divf %239, %240 : vector<8x256xf32>
    %242 = vector.extract_strided_slice %231 {offsets = [0, 256], sizes = [8, 128], strides = [1, 1]} : vector<8x384xf32> to vector<8x128xf32>
    %243 = vector.extract_strided_slice %241 {offsets = [0, 0], sizes = [8, 128], strides = [1, 1]} : vector<8x256xf32> to vector<8x128xf32>
    %244 = vector.extract_strided_slice %233 {offsets = [0, 256], sizes = [8, 128], strides = [1, 1]} : vector<8x384xf32> to vector<8x128xf32>
    %245 = arith.addf %244, %2 : vector<8x128xf32>
    %246 = arith.mulf %243, %245 : vector<8x128xf32>
    %247 = arith.addf %242, %246 : vector<8x128xf32>
    %248 = math.tanh %247 : vector<8x128xf32>
    %249 = vector.extract_strided_slice %241 {offsets = [0, 128], sizes = [8, 128], strides = [1, 1]} : vector<8x256xf32> to vector<8x128xf32>
    %250 = arith.subf %200, %248 : vector<8x128xf32>
    %251 = arith.mulf %249, %250 : vector<8x128xf32>
    %252 = arith.addf %248, %251 : vector<8x128xf32>
    %253 = tpu.concatenate %252, %222 in 1 : vector<8x128xf32>, vector<8x128xf32> -> vector<8x256xf32>
    %c0_63 = arith.constant 0 : index
    %c0_64 = arith.constant 0 : index
    %254 = vector.load %arg3[%c0_63, %c0_64] : memref<256x512xf32, #tpu.memory_space<vmem>>, vector<256x512xf32>
    %cst_65 = arith.constant dense<0.000000e+00> : vector<8x512xf32>
    %255 = tpu.matmul %253, %254, %cst_65 {dimension_numbers = #tpu.dot_dimension_numbers<[1], [0], [0], [1], [0, 0, 1, 1], [], []>} : vector<8x256xf32>, vector<256x512xf32>, vector<8x512xf32> -> vector<8x512xf32>
    %256 = vector.extract_strided_slice %255 {offsets = [0, 0], sizes = [8, 256], strides = [1, 1]} : vector<8x512xf32> to vector<8x256xf32>
    %257 = arith.addf %256, %5 : vector<8x256xf32>
    %258 = arith.negf %257 : vector<8x256xf32>
    %259 = math.exp %258 : vector<8x256xf32>
    %cst_66 = arith.constant 1.000000e+00 : f32
    %260 = vector.broadcast %cst_66 : f32 to vector<8x256xf32>
    %261 = arith.addf %260, %259 : vector<8x256xf32>
    %262 = arith.divf %260, %261 : vector<8x256xf32>
    %263 = vector.extract_strided_slice %255 {offsets = [0, 256], sizes = [8, 128], strides = [1, 1]} : vector<8x512xf32> to vector<8x128xf32>
    %264 = arith.addf %263, %8 : vector<8x128xf32>
    %265 = vector.extract_strided_slice %262 {offsets = [0, 0], sizes = [8, 128], strides = [1, 1]} : vector<8x256xf32> to vector<8x128xf32>
    %266 = vector.extract_strided_slice %255 {offsets = [0, 384], sizes = [8, 128], strides = [1, 1]} : vector<8x512xf32> to vector<8x128xf32>
    %267 = arith.addf %266, %11 : vector<8x128xf32>
    %268 = arith.mulf %265, %267 : vector<8x128xf32>
    %269 = arith.addf %264, %268 : vector<8x128xf32>
    %270 = math.tanh %269 : vector<8x128xf32>
    %271 = vector.extract_strided_slice %262 {offsets = [0, 128], sizes = [8, 128], strides = [1, 1]} : vector<8x256xf32> to vector<8x128xf32>
    %272 = arith.subf %222, %270 : vector<8x128xf32>
    %273 = arith.mulf %271, %272 : vector<8x128xf32>
    %274 = arith.addf %270, %273 : vector<8x128xf32>
    %c10 = arith.constant 10 : index
    %275 = memref.load %arg0[%c10] : memref<16xi32, #tpu.memory_space<smem>>
    %276 = arith.index_cast %275 : i32 to index
    %c0_67 = arith.constant 0 : index
    %c0_68 = arith.constant 0 : index
    %277 = vector.load %arg1[%276, %c0_67, %c0_68] : memref<128x1x384xf32, #tpu.memory_space<vmem>>, vector<1x1x384xf32>
    %278 = vector.shape_cast %277 : vector<1x1x384xf32> to vector<1x384xf32>
    %c11 = arith.constant 11 : index
    %279 = memref.load %arg0[%c11] : memref<16xi32, #tpu.memory_space<smem>>
    %280 = arith.index_cast %279 : i32 to index
    %c0_69 = arith.constant 0 : index
    %c0_70 = arith.constant 0 : index
    %281 = vector.load %arg1[%280, %c0_69, %c0_70] : memref<128x1x384xf32, #tpu.memory_space<vmem>>, vector<1x1x384xf32>
    %282 = vector.shape_cast %281 : vector<1x1x384xf32> to vector<1x384xf32>
    %283 = tpu.concatenate %278, %282, %12 in 0 : vector<1x384xf32>, vector<1x384xf32>, vector<6x384xf32> -> vector<8x384xf32>
    %c0_71 = arith.constant 0 : index
    %c0_72 = arith.constant 0 : index
    %284 = vector.load %arg2[%c0_71, %c0_72] : memref<128x384xf32, #tpu.memory_space<vmem>>, vector<128x384xf32>
    %cst_73 = arith.constant dense<0.000000e+00> : vector<8x384xf32>
    %285 = tpu.matmul %252, %284, %cst_73 {dimension_numbers = #tpu.dot_dimension_numbers<[1], [0], [0], [1], [0, 0, 1, 1], [], []>} : vector<8x128xf32>, vector<128x384xf32>, vector<8x384xf32> -> vector<8x384xf32>
    %286 = vector.extract_strided_slice %283 {offsets = [0, 0], sizes = [8, 256], strides = [1, 1]} : vector<8x384xf32> to vector<8x256xf32>
    %287 = vector.extract_strided_slice %285 {offsets = [0, 0], sizes = [8, 256], strides = [1, 1]} : vector<8x384xf32> to vector<8x256xf32>
    %288 = arith.addf %286, %287 : vector<8x256xf32>
    %289 = arith.negf %288 : vector<8x256xf32>
    %290 = math.exp %289 : vector<8x256xf32>
    %cst_74 = arith.constant 1.000000e+00 : f32
    %291 = vector.broadcast %cst_74 : f32 to vector<8x256xf32>
    %292 = arith.addf %291, %290 : vector<8x256xf32>
    %293 = arith.divf %291, %292 : vector<8x256xf32>
    %294 = vector.extract_strided_slice %283 {offsets = [0, 256], sizes = [8, 128], strides = [1, 1]} : vector<8x384xf32> to vector<8x128xf32>
    %295 = vector.extract_strided_slice %293 {offsets = [0, 0], sizes = [8, 128], strides = [1, 1]} : vector<8x256xf32> to vector<8x128xf32>
    %296 = vector.extract_strided_slice %285 {offsets = [0, 256], sizes = [8, 128], strides = [1, 1]} : vector<8x384xf32> to vector<8x128xf32>
    %297 = arith.addf %296, %2 : vector<8x128xf32>
    %298 = arith.mulf %295, %297 : vector<8x128xf32>
    %299 = arith.addf %294, %298 : vector<8x128xf32>
    %300 = math.tanh %299 : vector<8x128xf32>
    %301 = vector.extract_strided_slice %293 {offsets = [0, 128], sizes = [8, 128], strides = [1, 1]} : vector<8x256xf32> to vector<8x128xf32>
    %302 = arith.subf %252, %300 : vector<8x128xf32>
    %303 = arith.mulf %301, %302 : vector<8x128xf32>
    %304 = arith.addf %300, %303 : vector<8x128xf32>
    %305 = tpu.concatenate %304, %274 in 1 : vector<8x128xf32>, vector<8x128xf32> -> vector<8x256xf32>
    %c0_75 = arith.constant 0 : index
    %c0_76 = arith.constant 0 : index
    %306 = vector.load %arg3[%c0_75, %c0_76] : memref<256x512xf32, #tpu.memory_space<vmem>>, vector<256x512xf32>
    %cst_77 = arith.constant dense<0.000000e+00> : vector<8x512xf32>
    %307 = tpu.matmul %305, %306, %cst_77 {dimension_numbers = #tpu.dot_dimension_numbers<[1], [0], [0], [1], [0, 0, 1, 1], [], []>} : vector<8x256xf32>, vector<256x512xf32>, vector<8x512xf32> -> vector<8x512xf32>
    %308 = vector.extract_strided_slice %307 {offsets = [0, 0], sizes = [8, 256], strides = [1, 1]} : vector<8x512xf32> to vector<8x256xf32>
    %309 = arith.addf %308, %5 : vector<8x256xf32>
    %310 = arith.negf %309 : vector<8x256xf32>
    %311 = math.exp %310 : vector<8x256xf32>
    %cst_78 = arith.constant 1.000000e+00 : f32
    %312 = vector.broadcast %cst_78 : f32 to vector<8x256xf32>
    %313 = arith.addf %312, %311 : vector<8x256xf32>
    %314 = arith.divf %312, %313 : vector<8x256xf32>
    %315 = vector.extract_strided_slice %307 {offsets = [0, 256], sizes = [8, 128], strides = [1, 1]} : vector<8x512xf32> to vector<8x128xf32>
    %316 = arith.addf %315, %8 : vector<8x128xf32>
    %317 = vector.extract_strided_slice %314 {offsets = [0, 0], sizes = [8, 128], strides = [1, 1]} : vector<8x256xf32> to vector<8x128xf32>
    %318 = vector.extract_strided_slice %307 {offsets = [0, 384], sizes = [8, 128], strides = [1, 1]} : vector<8x512xf32> to vector<8x128xf32>
    %319 = arith.addf %318, %11 : vector<8x128xf32>
    %320 = arith.mulf %317, %319 : vector<8x128xf32>
    %321 = arith.addf %316, %320 : vector<8x128xf32>
    %322 = math.tanh %321 : vector<8x128xf32>
    %323 = vector.extract_strided_slice %314 {offsets = [0, 128], sizes = [8, 128], strides = [1, 1]} : vector<8x256xf32> to vector<8x128xf32>
    %324 = arith.subf %274, %322 : vector<8x128xf32>
    %325 = arith.mulf %323, %324 : vector<8x128xf32>
    %326 = arith.addf %322, %325 : vector<8x128xf32>
    %c12 = arith.constant 12 : index
    %327 = memref.load %arg0[%c12] : memref<16xi32, #tpu.memory_space<smem>>
    %328 = arith.index_cast %327 : i32 to index
    %c0_79 = arith.constant 0 : index
    %c0_80 = arith.constant 0 : index
    %329 = vector.load %arg1[%328, %c0_79, %c0_80] : memref<128x1x384xf32, #tpu.memory_space<vmem>>, vector<1x1x384xf32>
    %330 = vector.shape_cast %329 : vector<1x1x384xf32> to vector<1x384xf32>
    %c13 = arith.constant 13 : index
    %331 = memref.load %arg0[%c13] : memref<16xi32, #tpu.memory_space<smem>>
    %332 = arith.index_cast %331 : i32 to index
    %c0_81 = arith.constant 0 : index
    %c0_82 = arith.constant 0 : index
    %333 = vector.load %arg1[%332, %c0_81, %c0_82] : memref<128x1x384xf32, #tpu.memory_space<vmem>>, vector<1x1x384xf32>
    %334 = vector.shape_cast %333 : vector<1x1x384xf32> to vector<1x384xf32>
    %335 = tpu.concatenate %330, %334, %12 in 0 : vector<1x384xf32>, vector<1x384xf32>, vector<6x384xf32> -> vector<8x384xf32>
    %c0_83 = arith.constant 0 : index
    %c0_84 = arith.constant 0 : index
    %336 = vector.load %arg2[%c0_83, %c0_84] : memref<128x384xf32, #tpu.memory_space<vmem>>, vector<128x384xf32>
    %cst_85 = arith.constant dense<0.000000e+00> : vector<8x384xf32>
    %337 = tpu.matmul %304, %336, %cst_85 {dimension_numbers = #tpu.dot_dimension_numbers<[1], [0], [0], [1], [0, 0, 1, 1], [], []>} : vector<8x128xf32>, vector<128x384xf32>, vector<8x384xf32> -> vector<8x384xf32>
    %338 = vector.extract_strided_slice %335 {offsets = [0, 0], sizes = [8, 256], strides = [1, 1]} : vector<8x384xf32> to vector<8x256xf32>
    %339 = vector.extract_strided_slice %337 {offsets = [0, 0], sizes = [8, 256], strides = [1, 1]} : vector<8x384xf32> to vector<8x256xf32>
    %340 = arith.addf %338, %339 : vector<8x256xf32>
    %341 = arith.negf %340 : vector<8x256xf32>
    %342 = math.exp %341 : vector<8x256xf32>
    %cst_86 = arith.constant 1.000000e+00 : f32
    %343 = vector.broadcast %cst_86 : f32 to vector<8x256xf32>
    %344 = arith.addf %343, %342 : vector<8x256xf32>
    %345 = arith.divf %343, %344 : vector<8x256xf32>
    %346 = vector.extract_strided_slice %335 {offsets = [0, 256], sizes = [8, 128], strides = [1, 1]} : vector<8x384xf32> to vector<8x128xf32>
    %347 = vector.extract_strided_slice %345 {offsets = [0, 0], sizes = [8, 128], strides = [1, 1]} : vector<8x256xf32> to vector<8x128xf32>
    %348 = vector.extract_strided_slice %337 {offsets = [0, 256], sizes = [8, 128], strides = [1, 1]} : vector<8x384xf32> to vector<8x128xf32>
    %349 = arith.addf %348, %2 : vector<8x128xf32>
    %350 = arith.mulf %347, %349 : vector<8x128xf32>
    %351 = arith.addf %346, %350 : vector<8x128xf32>
    %352 = math.tanh %351 : vector<8x128xf32>
    %353 = vector.extract_strided_slice %345 {offsets = [0, 128], sizes = [8, 128], strides = [1, 1]} : vector<8x256xf32> to vector<8x128xf32>
    %354 = arith.subf %304, %352 : vector<8x128xf32>
    %355 = arith.mulf %353, %354 : vector<8x128xf32>
    %356 = arith.addf %352, %355 : vector<8x128xf32>
    %357 = tpu.concatenate %356, %326 in 1 : vector<8x128xf32>, vector<8x128xf32> -> vector<8x256xf32>
    %c0_87 = arith.constant 0 : index
    %c0_88 = arith.constant 0 : index
    %358 = vector.load %arg3[%c0_87, %c0_88] : memref<256x512xf32, #tpu.memory_space<vmem>>, vector<256x512xf32>
    %cst_89 = arith.constant dense<0.000000e+00> : vector<8x512xf32>
    %359 = tpu.matmul %357, %358, %cst_89 {dimension_numbers = #tpu.dot_dimension_numbers<[1], [0], [0], [1], [0, 0, 1, 1], [], []>} : vector<8x256xf32>, vector<256x512xf32>, vector<8x512xf32> -> vector<8x512xf32>
    %360 = vector.extract_strided_slice %359 {offsets = [0, 0], sizes = [8, 256], strides = [1, 1]} : vector<8x512xf32> to vector<8x256xf32>
    %361 = arith.addf %360, %5 : vector<8x256xf32>
    %362 = arith.negf %361 : vector<8x256xf32>
    %363 = math.exp %362 : vector<8x256xf32>
    %cst_90 = arith.constant 1.000000e+00 : f32
    %364 = vector.broadcast %cst_90 : f32 to vector<8x256xf32>
    %365 = arith.addf %364, %363 : vector<8x256xf32>
    %366 = arith.divf %364, %365 : vector<8x256xf32>
    %367 = vector.extract_strided_slice %359 {offsets = [0, 256], sizes = [8, 128], strides = [1, 1]} : vector<8x512xf32> to vector<8x128xf32>
    %368 = arith.addf %367, %8 : vector<8x128xf32>
    %369 = vector.extract_strided_slice %366 {offsets = [0, 0], sizes = [8, 128], strides = [1, 1]} : vector<8x256xf32> to vector<8x128xf32>
    %370 = vector.extract_strided_slice %359 {offsets = [0, 384], sizes = [8, 128], strides = [1, 1]} : vector<8x512xf32> to vector<8x128xf32>
    %371 = arith.addf %370, %11 : vector<8x128xf32>
    %372 = arith.mulf %369, %371 : vector<8x128xf32>
    %373 = arith.addf %368, %372 : vector<8x128xf32>
    %374 = math.tanh %373 : vector<8x128xf32>
    %375 = vector.extract_strided_slice %366 {offsets = [0, 128], sizes = [8, 128], strides = [1, 1]} : vector<8x256xf32> to vector<8x128xf32>
    %376 = arith.subf %326, %374 : vector<8x128xf32>
    %377 = arith.mulf %375, %376 : vector<8x128xf32>
    %378 = arith.addf %374, %377 : vector<8x128xf32>
    %c14 = arith.constant 14 : index
    %379 = memref.load %arg0[%c14] : memref<16xi32, #tpu.memory_space<smem>>
    %380 = arith.index_cast %379 : i32 to index
    %c0_91 = arith.constant 0 : index
    %c0_92 = arith.constant 0 : index
    %381 = vector.load %arg1[%380, %c0_91, %c0_92] : memref<128x1x384xf32, #tpu.memory_space<vmem>>, vector<1x1x384xf32>
    %382 = vector.shape_cast %381 : vector<1x1x384xf32> to vector<1x384xf32>
    %c15 = arith.constant 15 : index
    %383 = memref.load %arg0[%c15] : memref<16xi32, #tpu.memory_space<smem>>
    %384 = arith.index_cast %383 : i32 to index
    %c0_93 = arith.constant 0 : index
    %c0_94 = arith.constant 0 : index
    %385 = vector.load %arg1[%384, %c0_93, %c0_94] : memref<128x1x384xf32, #tpu.memory_space<vmem>>, vector<1x1x384xf32>
    %386 = vector.shape_cast %385 : vector<1x1x384xf32> to vector<1x384xf32>
    %387 = tpu.concatenate %382, %386, %12 in 0 : vector<1x384xf32>, vector<1x384xf32>, vector<6x384xf32> -> vector<8x384xf32>
    %c0_95 = arith.constant 0 : index
    %c0_96 = arith.constant 0 : index
    %388 = vector.load %arg2[%c0_95, %c0_96] : memref<128x384xf32, #tpu.memory_space<vmem>>, vector<128x384xf32>
    %cst_97 = arith.constant dense<0.000000e+00> : vector<8x384xf32>
    %389 = tpu.matmul %356, %388, %cst_97 {dimension_numbers = #tpu.dot_dimension_numbers<[1], [0], [0], [1], [0, 0, 1, 1], [], []>} : vector<8x128xf32>, vector<128x384xf32>, vector<8x384xf32> -> vector<8x384xf32>
    %390 = vector.extract_strided_slice %387 {offsets = [0, 0], sizes = [8, 256], strides = [1, 1]} : vector<8x384xf32> to vector<8x256xf32>
    %391 = vector.extract_strided_slice %389 {offsets = [0, 0], sizes = [8, 256], strides = [1, 1]} : vector<8x384xf32> to vector<8x256xf32>
    %392 = arith.addf %390, %391 : vector<8x256xf32>
    %393 = arith.negf %392 : vector<8x256xf32>
    %394 = math.exp %393 : vector<8x256xf32>
    %cst_98 = arith.constant 1.000000e+00 : f32
    %395 = vector.broadcast %cst_98 : f32 to vector<8x256xf32>
    %396 = arith.addf %395, %394 : vector<8x256xf32>
    %397 = arith.divf %395, %396 : vector<8x256xf32>
    %398 = vector.extract_strided_slice %387 {offsets = [0, 256], sizes = [8, 128], strides = [1, 1]} : vector<8x384xf32> to vector<8x128xf32>
    %399 = vector.extract_strided_slice %397 {offsets = [0, 0], sizes = [8, 128], strides = [1, 1]} : vector<8x256xf32> to vector<8x128xf32>
    %400 = vector.extract_strided_slice %389 {offsets = [0, 256], sizes = [8, 128], strides = [1, 1]} : vector<8x384xf32> to vector<8x128xf32>
    %401 = arith.addf %400, %2 : vector<8x128xf32>
    %402 = arith.mulf %399, %401 : vector<8x128xf32>
    %403 = arith.addf %398, %402 : vector<8x128xf32>
    %404 = math.tanh %403 : vector<8x128xf32>
    %405 = vector.extract_strided_slice %397 {offsets = [0, 128], sizes = [8, 128], strides = [1, 1]} : vector<8x256xf32> to vector<8x128xf32>
    %406 = arith.subf %356, %404 : vector<8x128xf32>
    %407 = arith.mulf %405, %406 : vector<8x128xf32>
    %408 = arith.addf %404, %407 : vector<8x128xf32>
    %409 = tpu.concatenate %408, %378 in 1 : vector<8x128xf32>, vector<8x128xf32> -> vector<8x256xf32>
    %c0_99 = arith.constant 0 : index
    %c0_100 = arith.constant 0 : index
    %410 = vector.load %arg3[%c0_99, %c0_100] : memref<256x512xf32, #tpu.memory_space<vmem>>, vector<256x512xf32>
    %cst_101 = arith.constant dense<0.000000e+00> : vector<8x512xf32>
    %411 = tpu.matmul %409, %410, %cst_101 {dimension_numbers = #tpu.dot_dimension_numbers<[1], [0], [0], [1], [0, 0, 1, 1], [], []>} : vector<8x256xf32>, vector<256x512xf32>, vector<8x512xf32> -> vector<8x512xf32>
    %412 = vector.extract_strided_slice %411 {offsets = [0, 0], sizes = [8, 256], strides = [1, 1]} : vector<8x512xf32> to vector<8x256xf32>
    %413 = arith.addf %412, %5 : vector<8x256xf32>
    %414 = arith.negf %413 : vector<8x256xf32>
    %415 = math.exp %414 : vector<8x256xf32>
    %cst_102 = arith.constant 1.000000e+00 : f32
    %416 = vector.broadcast %cst_102 : f32 to vector<8x256xf32>
    %417 = arith.addf %416, %415 : vector<8x256xf32>
    %418 = arith.divf %416, %417 : vector<8x256xf32>
    %419 = vector.extract_strided_slice %411 {offsets = [0, 256], sizes = [8, 128], strides = [1, 1]} : vector<8x512xf32> to vector<8x128xf32>
    %420 = arith.addf %419, %8 : vector<8x128xf32>
    %421 = vector.extract_strided_slice %418 {offsets = [0, 0], sizes = [8, 128], strides = [1, 1]} : vector<8x256xf32> to vector<8x128xf32>
    %422 = vector.extract_strided_slice %411 {offsets = [0, 384], sizes = [8, 128], strides = [1, 1]} : vector<8x512xf32> to vector<8x128xf32>
    %423 = arith.addf %422, %11 : vector<8x128xf32>
    %424 = arith.mulf %421, %423 : vector<8x128xf32>
    %425 = arith.addf %420, %424 : vector<8x128xf32>
    %426 = math.tanh %425 : vector<8x128xf32>
    %427 = vector.extract_strided_slice %418 {offsets = [0, 128], sizes = [8, 128], strides = [1, 1]} : vector<8x256xf32> to vector<8x128xf32>
    %428 = arith.subf %378, %426 : vector<8x128xf32>
    %429 = arith.mulf %427, %428 : vector<8x128xf32>
    %430 = arith.addf %426, %429 : vector<8x128xf32>
    %cst_103 = arith.constant 0.000000e+00 : f32
    %431 = vector.broadcast %cst_103 : f32 to vector<8x128xf32>
    %432 = arith.maximumf %430, %431 : vector<8x128xf32>
    %c0_104 = arith.constant 0 : index
    %c0_105 = arith.constant 0 : index
    %433 = vector.load %arg5[%c0_104, %c0_105] : memref<128x512xf32, #tpu.memory_space<vmem>>, vector<128x512xf32>
    %cst_106 = arith.constant dense<0.000000e+00> : vector<8x512xf32>
    %434 = tpu.matmul %432, %433, %cst_106 {dimension_numbers = #tpu.dot_dimension_numbers<[1], [0], [0], [1], [0, 0, 1, 1], [], []>} : vector<8x128xf32>, vector<128x512xf32>, vector<8x512xf32> -> vector<8x512xf32>
    %c0_107 = arith.constant 0 : index
    %c640 = arith.constant 640 : index
    %435 = vector.load %arg4[%c0_107, %c640] : memref<1x1280xf32, #tpu.memory_space<vmem>>, vector<1x512xf32>
    %436 = vector.broadcast %435 : vector<1x512xf32> to vector<8x512xf32>
    %437 = arith.addf %434, %436 : vector<8x512xf32>
    %cst_108 = arith.constant 0.000000e+00 : f32
    %438 = vector.broadcast %cst_108 : f32 to vector<8x512xf32>
    %439 = arith.maximumf %437, %438 : vector<8x512xf32>
    %c0_109 = arith.constant 0 : index
    %c0_110 = arith.constant 0 : index
    %440 = vector.load %arg6[%c0_109, %c0_110] : memref<512x128xf32, #tpu.memory_space<vmem>>, vector<512x128xf32>
    %cst_111 = arith.constant dense<0.000000e+00> : vector<8x128xf32>
    %441 = tpu.matmul %439, %440, %cst_111 {dimension_numbers = #tpu.dot_dimension_numbers<[1], [0], [0], [1], [0, 0, 1, 1], [], []>} : vector<8x512xf32>, vector<512x128xf32>, vector<8x128xf32> -> vector<8x128xf32>
    %c0_112 = arith.constant 0 : index
    %c1152 = arith.constant 1152 : index
    %442 = vector.load %arg4[%c0_112, %c1152] : memref<1x1280xf32, #tpu.memory_space<vmem>>, vector<1x128xf32>
    %443 = vector.broadcast %442 : vector<1x128xf32> to vector<8x128xf32>
    %444 = arith.addf %441, %443 : vector<8x128xf32>
    %cst_113 = arith.constant dense<0xFF800000> : vector<8xf32>
    %445 = vector.multi_reduction <maximumf>, %444, %cst_113 [1] : vector<8x128xf32> to vector<8xf32>
    %446 = vector.shape_cast %445 : vector<8xf32> to vector<8x1xf32>
    %447 = vector.broadcast %446 : vector<8x1xf32> to vector<8x128xf32>
    %448 = arith.subf %444, %447 : vector<8x128xf32>
    %449 = math.exp %448 : vector<8x128xf32>
    %cst_114 = arith.constant dense<0.000000e+00> : vector<8xf32>
    %450 = vector.multi_reduction <add>, %449, %cst_114 [1] : vector<8x128xf32> to vector<8xf32>
    %451 = vector.shape_cast %450 : vector<8xf32> to vector<8x1xf32>
    %452 = tpu.reciprocal %451 {approx = true} : vector<8x1xf32> -> vector<8x1xf32>
    %453 = arith.mulf %451, %452 : vector<8x1xf32>
    %cst_115 = arith.constant 2.000000e+00 : f32
    %454 = vector.broadcast %cst_115 : f32 to vector<8x1xf32>
    %455 = arith.subf %454, %453 : vector<8x1xf32>
    %456 = arith.mulf %452, %455 : vector<8x1xf32>
    %457 = vector.broadcast %456 : vector<8x1xf32> to vector<8x128xf32>
    %458 = arith.mulf %449, %457 : vector<8x128xf32>
    %c0_116 = arith.constant 0 : index
    %c0_117 = arith.constant 0 : index
    %459 = vector.load %arg7[%c0_116, %c0_117] : memref<8x128xf32, #tpu.memory_space<vmem>>, vector<8x128xf32>
    tpu.vector_store %arg7[%c0_116, %c0_117], %458 {strides = array<i32>} : memref<8x128xf32, #tpu.memory_space<vmem>>, vector<8x128xf32>,
    return
  }
}

</mosaic_0001>

<llo_original>
// kernel: lm_forward.1
$region0: #{lm_forward.1}
  #allocation0 [shape = 'u32[]', space=smem, size = 0x4, offset = 0x4, fixed_abs, tag = 'smem constant byte address 0x4 - core index']
  #allocation1 [shape = 'u32[144,128]{1,0:T(1,128)}', space=vmem, size = 0x12000, scoped, tag = 'internal scratch']
  %s0 = inlined_call_operand.vmem [shape: s32[16], index: 0, kind: input, shape index: {}]
  %s1 = inlined_call_operand.hbm [shape: f32[128,1,384], index: 1, kind: input, shape index: {}]
  %s2 = inlined_call_operand.hbm [shape: f32[128,384], index: 2, kind: input, shape index: {}]
  %s3 = inlined_call_operand.hbm [shape: f32[256,512], index: 3, kind: input, shape index: {}]
  %s4 = inlined_call_operand.vmem [shape: f32[1,1280], index: 4, kind: input, shape index: {}]
  %s5 = inlined_call_operand.hbm [shape: f32[128,512], index: 5, kind: input, shape index: {}]
  %s6 = inlined_call_operand.hbm [shape: f32[512,128], index: 6, kind: input, shape index: {}]
  %s7 = inlined_call_operand.vmem [shape: f32[8,128], index: 7, kind: output, shape index: {}]
  %s8 = sld [smem:[#allocation0]]
  $region62: #{lm_forward.1} parent=0
    _
  %s10 = ssub.s32 1, %s8
  %s11 = scalar_select 0, %s10, %s8
  $region1: #{lm_forward.1} parent=0
    #allocation2 [shape = 'u8[512]{0}', space=smem, size = 0x200, scoped, tag = 'input window, operand 0, single buffered']
    #allocation3 [shape = 's32[1]{0}', space=sflag, size = 0x4, scoped, tag = 'scoped memory for lm_forward.1']
    #allocation4 [shape = 's32[1]{0}', space=sflag, size = 0x4, scoped, tag = 'scoped memory for lm_forward.1']
    #allocation5 [shape = 'u8[196608]{0}', space=vmem, size = 0x30000, scoped, tag = 'input window, operand 1, single buffered']
    #allocation6 [shape = 'u8[196608]{0}', space=vmem, size = 0x30000, scoped, tag = 'input window, operand 2, single buffered']
    #allocation7 [shape = 's32[1]{0}', space=sflag, size = 0x4, scoped, tag = 'scoped memory for lm_forward.1']
    #allocation8 [shape = 'u8[524288]{0}', space=vmem, size = 0x80000, scoped, tag = 'input window, operand 3, single buffered']
    #allocation9 [shape = 'u8[262144]{0}', space=vmem, size = 0x40000, scoped, tag = 'input window, operand 5, single buffered']
    #allocation10 [shape = 's32[1]{0}', space=sflag, size = 0x4, scoped, tag = 'scoped memory for lm_forward.1']
    #allocation11 [shape = 'u8[262144]{0}', space=vmem, size = 0x40000, scoped, tag = 'input window, operand 6, single buffered']
    %12 = vsyncpa [#allocation4], 0
    %13 = vsyncpa [#allocation3], 0
    %14 = vsyncpa [#allocation7], 0
    %15 = vsyncpa [#allocation10], 0
    // Predicated region
    $region2: #{lm_forward.1} parent=1 // pred_check
      _
    $region3: #{lm_forward.1} parent=1 // pred_check_branch
      %17 = sbr.rel (0) target = $region5
    $region4: #{lm_forward.1} parent=1 // pred_region
      %s19 = ssub.s32 16, 16
      %20 = vsyncadd [#allocation4], %s19
      %s22 = sshll.u32 %s0, 4
      %s23 = int_to_ptr.vmem [resolvable:$true] %s22
      %25 = dma.vmem_to_smem %s23, 16, [#allocation2], [#allocation4]
    $region5: #{lm_forward.1} parent=1 // pred_fallthru
      _
    // Predicated region
    $region6: #{lm_forward.1} parent=1 // pred_check
      _
    $region7: #{lm_forward.1} parent=1 // pred_check_branch
      %27 = sbr.rel (0) target = $region9
    $region8: #{lm_forward.1} parent=1 // pred_region
      %s29 = ssub.s32 6144, 6144
      %30 = vsyncadd [#allocation3], %s29
      %s31 = sshll.u32 [#allocation5], 4
      %s32 = int_to_ptr.vmem [resolvable:$true] %s31
      %37 = dma.hbm_to_vmem [thread:$0]  %s1, 6144, %s32, [#allocation3], 48, 48, 3
    $region9: #{lm_forward.1} parent=1 // pred_fallthru
      _
    // Predicated region
    $region10: #{lm_forward.1} parent=1 // pred_check
      _
    $region11: #{lm_forward.1} parent=1 // pred_check_branch
      %39 = sbr.rel (0) target = $region13
    $region12: #{lm_forward.1} parent=1 // pred_region
      %s41 = ssub.s32 6144, 6144
      %42 = vsyncadd [#allocation7], %s41
      %s43 = sshll.u32 [#allocation6], 4
      %s44 = int_to_ptr.vmem [resolvable:$true] %s43
      %49 = dma.hbm_to_vmem [thread:$0]  %s2, 6144, %s44, [#allocation7], 384, 384, 24
    $region13: #{lm_forward.1} parent=1 // pred_fallthru
      _
    // Predicated region
    $region14: #{lm_forward.1} parent=1 // pred_check
      _
    $region15: #{lm_forward.1} parent=1 // pred_check_branch
      %51 = sbr.rel (0) target = $region17
    $region16: #{lm_forward.1} parent=1 // pred_region
      %s53 = ssub.s32 16384, 16384
      %54 = vsyncadd [#allocation7], %s53
      %s55 = sshll.u32 [#allocation8], 4
      %s56 = int_to_ptr.vmem [resolvable:$true] %s55
      %61 = dma.hbm_to_vmem [thread:$0]  %s3, 16384, %s56, [#allocation7], 512, 512, 32
    $region17: #{lm_forward.1} parent=1 // pred_fallthru
      _
    // Predicated region
    $region18: #{lm_forward.1} parent=1 // pred_check
      _
    $region19: #{lm_forward.1} parent=1 // pred_check_branch
      %63 = sbr.rel (0) target = $region21
    $region20: #{lm_forward.1} parent=1 // pred_region
      _
    $region21: #{lm_forward.1} parent=1 // pred_fallthru
      _
    // Predicated region
    $region22: #{lm_forward.1} parent=1 // pred_check
      _
    $region23: #{lm_forward.1} parent=1 // pred_check_branch
      %65 = sbr.rel (0) target = $region25
    $region24: #{lm_forward.1} parent=1 // pred_region
      %s67 = ssub.s32 8192, 8192
      %68 = vsyncadd [#allocation10], %s67
      %s69 = sshll.u32 [#allocation9], 4
      %s70 = int_to_ptr.vmem [resolvable:$true] %s69
      %75 = dma.hbm_to_vmem [thread:$0]  %s5, 8192, %s70, [#allocation10], 512, 512, 32
    $region25: #{lm_forward.1} parent=1 // pred_fallthru
      _
    // Predicated region
    $region26: #{lm_forward.1} parent=1 // pred_check
      _
    $region27: #{lm_forward.1} parent=1 // pred_check_branch
      %77 = sbr.rel (0) target = $region29
    $region28: #{lm_forward.1} parent=1 // pred_region
      %s79 = ssub.s32 8192, 8192
      %80 = vsyncadd [#allocation10], %s79
      %s81 = sshll.u32 [#allocation11], 4
      %s82 = int_to_ptr.vmem [resolvable:$true] %s81
      %87 = dma.hbm_to_vmem [thread:$0]  %s6, 8192, %s82, [#allocation10], 128, 128, 8
    $region29: #{lm_forward.1} parent=1 // pred_fallthru
      _
    // Predicated region
    $region30: #{lm_forward.1} parent=1 // pred_check
      _
    $region31: #{lm_forward.1} parent=1 // pred_check_branch
      %89 = sbr.rel (0) target = $region33
    $region32: #{lm_forward.1} parent=1 // pred_region
      %90 = dma.done [#allocation4], 16
    $region33: #{lm_forward.1} parent=1 // pred_fallthru
      _
    // Predicated region
    $region34: #{lm_forward.1} parent=1 // pred_check
      _
    $region35: #{lm_forward.1} parent=1 // pred_check_branch
      %92 = sbr.rel (0) target = $region37
    $region36: #{lm_forward.1} parent=1 // pred_region
      %93 = dma.done [#allocation3], 6144
    $region37: #{lm_forward.1} parent=1 // pred_fallthru
      _
    // Predicated region
    $region38: #{lm_forward.1} parent=1 // pred_check
      _
    $region39: #{lm_forward.1} parent=1 // pred_check_branch
      %95 = sbr.rel (0) target = $region41
    $region40: #{lm_forward.1} parent=1 // pred_region
      %96 = dma.done [#allocation7], 6144
    $region41: #{lm_forward.1} parent=1 // pred_fallthru
      _
    // Predicated region
    $region42: #{lm_forward.1} parent=1 // pred_check
      _
    $region43: #{lm_forward.1} parent=1 // pred_check_branch
      %98 = sbr.rel (0) target = $region45
    $region44: #{lm_forward.1} parent=1 // pred_region
      %99 = dma.done [#allocation7], 16384
    $region45: #{lm_forward.1} parent=1 // pred_fallthru
      _
    // Predicated region
    $region46: #{lm_forward.1} parent=1 // pred_check
      _
    $region47: #{lm_forward.1} parent=1 // pred_check_branch
      %101 = sbr.rel (0) target = $region49
    $region48: #{lm_forward.1} parent=1 // pred_region
      %102 = dma.done [#allocation10], 8192
    $region49: #{lm_forward.1} parent=1 // pred_fallthru
      _
    // Predicated region
    $region50: #{lm_forward.1} parent=1 // pred_check
      _
    $region51: #{lm_forward.1} parent=1 // pred_check_branch
      %104 = sbr.rel (0) target = $region53
    $region52: #{lm_forward.1} parent=1 // pred_region
      %105 = dma.done [#allocation10], 8192
    $region53: #{lm_forward.1} parent=1 // pred_fallthru
      _
    %106 = sfence
    %v107 = vld [vmem:[%s4] sm:$0x1]
    %v109 = vlaneseq
    %v110 = vshrl.u32 %v109, 7
    %v111 = vsub.s32 0, %v110
    %v112 = vrot.slane %v107, %v111
    %v114 = vld [vmem:[%s4 + $0x1] sm:$0x3]
    %v116 = vlaneseq
    %v117 = vshrl.u32 %v116, 7
    %v118 = vsub.s32 0, %v117
    %v119 = vrot.slane %v114, %v118
    %v120 = vlaneseq
    %v121 = vshrl.u32 %v120, 7
    %v122 = vsub.s32 1, %v121
    %v123 = vrot.slane %v114, %v122
    %v126 = vld [vmem:[%s4 + $0x3] sm:$0x1]
    %v128 = vlaneseq
    %v129 = vshrl.u32 %v128, 7
    %v130 = vsub.s32 0, %v129
    %v131 = vrot.slane %v126, %v130
    %v133 = vld [vmem:[%s4 + $0x4] sm:$0x1]
    %v135 = vlaneseq
    %v136 = vshrl.u32 %v135, 7
    %v137 = vsub.s32 0, %v136
    %v138 = vrot.slane %v133, %v137
    %s140 = sld [smem:[#allocation2]]
    %s141 = smul.u32 %s140, 3
    %s142 = scalar_lea.vmem [#allocation5], %s141
    %v143 = vld [vmem:[%s142] sm:$0x7]
    %s144 = sld [smem:[#allocation2 + $0x1]]
    %s145 = smul.u32 %s144, 3
    %s146 = scalar_lea.vmem [#allocation5], %s145
    %v147 = vld [vmem:[%s146] sm:$0x7]
    %v149 = vlaneseq
    %v150 = vshrl.u32 %v149, 7
    %v151 = vsub.s32 0, %v150
    %v152 = vrot.slane %v143, %v151
    %v153 = vlaneseq
    %v154 = vshrl.u32 %v153, 7
    %v155 = vsub.s32 1, %v154
    %v156 = vrot.slane %v143, %v155
    %v157 = vlaneseq
    %v158 = vshrl.u32 %v157, 7
    %v159 = vsub.s32 2, %v158
    %v160 = vrot.slane %v143, %v159
    %v165 = vlaneseq
    %v166 = vshrl.u32 %v165, 7
    %v167 = vsub.s32 0, %v166
    %v168 = vrot.slane %v147, %v167
    %v169 = vlaneseq
    %v170 = vshrl.u32 %v169, 7
    %v171 = vsub.s32 1, %v170
    %v172 = vrot.slane %v147, %v171
    %v173 = vlaneseq
    %v174 = vshrl.u32 %v173, 7
    %v175 = vsub.s32 2, %v174
    %v176 = vrot.slane %v147, %v175
    %vm180 = vcmask 1040384
    %v181 = vsel %vm180, %v152, %v168
    %v182 = vsel %vm180, %v156, %v172
    %v183 = vsel %vm180, %v160, %v176
    %vm184 = vcmask 1041408
    %v185 = vsel %vm184, %v181, 0.0
    %v186 = vsel %vm184, %v182, 0.0
    %v187 = vsel %vm184, %v183, 0.0
    %v188 = vld [vmem:[#allocation6] sm:$0xff]
    %v189 = vld [vmem:[#allocation6 + $0x8] sm:$0xff]
    %v190 = vld [vmem:[#allocation6 + $0x10] sm:$0xff]
    %v191 = vld [vmem:[#allocation6 + $0x18] sm:$0xff]
    %v192 = vld [vmem:[#allocation6 + $0x20] sm:$0xff]
    %v193 = vld [vmem:[#allocation6 + $0x28] sm:$0xff]
    %v194 = vld [vmem:[#allocation6 + $0x30] sm:$0xff]
    %v195 = vld [vmem:[#allocation6 + $0x38] sm:$0xff]
    %v196 = vld [vmem:[#allocation6 + $0x40] sm:$0xff]
    %v197 = vld [vmem:[#allocation6 + $0x48] sm:$0xff]
    %v198 = vld [vmem:[#allocation6 + $0x50] sm:$0xff]
    %v199 = vld [vmem:[#allocation6 + $0x58] sm:$0xff]
    %v200 = vld [vmem:[#allocation6 + $0x60] sm:$0xff]
    %v201 = vld [vmem:[#allocation6 + $0x68] sm:$0xff]
    %v202 = vld [vmem:[#allocation6 + $0x70] sm:$0xff]
    %v203 = vld [vmem:[#allocation6 + $0x78] sm:$0xff]
    %v204 = vld [vmem:[#allocation6 + $0x80] sm:$0xff]
    %v205 = vld [vmem:[#allocation6 + $0x88] sm:$0xff]
    %v206 = vld [vmem:[#allocation6 + $0x90] sm:$0xff]
    %v207 = vld [vmem:[#allocation6 + $0x98] sm:$0xff]
    %v208 = vld [vmem:[#allocation6 + $0xa0] sm:$0xff]
    %v209 = vld [vmem:[#allocation6 + $0xa8] sm:$0xff]
    %v210 = vld [vmem:[#allocation6 + $0xb0] sm:$0xff]
    %v211 = vld [vmem:[#allocation6 + $0xb8] sm:$0xff]
    %v212 = vld [vmem:[#allocation6 + $0xc0] sm:$0xff]
    %v213 = vld [vmem:[#allocation6 + $0xc8] sm:$0xff]
    %v214 = vld [vmem:[#allocation6 + $0xd0] sm:$0xff]
    %v215 = vld [vmem:[#allocation6 + $0xd8] sm:$0xff]
    %v216 = vld [vmem:[#allocation6 + $0xe0] sm:$0xff]
    %v217 = vld [vmem:[#allocation6 + $0xe8] sm:$0xff]
    %v218 = vld [vmem:[#allocation6 + $0xf0] sm:$0xff]
    %v219 = vld [vmem:[#allocation6 + $0xf8] sm:$0xff]
    %v220 = vld [vmem:[#allocation6 + $0x100] sm:$0xff]
    %v221 = vld [vmem:[#allocation6 + $0x108] sm:$0xff]
    %v222 = vld [vmem:[#allocation6 + $0x110] sm:$0xff]
    %v223 = vld [vmem:[#allocation6 + $0x118] sm:$0xff]
    %v224 = vld [vmem:[#allocation6 + $0x120] sm:$0xff]
    %v225 = vld [vmem:[#allocation6 + $0x128] sm:$0xff]
    %v226 = vld [vmem:[#allocation6 + $0x130] sm:$0xff]
    %v227 = vld [vmem:[#allocation6 + $0x138] sm:$0xff]
    %v228 = vld [vmem:[#allocation6 + $0x140] sm:$0xff]
    %v229 = vld [vmem:[#allocation6 + $0x148] sm:$0xff]
    %v230 = vld [vmem:[#allocation6 + $0x150] sm:$0xff]
    %v231 = vld [vmem:[#allocation6 + $0x158] sm:$0xff]
    %v232 = vld [vmem:[#allocation6 + $0x160] sm:$0xff]
    %v233 = vld [vmem:[#allocation6 + $0x168] sm:$0xff]
    %v234 = vld [vmem:[#allocation6 + $0x170] sm:$0xff]
    %v235 = vld [vmem:[#allocation6 + $0x178] sm:$0xff]
    %236 = vmatprep.subr.mxu0 %v189
    %237 = vmatpush1.msra.mxu0 %v188
    %238 = vmatprep.subr.mxu0 %v192
    %239 = vmatpush1.msra.mxu0 %v191
    %240 = vmatprep.subr.mxu0 %v195
    %241 = vmatpush1.msra.mxu0 %v194
    %242 = vmatprep.subr.mxu0 %v198
    %243 = vmatpush1.msra.mxu0 %v197
    %244 = vmatprep.subr.mxu0 %v201
    %245 = vmatpush1.msra.mxu0 %v200
    %246 = vmatprep.subr.mxu0 %v204
    %247 = vmatpush1.msra.mxu0 %v203
    %248 = vmatprep.subr.mxu0 %v207
    %249 = vmatpush1.msra.mxu0 %v206
    %250 = vmatprep.subr.mxu0 %v210
    %251 = vmatpush1.msra.mxu0 %v209
    %252 = vmatprep.subr.mxu0 %v213
    %253 = vmatpush1.msra.mxu0 %v212
    %254 = vmatprep.subr.mxu0 %v216
    %255 = vmatpush1.msra.mxu0 %v215
    %256 = vmatprep.subr.mxu0 %v219
    %257 = vmatpush1.msra.mxu0 %v218
    %258 = vmatprep.subr.mxu0 %v222
    %259 = vmatpush1.msra.mxu0 %v221
    %260 = vmatprep.subr.mxu0 %v225
    %261 = vmatpush1.msra.mxu0 %v224
    %262 = vmatprep.subr.mxu0 %v228
    %263 = vmatpush1.msra.mxu0 %v227
    %264 = vmatprep.subr.mxu0 %v231
    %265 = vmatpush1.msra.mxu0 %v230
    %266 = vmatprep.subr.mxu0 %v234
    %267 = vmatpush1.msra.mxu0 %v233
    %268 = vmatprep.subr.mxu0 0.0
    %269 = vmatpush1.msra.mxu0 0.0
    %270 = vmatprep.subr.mxu0 0.0
    %271 = vmatpush1.msra.mxu0 0.0
    %272 = vmatprep.subr.mxu0 0.0
    %273 = vmatpush1.msra.mxu0 0.0
    %274 = vmatprep.subr.mxu0 0.0
    %275 = vmatpush1.msra.mxu0 0.0
    %276 = vmatprep.subr.mxu0 0.0
    %277 = vmatpush1.msra.mxu0 0.0
    %278 = vmatprep.subr.mxu0 0.0
    %279 = vmatpush1.msra.mxu0 0.0
    %280 = vmatprep.subr.mxu0 0.0
    %281 = vmatpush1.msra.mxu0 0.0
    %282 = vmatprep.subr.mxu0 0.0
    %283 = vmatpush1.msra.mxu0 0.0
    %284 = vmatprep.subr.mxu0 0.0
    %285 = vmatpush1.msra.mxu0 0.0
    %286 = vmatprep.subr.mxu0 0.0
    %287 = vmatpush1.msra.mxu0 0.0
    %288 = vmatprep.subr.mxu0 0.0
    %289 = vmatpush1.msra.mxu0 0.0
    %290 = vmatprep.subr.mxu0 0.0
    %291 = vmatpush1.msra.mxu0 0.0
    %292 = vmatprep.subr.mxu0 0.0
    %293 = vmatpush1.msra.mxu0 0.0
    %294 = vmatprep.subr.mxu0 0.0
    %295 = vmatpush1.msra.mxu0 0.0
    %296 = vmatprep.subr.mxu0 0.0
    %297 = vmatpush1.msra.mxu0 0.0
    %298 = vmatprep.subr.mxu0 0.0
    %299 = vmatpush1.msra.mxu0 0.0
    %300 = vmatprep.mubr.f32.mxu0 0.0
    %301 = vmatmul.mubr.f32.gmra.mrb[0].mxu0 0.0
    %v302 = vpop.f32.mrb[0].mxu0
    %v303 = vadd.f32 0.0, %v302
    %v304 = vpop.f32.mrb[0].mxu0
    %v305 = vadd.f32 0.0, %v304
    %306 = vdwg.mxu0
    %307 = vmatprep.subr.mxu0 0.0
    %308 = vmatpush1.msra.mxu0 %v190
    %309 = vmatprep.subr.mxu0 0.0
    %310 = vmatpush1.msra.mxu0 %v193
    %311 = vmatprep.subr.mxu0 0.0
    %312 = vmatpush1.msra.mxu0 %v196
    %313 = vmatprep.subr.mxu0 0.0
    %314 = vmatpush1.msra.mxu0 %v199
    %315 = vmatprep.subr.mxu0 0.0
    %316 = vmatpush1.msra.mxu0 %v202
    %317 = vmatprep.subr.mxu0 0.0
    %318 = vmatpush1.msra.mxu0 %v205
    %319 = vmatprep.subr.mxu0 0.0
    %320 = vmatpush1.msra.mxu0 %v208
    %321 = vmatprep.subr.mxu0 0.0
    %322 = vmatpush1.msra.mxu0 %v211
    %323 = vmatprep.subr.mxu0 0.0
    %324 = vmatpush1.msra.mxu0 %v214
    %325 = vmatprep.subr.mxu0 0.0
    %326 = vmatpush1.msra.mxu0 %v217
    %327 = vmatprep.subr.mxu0 0.0
    %328 = vmatpush1.msra.mxu0 %v220
    %329 = vmatprep.subr.mxu0 0.0
    %330 = vmatpush1.msra.mxu0 %v223
    %331 = vmatprep.subr.mxu0 0.0
    %332 = vmatpush1.msra.mxu0 %v226
    %333 = vmatprep.subr.mxu0 0.0
    %334 = vmatpush1.msra.mxu0 %v229
    %335 = vmatprep.subr.mxu0 0.0
    %336 = vmatpush1.msra.mxu0 %v232
    %337 = vmatprep.subr.mxu0 0.0
    %338 = vmatpush1.msra.mxu0 %v235
    %339 = vmatprep.subr.mxu0 0.0
    %340 = vmatpush1.msra.mxu0 0.0
    %341 = vmatprep.subr.mxu0 0.0
    %342 = vmatpush1.msra.mxu0 0.0
    %343 = vmatprep.subr.mxu0 0.0
    %344 = vmatpush1.msra.mxu0 0.0
    %345 = vmatprep.subr.mxu0 0.0
    %346 = vmatpush1.msra.mxu0 0.0
    %347 = vmatprep.subr.mxu0 0.0
    %348 = vmatpush1.msra.mxu0 0.0
    %349 = vmatprep.subr.mxu0 0.0
    %350 = vmatpush1.msra.mxu0 0.0
    %351 = vmatprep.subr.mxu0 0.0
    %352 = vmatpush1.msra.mxu0 0.0
    %353 = vmatprep.subr.mxu0 0.0
    %354 = vmatpush1.msra.mxu0 0.0
    %355 = vmatprep.subr.mxu0 0.0
    %356 = vmatpush1.msra.mxu0 0.0
    %357 = vmatprep.subr.mxu0 0.0
    %358 = vmatpush1.msra.mxu0 0.0
    %359 = vmatprep.subr.mxu0 0.0
    %360 = vmatpush1.msra.mxu0 0.0
    %361 = vmatprep.subr.mxu0 0.0
    %362 = vmatpush1.msra.mxu0 0.0
    %363 = vmatprep.subr.mxu0 0.0
    %364 = vmatpush1.msra.mxu0 0.0
    %365 = vmatprep.subr.mxu0 0.0
    %366 = vmatpush1.msra.mxu0 0.0
    %367 = vmatprep.subr.mxu0 0.0
    %368 = vmatpush1.msra.mxu0 0.0
    %369 = vmatprep.subr.mxu0 0.0
    %370 = vmatpush1.msra.mxu0 0.0
    %371 = vmatprep.mubr.f32.mxu0 0.0
    %372 = vmatmul.mubr.f32.gmra.mrb[0].mxu0 0.0
    %v373 = vpop.f32.mrb[0].mxu0
    %v374 = vadd.f32 0.0, %v373
    %v375 = vpop.f32.mrb[0].mxu0
    %376 = vdwg.mxu0
    %v377 = vadd.f32 %v185, %v303
    %v378 = vadd.f32 %v186, %v305
    %v379 = vxor.u32 %v377, 2147483648
    %v380 = vxor.u32 %v378, 2147483648
    %v381 = vmul.f32 %v379, 1.442695
    %v382 = vpow.pop %v381
    %v383 = vmul.f32 %v380, 1.442695
    %v384 = vpow.pop %v383
    %v385 = vadd.f32 %v382, 1.0
    %v386 = vadd.f32 %v384, 1.0
    %v387 = vrcp.pop %v385
    %v388 = vmul.f32 1.0, %v387
    %v389 = vrcp.pop %v386
    %v390 = vmul.f32 1.0, %v389
    %v391 = vadd.f32 %v374, %v112
    %v392 = vmul.f32 %v388, %v391
    %v393 = vadd.f32 %v187, %v392
    %v394 = vtanh.pop %v393
    %v395 = vsub.f32 0.0, %v394
    %v396 = vmul.f32 %v390, %v395
    %v397 = vadd.f32 %v394, %v396
    %v398 = vld [vmem:[#allocation8] sm:$0xff]
    %v399 = vld [vmem:[#allocation8 + $0x8] sm:$0xff]
    %v400 = vld [vmem:[#allocation8 + $0x10] sm:$0xff]
    %v401 = vld [vmem:[#allocation8 + $0x18] sm:$0xff]
    %v402 = vld [vmem:[#allocation8 + $0x20] sm:$0xff]
    %v403 = vld [vmem:[#allocation8 + $0x28] sm:$0xff]
    %v404 = vld [vmem:[#allocation8 + $0x30] sm:$0xff]
    %v405 = vld [vmem:[#allocation8 + $0x38] sm:$0xff]
    %v406 = vld [vmem:[#allocation8 + $0x40] sm:$0xff]
    %v407 = vld [vmem:[#allocation8 + $0x48] sm:$0xff]
    %v408 = vld [vmem:[#allocation8 + $0x50] sm:$0xff]
    %v409 = vld [vmem:[#allocation8 + $0x58] sm:$0xff]
    %v410 = vld [vmem:[#allocation8 + $0x60] sm:$0xff]
    %v411 = vld [vmem:[#allocation8 + $0x68] sm:$0xff]
    %v412 = vld [vmem:[#allocation8 + $0x70] sm:$0xff]
    %v413 = vld [vmem:[#allocation8 + $0x78] sm:$0xff]
    %v414 = vld [vmem:[#allocation8 + $0x80] sm:$0xff]
    %v415 = vld [vmem:[#allocation8 + $0x88] sm:$0xff]
    %v416 = vld [vmem:[#allocation8 + $0x90] sm:$0xff]
    %v417 = vld [vmem:[#allocation8 + $0x98] sm:$0xff]
    %v418 = vld [vmem:[#allocation8 + $0xa0] sm:$0xff]
    %v419 = vld [vmem:[#allocation8 + $0xa8] sm:$0xff]
    %v420 = vld [vmem:[#allocation8 + $0xb0] sm:$0xff]
    %v421 = vld [vmem:[#allocation8 + $0xb8] sm:$0xff]
    %v422 = vld [vmem:[#allocation8 + $0xc0] sm:$0xff]
    %v423 = vld [vmem:[#allocation8 + $0xc8] sm:$0xff]
    %v424 = vld [vmem:[#allocation8 + $0xd0] sm:$0xff]
    %v425 = vld [vmem:[#allocation8 + $0xd8] sm:$0xff]
    %v426 = vld [vmem:[#allocation8 + $0xe0] sm:$0xff]
    %v427 = vld [vmem:[#allocation8 + $0xe8] sm:$0xff]
    %v428 = vld [vmem:[#allocation8 + $0xf0] sm:$0xff]
    %v429 = vld [vmem:[#allocation8 + $0xf8] sm:$0xff]
    %v430 = vld [vmem:[#allocation8 + $0x100] sm:$0xff]
    %v431 = vld [vmem:[#allocation8 + $0x108] sm:$0xff]
    %v432 = vld [vmem:[#allocation8 + $0x110] sm:$0xff]
    %v433 = vld [vmem:[#allocation8 + $0x118] sm:$0xff]
    %v434 = vld [vmem:[#allocation8 + $0x120] sm:$0xff]
    %v435 = vld [vmem:[#allocation8 + $0x128] sm:$0xff]
    %v436 = vld [vmem:[#allocation8 + $0x130] sm:$0xff]
    %v437 = vld [vmem:[#allocation8 + $0x138] sm:$0xff]
    %v438 = vld [vmem:[#allocation8 + $0x140] sm:$0xff]
    %v439 = vld [vmem:[#allocation8 + $0x148] sm:$0xff]
    %v440 = vld [vmem:[#allocation8 + $0x150] sm:$0xff]
    %v441 = vld [vmem:[#allocation8 + $0x158] sm:$0xff]
    %v442 = vld [vmem:[#allocation8 + $0x160] sm:$0xff]
    %v443 = vld [vmem:[#allocation8 + $0x168] sm:$0xff]
    %v444 = vld [vmem:[#allocation8 + $0x170] sm:$0xff]
    %v445 = vld [vmem:[#allocation8 + $0x178] sm:$0xff]
    %v446 = vld [vmem:[#allocation8 + $0x180] sm:$0xff]
    %v447 = vld [vmem:[#allocation8 + $0x188] sm:$0xff]
    %v448 = vld [vmem:[#allocation8 + $0x190] sm:$0xff]
    %v449 = vld [vmem:[#allocation8 + $0x198] sm:$0xff]
    %v450 = vld [vmem:[#allocation8 + $0x1a0] sm:$0xff]
    %v451 = vld [vmem:[#allocation8 + $0x1a8] sm:$0xff]
    %v452 = vld [vmem:[#allocation8 + $0x1b0] sm:$0xff]
    %v453 = vld [vmem:[#allocation8 + $0x1b8] sm:$0xff]
    %v454 = vld [vmem:[#allocation8 + $0x1c0] sm:$0xff]
    %v455 = vld [vmem:[#allocation8 + $0x1c8] sm:$0xff]
    %v456 = vld [vmem:[#allocation8 + $0x1d0] sm:$0xff]
    %v457 = vld [vmem:[#allocation8 + $0x1d8] sm:$0xff]
    %v458 = vld [vmem:[#allocation8 + $0x1e0] sm:$0xff]
    %v459 = vld [vmem:[#allocation8 + $0x1e8] sm:$0xff]
    %v460 = vld [vmem:[#allocation8 + $0x1f0] sm:$0xff]
    %v461 = vld [vmem:[#allocation8 + $0x1f8] sm:$0xff]
    %v462 = vld [vmem:[#allocation8 + $0x200] sm:$0xff]
    %v463 = vld [vmem:[#allocation8 + $0x208] sm:$0xff]
    %v464 = vld [vmem:[#allocation8 + $0x210] sm:$0xff]
    %v465 = vld [vmem:[#allocation8 + $0x218] sm:$0xff]
    %v466 = vld [vmem:[#allocation8 + $0x220] sm:$0xff]
    %v467 = vld [vmem:[#allocation8 + $0x228] sm:$0xff]
    %v468 = vld [vmem:[#allocation8 + $0x230] sm:$0xff]
    %v469 = vld [vmem:[#allocation8 + $0x238] sm:$0xff]
    %v470 = vld [vmem:[#allocation8 + $0x240] sm:$0xff]
    %v471 = vld [vmem:[#allocation8 + $0x248] sm:$0xff]
    %v472 = vld [vmem:[#allocation8 + $0x250] sm:$0xff]
    %v473 = vld [vmem:[#allocation8 + $0x258] sm:$0xff]
    %v474 = vld [vmem:[#allocation8 + $0x260] sm:$0xff]
    %v475 = vld [vmem:[#allocation8 + $0x268] sm:$0xff]
    %v476 = vld [vmem:[#allocation8 + $0x270] sm:$0xff]
    %v477 = vld [vmem:[#allocation8 + $0x278] sm:$0xff]
    %v478 = vld [vmem:[#allocation8 + $0x280] sm:$0xff]
    %v479 = vld [vmem:[#allocation8 + $0x288] sm:$0xff]
    %v480 = vld [vmem:[#allocation8 + $0x290] sm:$0xff]
    %v481 = vld [vmem:[#allocation8 + $0x298] sm:$0xff]
    %v482 = vld [vmem:[#allocation8 + $0x2a0] sm:$0xff]
    %v483 = vld [vmem:[#allocation8 + $0x2a8] sm:$0xff]
    %v484 = vld [vmem:[#allocation8 + $0x2b0] sm:$0xff]
    %v485 = vld [vmem:[#allocation8 + $0x2b8] sm:$0xff]
    %v486 = vld [vmem:[#allocation8 + $0x2c0] sm:$0xff]
    %v487 = vld [vmem:[#allocation8 + $0x2c8] sm:$0xff]
    %v488 = vld [vmem:[#allocation8 + $0x2d0] sm:$0xff]
    %v489 = vld [vmem:[#allocation8 + $0x2d8] sm:$0xff]
    %v490 = vld [vmem:[#allocation8 + $0x2e0] sm:$0xff]
    %v491 = vld [vmem:[#allocation8 + $0x2e8] sm:$0xff]
    %v492 = vld [vmem:[#allocation8 + $0x2f0] sm:$0xff]
    %v493 = vld [vmem:[#allocation8 + $0x2f8] sm:$0xff]
    %v494 = vld [vmem:[#allocation8 + $0x300] sm:$0xff]
    %v495 = vld [vmem:[#allocation8 + $0x308] sm:$0xff]
    %v496 = vld [vmem:[#allocation8 + $0x310] sm:$0xff]
    %v497 = vld [vmem:[#allocation8 + $0x318] sm:$0xff]
    %v498 = vld [vmem:[#allocation8 + $0x320] sm:$0xff]
    %v499 = vld [vmem:[#allocation8 + $0x328] sm:$0xff]
    %v500 = vld [vmem:[#allocation8 + $0x330] sm:$0xff]
    %v501 = vld [vmem:[#allocation8 + $0x338] sm:$0xff]
    %v502 = vld [vmem:[#allocation8 + $0x340] sm:$0xff]
    %v503 = vld [vmem:[#allocation8 + $0x348] sm:$0xff]
    %v504 = vld [vmem:[#allocation8 + $0x350] sm:$0xff]
    %v505 = vld [vmem:[#allocation8 + $0x358] sm:$0xff]
    %v506 = vld [vmem:[#allocation8 + $0x360] sm:$0xff]
    %v507 = vld [vmem:[#allocation8 + $0x368] sm:$0xff]
    %v508 = vld [vmem:[#allocation8 + $0x370] sm:$0xff]
    %v509 = vld [vmem:[#allocation8 + $0x378] sm:$0xff]
    %v510 = vld [vmem:[#allocation8 + $0x380] sm:$0xff]
    %v511 = vld [vmem:[#allocation8 + $0x388] sm:$0xff]
    %v512 = vld [vmem:[#allocation8 + $0x390] sm:$0xff]
    %v513 = vld [vmem:[#allocation8 + $0x398] sm:$0xff]
    %v514 = vld [vmem:[#allocation8 + $0x3a0] sm:$0xff]
    %v515 = vld [vmem:[#allocation8 + $0x3a8] sm:$0xff]
    %v516 = vld [vmem:[#allocation8 + $0x3b0] sm:$0xff]
    %v517 = vld [vmem:[#allocation8 + $0x3b8] sm:$0xff]
    %v518 = vld [vmem:[#allocation8 + $0x3c0] sm:$0xff]
    %v519 = vld [vmem:[#allocation8 + $0x3c8] sm:$0xff]
    %v520 = vld [vmem:[#allocation8 + $0x3d0] sm:$0xff]
    %v521 = vld [vmem:[#allocation8 + $0x3d8] sm:$0xff]
    %v522 = vld [vmem:[#allocation8 + $0x3e0] sm:$0xff]
    %v523 = vld [vmem:[#allocation8 + $0x3e8] sm:$0xff]
    %v524 = vld [vmem:[#allocation8 + $0x3f0] sm:$0xff]
    %v525 = vld [vmem:[#allocation8 + $0x3f8] sm:$0xff]
    %526 = vmatprep.subr.mxu0 %v399
    %527 = vmatpush1.msra.mxu0 %v398
    %528 = vmatprep.subr.mxu0 %v403
    %529 = vmatpush1.msra.mxu0 %v402
    %530 = vmatprep.subr.mxu0 %v407
    %531 = vmatpush1.msra.mxu0 %v406
    %532 = vmatprep.subr.mxu0 %v411
    %533 = vmatpush1.msra.mxu0 %v410
    %534 = vmatprep.subr.mxu0 %v415
    %535 = vmatpush1.msra.mxu0 %v414
    %536 = vmatprep.subr.mxu0 %v419
    %537 = vmatpush1.msra.mxu0 %v418
    %538 = vmatprep.subr.mxu0 %v423
    %539 = vmatpush1.msra.mxu0 %v422
    %540 = vmatprep.subr.mxu0 %v427
    %541 = vmatpush1.msra.mxu0 %v426
    %542 = vmatprep.subr.mxu0 %v431
    %543 = vmatpush1.msra.mxu0 %v430
    %544 = vmatprep.subr.mxu0 %v435
    %545 = vmatpush1.msra.mxu0 %v434
    %546 = vmatprep.subr.mxu0 %v439
    %547 = vmatpush1.msra.mxu0 %v438
    %548 = vmatprep.subr.mxu0 %v443
    %549 = vmatpush1.msra.mxu0 %v442
    %550 = vmatprep.subr.mxu0 %v447
    %551 = vmatpush1.msra.mxu0 %v446
    %552 = vmatprep.subr.mxu0 %v451
    %553 = vmatpush1.msra.mxu0 %v450
    %554 = vmatprep.subr.mxu0 %v455
    %555 = vmatpush1.msra.mxu0 %v454
    %556 = vmatprep.subr.mxu0 %v459
    %557 = vmatpush1.msra.mxu0 %v458
    %558 = vmatprep.subr.mxu0 %v463
    %559 = vmatpush1.msra.mxu0 %v462
    %560 = vmatprep.subr.mxu0 %v467
    %561 = vmatpush1.msra.mxu0 %v466
    %562 = vmatprep.subr.mxu0 %v471
    %563 = vmatpush1.msra.mxu0 %v470
    %564 = vmatprep.subr.mxu0 %v475
    %565 = vmatpush1.msra.mxu0 %v474
    %566 = vmatprep.subr.mxu0 %v479
    %567 = vmatpush1.msra.mxu0 %v478
    %568 = vmatprep.subr.mxu0 %v483
    %569 = vmatpush1.msra.mxu0 %v482
    %570 = vmatprep.subr.mxu0 %v487
    %571 = vmatpush1.msra.mxu0 %v486
    %572 = vmatprep.subr.mxu0 %v491
    %573 = vmatpush1.msra.mxu0 %v490
    %574 = vmatprep.subr.mxu0 %v495
    %575 = vmatpush1.msra.mxu0 %v494
    %576 = vmatprep.subr.mxu0 %v499
    %577 = vmatpush1.msra.mxu0 %v498
    %578 = vmatprep.subr.mxu0 %v503
    %579 = vmatpush1.msra.mxu0 %v502
    %580 = vmatprep.subr.mxu0 %v507
    %581 = vmatpush1.msra.mxu0 %v506
    %582 = vmatprep.subr.mxu0 %v511
    %583 = vmatpush1.msra.mxu0 %v510
    %584 = vmatprep.subr.mxu0 %v515
    %585 = vmatpush1.msra.mxu0 %v514
    %586 = vmatprep.subr.mxu0 %v519
    %587 = vmatpush1.msra.mxu0 %v518
    %588 = vmatprep.subr.mxu0 %v523
    %589 = vmatpush1.msra.mxu0 %v522
    %590 = vmatprep.mubr.f32.mxu0 0.0
    %591 = vmatmul.mubr.f32.gmra.mrb[0].mxu0 %v397
    %v592 = vpop.f32.mrb[0].mxu0
    %v593 = vadd.f32 0.0, %v592
    %v594 = vpop.f32.mrb[0].mxu0
    %v595 = vadd.f32 0.0, %v594
    %596 = vdwg.mxu0
    %597 = vmatprep.subr.mxu0 %v401
    %598 = vmatpush1.msra.mxu0 %v400
    %599 = vmatprep.subr.mxu0 %v405
    %600 = vmatpush1.msra.mxu0 %v404
    %601 = vmatprep.subr.mxu0 %v409
    %602 = vmatpush1.msra.mxu0 %v408
    %603 = vmatprep.subr.mxu0 %v413
    %604 = vmatpush1.msra.mxu0 %v412
    %605 = vmatprep.subr.mxu0 %v417
    %606 = vmatpush1.msra.mxu0 %v416
    %607 = vmatprep.subr.mxu0 %v421
    %608 = vmatpush1.msra.mxu0 %v420
    %609 = vmatprep.subr.mxu0 %v425
    %610 = vmatpush1.msra.mxu0 %v424
    %611 = vmatprep.subr.mxu0 %v429
    %612 = vmatpush1.msra.mxu0 %v428
    %613 = vmatprep.subr.mxu0 %v433
    %614 = vmatpush1.msra.mxu0 %v432
    %615 = vmatprep.subr.mxu0 %v437
    %616 = vmatpush1.msra.mxu0 %v436
    %617 = vmatprep.subr.mxu0 %v441
    %618 = vmatpush1.msra.mxu0 %v440
    %619 = vmatprep.subr.mxu0 %v445
    %620 = vmatpush1.msra.mxu0 %v444
    %621 = vmatprep.subr.mxu0 %v449
    %622 = vmatpush1.msra.mxu0 %v448
    %623 = vmatprep.subr.mxu0 %v453
    %624 = vmatpush1.msra.mxu0 %v452
    %625 = vmatprep.subr.mxu0 %v457
    %626 = vmatpush1.msra.mxu0 %v456
    %627 = vmatprep.subr.mxu0 %v461
    %628 = vmatpush1.msra.mxu0 %v460
    %629 = vmatprep.subr.mxu0 %v465
    %630 = vmatpush1.msra.mxu0 %v464
    %631 = vmatprep.subr.mxu0 %v469
    %632 = vmatpush1.msra.mxu0 %v468
    %633 = vmatprep.subr.mxu0 %v473
    %634 = vmatpush1.msra.mxu0 %v472
    %635 = vmatprep.subr.mxu0 %v477
    %636 = vmatpush1.msra.mxu0 %v476
    %637 = vmatprep.subr.mxu0 %v481
    %638 = vmatpush1.msra.mxu0 %v480
    %639 = vmatprep.subr.mxu0 %v485
    %640 = vmatpush1.msra.mxu0 %v484
    %641 = vmatprep.subr.mxu0 %v489
    %642 = vmatpush1.msra.mxu0 %v488
    %643 = vmatprep.subr.mxu0 %v493
    %644 = vmatpush1.msra.mxu0 %v492
    %645 = vmatprep.subr.mxu0 %v497
    %646 = vmatpush1.msra.mxu0 %v496
    %647 = vmatprep.subr.mxu0 %v501
    %648 = vmatpush1.msra.mxu0 %v500
    %649 = vmatprep.subr.mxu0 %v505
    %650 = vmatpush1.msra.mxu0 %v504
    %651 = vmatprep.subr.mxu0 %v509
    %652 = vmatpush1.msra.mxu0 %v508
    %653 = vmatprep.subr.mxu0 %v513
    %654 = vmatpush1.msra.mxu0 %v512
    %655 = vmatprep.subr.mxu0 %v517
    %656 = vmatpush1.msra.mxu0 %v516
    %657 = vmatprep.subr.mxu0 %v521
    %658 = vmatpush1.msra.mxu0 %v520
    %659 = vmatprep.subr.mxu0 %v525
    %660 = vmatpush1.msra.mxu0 %v524
    %661 = vmatprep.mubr.f32.mxu0 0.0
    %662 = vmatmul.mubr.f32.gmra.mrb[0].mxu0 %v397
    %v663 = vpop.f32.mrb[0].mxu0
    %v664 = vadd.f32 0.0, %v663
    %v665 = vpop.f32.mrb[0].mxu0
    %v666 = vadd.f32 0.0, %v665
    %667 = vdwg.mxu0
    %v668 = vadd.f32 %v593, %v119
    %v669 = vadd.f32 %v595, %v123
    %v670 = vxor.u32 %v668, 2147483648
    %v671 = vxor.u32 %v669, 2147483648
    %v672 = vmul.f32 %v670, 1.442695
    %v673 = vpow.pop %v672
    %v674 = vmul.f32 %v671, 1.442695
    %v675 = vpow.pop %v674
    %v676 = vadd.f32 %v673, 1.0
    %v677 = vadd.f32 %v675, 1.0
    %v678 = vrcp.pop %v676
    %v679 = vmul.f32 1.0, %v678
    %v680 = vrcp.pop %v677
    %v681 = vmul.f32 1.0, %v680
    %v682 = vadd.f32 %v664, %v131
    %v683 = vadd.f32 %v666, %v138
    %v684 = vmul.f32 %v679, %v683
    %v685 = vadd.f32 %v682, %v684
    %v686 = vtanh.pop %v685
    %v687 = vsub.f32 0.0, %v686
    %v688 = vmul.f32 %v681, %v687
    %v689 = vadd.f32 %v686, %v688
    %s690 = sld [smem:[#allocation2 + $0x2]]
    %s691 = smul.u32 %s690, 3
    %s692 = scalar_lea.vmem [#allocation5], %s691
    %v693 = vld [vmem:[%s692] sm:$0x7]
    %s694 = sld [smem:[#allocation2 + $0x3]]
    %s695 = smul.u32 %s694, 3
    %s696 = scalar_lea.vmem [#allocation5], %s695
    %v697 = vld [vmem:[%s696] sm:$0x7]
    %v699 = vlaneseq
    %v700 = vshrl.u32 %v699, 7
    %v701 = vsub.s32 0, %v700
    %v702 = vrot.slane %v693, %v701
    %v703 = vlaneseq
    %v704 = vshrl.u32 %v703, 7
    %v705 = vsub.s32 1, %v704
    %v706 = vrot.slane %v693, %v705
    %v707 = vlaneseq
    %v708 = vshrl.u32 %v707, 7
    %v709 = vsub.s32 2, %v708
    %v710 = vrot.slane %v693, %v709
    %v715 = vlaneseq
    %v716 = vshrl.u32 %v715, 7
    %v717 = vsub.s32 0, %v716
    %v718 = vrot.slane %v697, %v717
    %v719 = vlaneseq
    %v720 = vshrl.u32 %v719, 7
    %v721 = vsub.s32 1, %v720
    %v722 = vrot.slane %v697, %v721
    %v723 = vlaneseq
    %v724 = vshrl.u32 %v723, 7
    %v725 = vsub.s32 2, %v724
    %v726 = vrot.slane %v697, %v725
    %v730 = vsel %vm180, %v702, %v718
    %v731 = vsel %vm180, %v706, %v722
    %v732 = vsel %vm180, %v710, %v726
    %v733 = vsel %vm184, %v730, 0.0
    %v734 = vsel %vm184, %v731, 0.0
    %v735 = vsel %vm184, %v732, 0.0
    %736 = vmatprep.subr.mxu0 %v189
    %737 = vmatpush1.msra.mxu0 %v188
    %738 = vmatprep.subr.mxu0 %v192
    %739 = vmatpush1.msra.mxu0 %v191
    %740 = vmatprep.subr.mxu0 %v195
    %741 = vmatpush1.msra.mxu0 %v194
    %742 = vmatprep.subr.mxu0 %v198
    %743 = vmatpush1.msra.mxu0 %v197
    %744 = vmatprep.subr.mxu0 %v201
    %745 = vmatpush1.msra.mxu0 %v200
    %746 = vmatprep.subr.mxu0 %v204
    %747 = vmatpush1.msra.mxu0 %v203
    %748 = vmatprep.subr.mxu0 %v207
    %749 = vmatpush1.msra.mxu0 %v206
    %750 = vmatprep.subr.mxu0 %v210
    %751 = vmatpush1.msra.mxu0 %v209
    %752 = vmatprep.subr.mxu0 %v213
    %753 = vmatpush1.msra.mxu0 %v212
    %754 = vmatprep.subr.mxu0 %v216
    %755 = vmatpush1.msra.mxu0 %v215
    %756 = vmatprep.subr.mxu0 %v219
    %757 = vmatpush1.msra.mxu0 %v218
    %758 = vmatprep.subr.mxu0 %v222
    %759 = vmatpush1.msra.mxu0 %v221
    %760 = vmatprep.subr.mxu0 %v225
    %761 = vmatpush1.msra.mxu0 %v224
    %762 = vmatprep.subr.mxu0 %v228
    %763 = vmatpush1.msra.mxu0 %v227
    %764 = vmatprep.subr.mxu0 %v231
    %765 = vmatpush1.msra.mxu0 %v230
    %766 = vmatprep.subr.mxu0 %v234
    %767 = vmatpush1.msra.mxu0 %v233
    %768 = vmatprep.subr.mxu0 0.0
    %769 = vmatpush1.msra.mxu0 0.0
    %770 = vmatprep.subr.mxu0 0.0
    %771 = vmatpush1.msra.mxu0 0.0
    %772 = vmatprep.subr.mxu0 0.0
    %773 = vmatpush1.msra.mxu0 0.0
    %774 = vmatprep.subr.mxu0 0.0
    %775 = vmatpush1.msra.mxu0 0.0
    %776 = vmatprep.subr.mxu0 0.0
    %777 = vmatpush1.msra.mxu0 0.0
    %778 = vmatprep.subr.mxu0 0.0
    %779 = vmatpush1.msra.mxu0 0.0
    %780 = vmatprep.subr.mxu0 0.0
    %781 = vmatpush1.msra.mxu0 0.0
    %782 = vmatprep.subr.mxu0 0.0
    %783 = vmatpush1.msra.mxu0 0.0
    %784 = vmatprep.subr.mxu0 0.0
    %785 = vmatpush1.msra.mxu0 0.0
    %786 = vmatprep.subr.mxu0 0.0
    %787 = vmatpush1.msra.mxu0 0.0
    %788 = vmatprep.subr.mxu0 0.0
    %789 = vmatpush1.msra.mxu0 0.0
    %790 = vmatprep.subr.mxu0 0.0
    %791 = vmatpush1.msra.mxu0 0.0
    %792 = vmatprep.subr.mxu0 0.0
    %793 = vmatpush1.msra.mxu0 0.0
    %794 = vmatprep.subr.mxu0 0.0
    %795 = vmatpush1.msra.mxu0 0.0
    %796 = vmatprep.subr.mxu0 0.0
    %797 = vmatpush1.msra.mxu0 0.0
    %798 = vmatprep.subr.mxu0 0.0
    %799 = vmatpush1.msra.mxu0 0.0
    %800 = vmatprep.mubr.f32.mxu0 0.0
    %801 = vmatmul.mubr.f32.gmra.mrb[0].mxu0 %v397
    %v802 = vpop.f32.mrb[0].mxu0
    %v803 = vadd.f32 0.0, %v802
    %v804 = vpop.f32.mrb[0].mxu0
    %v805 = vadd.f32 0.0, %v804
    %806 = vdwg.mxu0
    %807 = vmatprep.subr.mxu0 0.0
    %808 = vmatpush1.msra.mxu0 %v190
    %809 = vmatprep.subr.mxu0 0.0
    %810 = vmatpush1.msra.mxu0 %v193
    %811 = vmatprep.subr.mxu0 0.0
    %812 = vmatpush1.msra.mxu0 %v196
    %813 = vmatprep.subr.mxu0 0.0
    %814 = vmatpush1.msra.mxu0 %v199
    %815 = vmatprep.subr.mxu0 0.0
    %816 = vmatpush1.msra.mxu0 %v202
    %817 = vmatprep.subr.mxu0 0.0
    %818 = vmatpush1.msra.mxu0 %v205
    %819 = vmatprep.subr.mxu0 0.0
    %820 = vmatpush1.msra.mxu0 %v208
    %821 = vmatprep.subr.mxu0 0.0
    %822 = vmatpush1.msra.mxu0 %v211
    %823 = vmatprep.subr.mxu0 0.0
    %824 = vmatpush1.msra.mxu0 %v214
    %825 = vmatprep.subr.mxu0 0.0
    %826 = vmatpush1.msra.mxu0 %v217
    %827 = vmatprep.subr.mxu0 0.0
    %828 = vmatpush1.msra.mxu0 %v220
    %829 = vmatprep.subr.mxu0 0.0
    %830 = vmatpush1.msra.mxu0 %v223
    %831 = vmatprep.subr.mxu0 0.0
    %832 = vmatpush1.msra.mxu0 %v226
    %833 = vmatprep.subr.mxu0 0.0
    %834 = vmatpush1.msra.mxu0 %v229
    %835 = vmatprep.subr.mxu0 0.0
    %836 = vmatpush1.msra.mxu0 %v232
    %837 = vmatprep.subr.mxu0 0.0
    %838 = vmatpush1.msra.mxu0 %v235
    %839 = vmatprep.subr.mxu0 0.0
    %840 = vmatpush1.msra.mxu0 0.0
    %841 = vmatprep.subr.mxu0 0.0
    %842 = vmatpush1.msra.mxu0 0.0
    %843 = vmatprep.subr.mxu0 0.0
    %844 = vmatpush1.msra.mxu0 0.0
    %845 = vmatprep.subr.mxu0 0.0
    %846 = vmatpush1.msra.mxu0 0.0
    %847 = vmatprep.subr.mxu0 0.0
    %848 = vmatpush1.msra.mxu0 0.0
    %849 = vmatprep.subr.mxu0 0.0
    %850 = vmatpush1.msra.mxu0 0.0
    %851 = vmatprep.subr.mxu0 0.0
    %852 = vmatpush1.msra.mxu0 0.0
    %853 = vmatprep.subr.mxu0 0.0
    %854 = vmatpush1.msra.mxu0 0.0
    %855 = vmatprep.subr.mxu0 0.0
    %856 = vmatpush1.msra.mxu0 0.0
    %857 = vmatprep.subr.mxu0 0.0
    %858 = vmatpush1.msra.mxu0 0.0
    %859 = vmatprep.subr.mxu0 0.0
    %860 = vmatpush1.msra.mxu0 0.0
    %861 = vmatprep.subr.mxu0 0.0
    %862 = vmatpush1.msra.mxu0 0.0
    %863 = vmatprep.subr.mxu0 0.0
    %864 = vmatpush1.msra.mxu0 0.0
    %865 = vmatprep.subr.mxu0 0.0
    %866 = vmatpush1.msra.mxu0 0.0
    %867 = vmatprep.subr.mxu0 0.0
    %868 = vmatpush1.msra.mxu0 0.0
    %869 = vmatprep.subr.mxu0 0.0
    %870 = vmatpush1.msra.mxu0 0.0
    %871 = vmatprep.mubr.f32.mxu0 0.0
    %872 = vmatmul.mubr.f32.gmra.mrb[0].mxu0 %v397
    %v873 = vpop.f32.mrb[0].mxu0
    %v874 = vadd.f32 0.0, %v873
    %v875 = vpop.f32.mrb[0].mxu0
    %876 = vdwg.mxu0
    %v877 = vadd.f32 %v733, %v803
    %v878 = vadd.f32 %v734, %v805
    %v879 = vxor.u32 %v877, 2147483648
    %v880 = vxor.u32 %v878, 2147483648
    %v881 = vmul.f32 %v879, 1.442695
    %v882 = vpow.pop %v881
    %v883 = vmul.f32 %v880, 1.442695
    %v884 = vpow.pop %v883
    %v885 = vadd.f32 %v882, 1.0
    %v886 = vadd.f32 %v884, 1.0
    %v887 = vrcp.pop %v885
    %v888 = vmul.f32 1.0, %v887
    %v889 = vrcp.pop %v886
    %v890 = vmul.f32 1.0, %v889
    %v891 = vadd.f32 %v874, %v112
    %v892 = vmul.f32 %v888, %v891
    %v893 = vadd.f32 %v735, %v892
    %v894 = vtanh.pop %v893
    %v895 = vsub.f32 %v397, %v894
    %v896 = vmul.f32 %v890, %v895
    %v897 = vadd.f32 %v894, %v896
    %898 = vmatprep.subr.mxu0 %v399
    %899 = vmatpush1.msra.mxu0 %v398
    %900 = vmatprep.subr.mxu0 %v403
    %901 = vmatpush1.msra.mxu0 %v402
    %902 = vmatprep.subr.mxu0 %v407
    %903 = vmatpush1.msra.mxu0 %v406
    %904 = vmatprep.subr.mxu0 %v411
    %905 = vmatpush1.msra.mxu0 %v410
    %906 = vmatprep.subr.mxu0 %v415
    %907 = vmatpush1.msra.mxu0 %v414
    %908 = vmatprep.subr.mxu0 %v419
    %909 = vmatpush1.msra.mxu0 %v418
    %910 = vmatprep.subr.mxu0 %v423
    %911 = vmatpush1.msra.mxu0 %v422
    %912 = vmatprep.subr.mxu0 %v427
    %913 = vmatpush1.msra.mxu0 %v426
    %914 = vmatprep.subr.mxu0 %v431
    %915 = vmatpush1.msra.mxu0 %v430
    %916 = vmatprep.subr.mxu0 %v435
    %917 = vmatpush1.msra.mxu0 %v434
    %918 = vmatprep.subr.mxu0 %v439
    %919 = vmatpush1.msra.mxu0 %v438
    %920 = vmatprep.subr.mxu0 %v443
    %921 = vmatpush1.msra.mxu0 %v442
    %922 = vmatprep.subr.mxu0 %v447
    %923 = vmatpush1.msra.mxu0 %v446
    %924 = vmatprep.subr.mxu0 %v451
    %925 = vmatpush1.msra.mxu0 %v450
    %926 = vmatprep.subr.mxu0 %v455
    %927 = vmatpush1.msra.mxu0 %v454
    %928 = vmatprep.subr.mxu0 %v459
    %929 = vmatpush1.msra.mxu0 %v458
    %930 = vmatprep.subr.mxu0 %v463
    %931 = vmatpush1.msra.mxu0 %v462
    %932 = vmatprep.subr.mxu0 %v467
    %933 = vmatpush1.msra.mxu0 %v466
    %934 = vmatprep.subr.mxu0 %v471
    %935 = vmatpush1.msra.mxu0 %v470
    %936 = vmatprep.subr.mxu0 %v475
    %937 = vmatpush1.msra.mxu0 %v474
    %938 = vmatprep.subr.mxu0 %v479
    %939 = vmatpush1.msra.mxu0 %v478
    %940 = vmatprep.subr.mxu0 %v483
    %941 = vmatpush1.msra.mxu0 %v482
    %942 = vmatprep.subr.mxu0 %v487
    %943 = vmatpush1.msra.mxu0 %v486
    %944 = vmatprep.subr.mxu0 %v491
    %945 = vmatpush1.msra.mxu0 %v490
    %946 = vmatprep.subr.mxu0 %v495
    %947 = vmatpush1.msra.mxu0 %v494
    %948 = vmatprep.subr.mxu0 %v499
    %949 = vmatpush1.msra.mxu0 %v498
    %950 = vmatprep.subr.mxu0 %v503
    %951 = vmatpush1.msra.mxu0 %v502
    %952 = vmatprep.subr.mxu0 %v507
    %953 = vmatpush1.msra.mxu0 %v506
    %954 = vmatprep.subr.mxu0 %v511
    %955 = vmatpush1.msra.mxu0 %v510
    %956 = vmatprep.subr.mxu0 %v515
    %957 = vmatpush1.msra.mxu0 %v514
    %958 = vmatprep.subr.mxu0 %v519
    %959 = vmatpush1.msra.mxu0 %v518
    %960 = vmatprep.subr.mxu0 %v523
    %961 = vmatpush1.msra.mxu0 %v522
    %962 = vmatprep.mubr.f32.mxu0 %v689
    %963 = vmatmul.mubr.f32.gmra.mrb[0].mxu0 %v897
    %v964 = vpop.f32.mrb[0].mxu0
    %v965 = vadd.f32 0.0, %v964
    %v966 = vpop.f32.mrb[0].mxu0
    %v967 = vadd.f32 0.0, %v966
    %968 = vdwg.mxu0
    %969 = vmatprep.subr.mxu0 %v401
    %970 = vmatpush1.msra.mxu0 %v400
    %971 = vmatprep.subr.mxu0 %v405
    %972 = vmatpush1.msra.mxu0 %v404
    %973 = vmatprep.subr.mxu0 %v409
    %974 = vmatpush1.msra.mxu0 %v408
    %975 = vmatprep.subr.mxu0 %v413
    %976 = vmatpush1.msra.mxu0 %v412
    %977 = vmatprep.subr.mxu0 %v417
    %978 = vmatpush1.msra.mxu0 %v416
    %979 = vmatprep.subr.mxu0 %v421
    %980 = vmatpush1.msra.mxu0 %v420
    %981 = vmatprep.subr.mxu0 %v425
    %982 = vmatpush1.msra.mxu0 %v424
    %983 = vmatprep.subr.mxu0 %v429
    %984 = vmatpush1.msra.mxu0 %v428
    %985 = vmatprep.subr.mxu0 %v433
    %986 = vmatpush1.msra.mxu0 %v432
    %987 = vmatprep.subr.mxu0 %v437
    %988 = vmatpush1.msra.mxu0 %v436
    %989 = vmatprep.subr.mxu0 %v441
    %990 = vmatpush1.msra.mxu0 %v440
    %991 = vmatprep.subr.mxu0 %v445
    %992 = vmatpush1.msra.mxu0 %v444
    %993 = vmatprep.subr.mxu0 %v449
    %994 = vmatpush1.msra.mxu0 %v448
    %995 = vmatprep.subr.mxu0 %v453
    %996 = vmatpush1.msra.mxu0 %v452
    %997 = vmatprep.subr.mxu0 %v457
    %998 = vmatpush1.msra.mxu0 %v456
    %999 = vmatprep.subr.mxu0 %v461
    %1000 = vmatpush1.msra.mxu0 %v460
    %1001 = vmatprep.subr.mxu0 %v465
    %1002 = vmatpush1.msra.mxu0 %v464
    %1003 = vmatprep.subr.mxu0 %v469
    %1004 = vmatpush1.msra.mxu0 %v468
    %1005 = vmatprep.subr.mxu0 %v473
    %1006 = vmatpush1.msra.mxu0 %v472
    %1007 = vmatprep.subr.mxu0 %v477
    %1008 = vmatpush1.msra.mxu0 %v476
    %1009 = vmatprep.subr.mxu0 %v481
    %1010 = vmatpush1.msra.mxu0 %v480
    %1011 = vmatprep.subr.mxu0 %v485
    %1012 = vmatpush1.msra.mxu0 %v484
    %1013 = vmatprep.subr.mxu0 %v489
    %1014 = vmatpush1.msra.mxu0 %v488
    %1015 = vmatprep.subr.mxu0 %v493
    %1016 = vmatpush1.msra.mxu0 %v492
    %1017 = vmatprep.subr.mxu0 %v497
    %1018 = vmatpush1.msra.mxu0 %v496
    %1019 = vmatprep.subr.mxu0 %v501
    %1020 = vmatpush1.msra.mxu0 %v500
    %1021 = vmatprep.subr.mxu0 %v505
    %1022 = vmatpush1.msra.mxu0 %v504
    %1023 = vmatprep.subr.mxu0 %v509
    %1024 = vmatpush1.msra.mxu0 %v508
    %1025 = vmatprep.subr.mxu0 %v513
    %1026 = vmatpush1.msra.mxu0 %v512
    %1027 = vmatprep.subr.mxu0 %v517
    %1028 = vmatpush1.msra.mxu0 %v516
    %1029 = vmatprep.subr.mxu0 %v521
    %1030 = vmatpush1.msra.mxu0 %v520
    %1031 = vmatprep.subr.mxu0 %v525
    %1032 = vmatpush1.msra.mxu0 %v524
    %1033 = vmatprep.mubr.f32.mxu0 %v689
    %1034 = vmatmul.mubr.f32.gmra.mrb[0].mxu0 %v897
    %v1035 = vpop.f32.mrb[0].mxu0
    %v1036 = vadd.f32 0.0, %v1035
    %v1037 = vpop.f32.mrb[0].mxu0
    %v1038 = vadd.f32 0.0, %v1037
    %1039 = vdwg.mxu0
    %v1040 = vadd.f32 %v965, %v119
    %v1041 = vadd.f32 %v967, %v123
    %v1042 = vxor.u32 %v1040, 2147483648
    %v1043 = vxor.u32 %v1041, 2147483648
    %v1044 = vmul.f32 %v1042, 1.442695
    %v1045 = vpow.pop %v1044
    %v1046 = vmul.f32 %v1043, 1.442695
    %v1047 = vpow.pop %v1046
    %v1048 = vadd.f32 %v1045, 1.0
    %v1049 = vadd.f32 %v1047, 1.0
    %v1050 = vrcp.pop %v1048
    %v1051 = vmul.f32 1.0, %v1050
    %v1052 = vrcp.pop %v1049
    %v1053 = vmul.f32 1.0, %v1052
    %v1054 = vadd.f32 %v1036, %v131
    %v1055 = vadd.f32 %v1038, %v138
    %v1056 = vmul.f32 %v1051, %v1055
    %v1057 = vadd.f32 %v1054, %v1056
    %v1058 = vtanh.pop %v1057
    %v1059 = vsub.f32 %v689, %v1058
    %v1060 = vmul.f32 %v1053, %v1059
    %v1061 = vadd.f32 %v1058, %v1060
    %s1062 = sld [smem:[#allocation2 + $0x4]]
    %s1063 = smul.u32 %s1062, 3
    %s1064 = scalar_lea.vmem [#allocation5], %s1063
    %v1065 = vld [vmem:[%s1064] sm:$0x7]
    %s1066 = sld [smem:[#allocation2 + $0x5]]
    %s1067 = smul.u32 %s1066, 3
    %s1068 = scalar_lea.vmem [#allocation5], %s1067
    %v1069 = vld [vmem:[%s1068] sm:$0x7]
    %v1071 = vlaneseq
    %v1072 = vshrl.u32 %v1071, 7
    %v1073 = vsub.s32 0, %v1072
    %v1074 = vrot.slane %v1065, %v1073
    %v1075 = vlaneseq
    %v1076 = vshrl.u32 %v1075, 7
    %v1077 = vsub.s32 1, %v1076
    %v1078 = vrot.slane %v1065, %v1077
    %v1079 = vlaneseq
    %v1080 = vshrl.u32 %v1079, 7
    %v1081 = vsub.s32 2, %v1080
    %v1082 = vrot.slane %v1065, %v1081
    %v1087 = vlaneseq
    %v1088 = vshrl.u32 %v1087, 7
    %v1089 = vsub.s32 0, %v1088
    %v1090 = vrot.slane %v1069, %v1089
    %v1091 = vlaneseq
    %v1092 = vshrl.u32 %v1091, 7
    %v1093 = vsub.s32 1, %v1092
    %v1094 = vrot.slane %v1069, %v1093
    %v1095 = vlaneseq
    %v1096 = vshrl.u32 %v1095, 7
    %v1097 = vsub.s32 2, %v1096
    %v1098 = vrot.slane %v1069, %v1097
    %v1102 = vsel %vm180, %v1074, %v1090
    %v1103 = vsel %vm180, %v1078, %v1094
    %v1104 = vsel %vm180, %v1082, %v1098
    %v1105 = vsel %vm184, %v1102, 0.0
    %v1106 = vsel %vm184, %v1103, 0.0
    %v1107 = vsel %vm184, %v1104, 0.0
    %1108 = vmatprep.subr.mxu0 %v189
    %1109 = vmatpush1.msra.mxu0 %v188
    %1110 = vmatprep.subr.mxu0 %v192
    %1111 = vmatpush1.msra.mxu0 %v191
    %1112 = vmatprep.subr.mxu0 %v195
    %1113 = vmatpush1.msra.mxu0 %v194
    %1114 = vmatprep.subr.mxu0 %v198
    %1115 = vmatpush1.msra.mxu0 %v197
    %1116 = vmatprep.subr.mxu0 %v201
    %1117 = vmatpush1.msra.mxu0 %v200
    %1118 = vmatprep.subr.mxu0 %v204
    %1119 = vmatpush1.msra.mxu0 %v203
    %1120 = vmatprep.subr.mxu0 %v207
    %1121 = vmatpush1.msra.mxu0 %v206
    %1122 = vmatprep.subr.mxu0 %v210
    %1123 = vmatpush1.msra.mxu0 %v209
    %1124 = vmatprep.subr.mxu0 %v213
    %1125 = vmatpush1.msra.mxu0 %v212
    %1126 = vmatprep.subr.mxu0 %v216
    %1127 = vmatpush1.msra.mxu0 %v215
    %1128 = vmatprep.subr.mxu0 %v219
    %1129 = vmatpush1.msra.mxu0 %v218
    %1130 = vmatprep.subr.mxu0 %v222
    %1131 = vmatpush1.msra.mxu0 %v221
    %1132 = vmatprep.subr.mxu0 %v225
    %1133 = vmatpush1.msra.mxu0 %v224
    %1134 = vmatprep.subr.mxu0 %v228
    %1135 = vmatpush1.msra.mxu0 %v227
    %1136 = vmatprep.subr.mxu0 %v231
    %1137 = vmatpush1.msra.mxu0 %v230
    %1138 = vmatprep.subr.mxu0 %v234
    %1139 = vmatpush1.msra.mxu0 %v233
    %1140 = vmatprep.subr.mxu0 0.0
    %1141 = vmatpush1.msra.mxu0 0.0
    %1142 = vmatprep.subr.mxu0 0.0
    %1143 = vmatpush1.msra.mxu0 0.0
    %1144 = vmatprep.subr.mxu0 0.0
    %1145 = vmatpush1.msra.mxu0 0.0
    %1146 = vmatprep.subr.mxu0 0.0
    %1147 = vmatpush1.msra.mxu0 0.0
    %1148 = vmatprep.subr.mxu0 0.0
    %1149 = vmatpush1.msra.mxu0 0.0
    %1150 = vmatprep.subr.mxu0 0.0
    %1151 = vmatpush1.msra.mxu0 0.0
    %1152 = vmatprep.subr.mxu0 0.0
    %1153 = vmatpush1.msra.mxu0 0.0
    %1154 = vmatprep.subr.mxu0 0.0
    %1155 = vmatpush1.msra.mxu0 0.0
    %1156 = vmatprep.subr.mxu0 0.0
    %1157 = vmatpush1.msra.mxu0 0.0
    %1158 = vmatprep.subr.mxu0 0.0
    %1159 = vmatpush1.msra.mxu0 0.0
    %1160 = vmatprep.subr.mxu0 0.0
    %1161 = vmatpush1.msra.mxu0 0.0
    %1162 = vmatprep.subr.mxu0 0.0
    %1163 = vmatpush1.msra.mxu0 0.0
    %1164 = vmatprep.subr.mxu0 0.0
    %1165 = vmatpush1.msra.mxu0 0.0
    %1166 = vmatprep.subr.mxu0 0.0
    %1167 = vmatpush1.msra.mxu0 0.0
    %1168 = vmatprep.subr.mxu0 0.0
    %1169 = vmatpush1.msra.mxu0 0.0
    %1170 = vmatprep.subr.mxu0 0.0
    %1171 = vmatpush1.msra.mxu0 0.0
    %1172 = vmatprep.mubr.f32.mxu0 0.0
    %1173 = vmatmul.mubr.f32.gmra.mrb[0].mxu0 %v897
    %v1174 = vpop.f32.mrb[0].mxu0
    %v1175 = vadd.f32 0.0, %v1174
    %v1176 = vpop.f32.mrb[0].mxu0
    %v1177 = vadd.f32 0.0, %v1176
    %1178 = vdwg.mxu0
    %1179 = vmatprep.subr.mxu0 0.0
    %1180 = vmatpush1.msra.mxu0 %v190
    %1181 = vmatprep.subr.mxu0 0.0
    %1182 = vmatpush1.msra.mxu0 %v193
    %1183 = vmatprep.subr.mxu0 0.0
    %1184 = vmatpush1.msra.mxu0 %v196
    %1185 = vmatprep.subr.mxu0 0.0
    %1186 = vmatpush1.msra.mxu0 %v199
    %1187 = vmatprep.subr.mxu0 0.0
    %1188 = vmatpush1.msra.mxu0 %v202
    %1189 = vmatprep.subr.mxu0 0.0
    %1190 = vmatpush1.msra.mxu0 %v205
    %1191 = vmatprep.subr.mxu0 0.0
    %1192 = vmatpush1.msra.mxu0 %v208
    %1193 = vmatprep.subr.mxu0 0.0
    %1194 = vmatpush1.msra.mxu0 %v211
    %1195 = vmatprep.subr.mxu0 0.0
    %1196 = vmatpush1.msra.mxu0 %v214
    %1197 = vmatprep.subr.mxu0 0.0
    %1198 = vmatpush1.msra.mxu0 %v217
    %1199 = vmatprep.subr.mxu0 0.0
    %1200 = vmatpush1.msra.mxu0 %v220
    %1201 = vmatprep.subr.mxu0 0.0
    %1202 = vmatpush1.msra.mxu0 %v223
    %1203 = vmatprep.subr.mxu0 0.0
    %1204 = vmatpush1.msra.mxu0 %v226
    %1205 = vmatprep.subr.mxu0 0.0
    %1206 = vmatpush1.msra.mxu0 %v229
    %1207 = vmatprep.subr.mxu0 0.0
    %1208 = vmatpush1.msra.mxu0 %v232
    %1209 = vmatprep.subr.mxu0 0.0
    %1210 = vmatpush1.msra.mxu0 %v235
    %1211 = vmatprep.subr.mxu0 0.0
    %1212 = vmatpush1.msra.mxu0 0.0
    %1213 = vmatprep.subr.mxu0 0.0
    %1214 = vmatpush1.msra.mxu0 0.0
    %1215 = vmatprep.subr.mxu0 0.0
    %1216 = vmatpush1.msra.mxu0 0.0
    %1217 = vmatprep.subr.mxu0 0.0
    %1218 = vmatpush1.msra.mxu0 0.0
    %1219 = vmatprep.subr.mxu0 0.0
    %1220 = vmatpush1.msra.mxu0 0.0
    %1221 = vmatprep.subr.mxu0 0.0
    %1222 = vmatpush1.msra.mxu0 0.0
    %1223 = vmatprep.subr.mxu0 0.0
    %1224 = vmatpush1.msra.mxu0 0.0
    %1225 = vmatprep.subr.mxu0 0.0
    %1226 = vmatpush1.msra.mxu0 0.0
    %1227 = vmatprep.subr.mxu0 0.0
    %1228 = vmatpush1.msra.mxu0 0.0
    %1229 = vmatprep.subr.mxu0 0.0
    %1230 = vmatpush1.msra.mxu0 0.0
    %1231 = vmatprep.subr.mxu0 0.0
    %1232 = vmatpush1.msra.mxu0 0.0
    %1233 = vmatprep.subr.mxu0 0.0
    %1234 = vmatpush1.msra.mxu0 0.0
    %1235 = vmatprep.subr.mxu0 0.0
    %1236 = vmatpush1.msra.mxu0 0.0
    %1237 = vmatprep.subr.mxu0 0.0
    %1238 = vmatpush1.msra.mxu0 0.0
    %1239 = vmatprep.subr.mxu0 0.0
    %1240 = vmatpush1.msra.mxu0 0.0
    %1241 = vmatprep.subr.mxu0 0.0
    %1242 = vmatpush1.msra.mxu0 0.0
    %1243 = vmatprep.mubr.f32.mxu0 0.0
    %1244 = vmatmul.mubr.f32.gmra.mrb[0].mxu0 %v897
    %v1245 = vpop.f32.mrb[0].mxu0
    %v1246 = vadd.f32 0.0, %v1245
    %v1247 = vpop.f32.mrb[0].mxu0
    %1248 = vdwg.mxu0
    %v1249 = vadd.f32 %v1105, %v1175
    %v1250 = vadd.f32 %v1106, %v1177
    %v1251 = vxor.u32 %v1249, 2147483648
    %v1252 = vxor.u32 %v1250, 2147483648
    %v1253 = vmul.f32 %v1251, 1.442695
    %v1254 = vpow.pop %v1253
    %v1255 = vmul.f32 %v1252, 1.442695
    %v1256 = vpow.pop %v1255
    %v1257 = vadd.f32 %v1254, 1.0
    %v1258 = vadd.f32 %v1256, 1.0
    %v1259 = vrcp.pop %v1257
    %v1260 = vmul.f32 1.0, %v1259
    %v1261 = vrcp.pop %v1258
    %v1262 = vmul.f32 1.0, %v1261
    %v1263 = vadd.f32 %v1246, %v112
    %v1264 = vmul.f32 %v1260, %v1263
    %v1265 = vadd.f32 %v1107, %v1264
    %v1266 = vtanh.pop %v1265
    %v1267 = vsub.f32 %v897, %v1266
    %v1268 = vmul.f32 %v1262, %v1267
    %v1269 = vadd.f32 %v1266, %v1268
    %1270 = vmatprep.subr.mxu0 %v399
    %1271 = vmatpush1.msra.mxu0 %v398
    %1272 = vmatprep.subr.mxu0 %v403
    %1273 = vmatpush1.msra.mxu0 %v402
    %1274 = vmatprep.subr.mxu0 %v407
    %1275 = vmatpush1.msra.mxu0 %v406
    %1276 = vmatprep.subr.mxu0 %v411
    %1277 = vmatpush1.msra.mxu0 %v410
    %1278 = vmatprep.subr.mxu0 %v415
    %1279 = vmatpush1.msra.mxu0 %v414
    %1280 = vmatprep.subr.mxu0 %v419
    %1281 = vmatpush1.msra.mxu0 %v418
    %1282 = vmatprep.subr.mxu0 %v423
    %1283 = vmatpush1.msra.mxu0 %v422
    %1284 = vmatprep.subr.mxu0 %v427
    %1285 = vmatpush1.msra.mxu0 %v426
    %1286 = vmatprep.subr.mxu0 %v431
    %1287 = vmatpush1.msra.mxu0 %v430
    %1288 = vmatprep.subr.mxu0 %v435
    %1289 = vmatpush1.msra.mxu0 %v434
    %1290 = vmatprep.subr.mxu0 %v439
    %1291 = vmatpush1.msra.mxu0 %v438
    %1292 = vmatprep.subr.mxu0 %v443
    %1293 = vmatpush1.msra.mxu0 %v442
    %1294 = vmatprep.subr.mxu0 %v447
    %1295 = vmatpush1.msra.mxu0 %v446
    %1296 = vmatprep.subr.mxu0 %v451
    %1297 = vmatpush1.msra.mxu0 %v450
    %1298 = vmatprep.subr.mxu0 %v455
    %1299 = vmatpush1.msra.mxu0 %v454
    %1300 = vmatprep.subr.mxu0 %v459
    %1301 = vmatpush1.msra.mxu0 %v458
    %1302 = vmatprep.subr.mxu0 %v463
    %1303 = vmatpush1.msra.mxu0 %v462
    %1304 = vmatprep.subr.mxu0 %v467
    %1305 = vmatpush1.msra.mxu0 %v466
    %1306 = vmatprep.subr.mxu0 %v471
    %1307 = vmatpush1.msra.mxu0 %v470
    %1308 = vmatprep.subr.mxu0 %v475
    %1309 = vmatpush1.msra.mxu0 %v474
    %1310 = vmatprep.subr.mxu0 %v479
    %1311 = vmatpush1.msra.mxu0 %v478
    %1312 = vmatprep.subr.mxu0 %v483
    %1313 = vmatpush1.msra.mxu0 %v482
    %1314 = vmatprep.subr.mxu0 %v487
    %1315 = vmatpush1.msra.mxu0 %v486
    %1316 = vmatprep.subr.mxu0 %v491
    %1317 = vmatpush1.msra.mxu0 %v490
    %1318 = vmatprep.subr.mxu0 %v495
    %1319 = vmatpush1.msra.mxu0 %v494
    %1320 = vmatprep.subr.mxu0 %v499
    %1321 = vmatpush1.msra.mxu0 %v498
    %1322 = vmatprep.subr.mxu0 %v503
    %1323 = vmatpush1.msra.mxu0 %v502
    %1324 = vmatprep.subr.mxu0 %v507
    %1325 = vmatpush1.msra.mxu0 %v506
    %1326 = vmatprep.subr.mxu0 %v511
    %1327 = vmatpush1.msra.mxu0 %v510
    %1328 = vmatprep.subr.mxu0 %v515
    %1329 = vmatpush1.msra.mxu0 %v514
    %1330 = vmatprep.subr.mxu0 %v519
    %1331 = vmatpush1.msra.mxu0 %v518
    %1332 = vmatprep.subr.mxu0 %v523
    %1333 = vmatpush1.msra.mxu0 %v522
    %1334 = vmatprep.mubr.f32.mxu0 %v1061
    %1335 = vmatmul.mubr.f32.gmra.mrb[0].mxu0 %v1269
    %v1336 = vpop.f32.mrb[0].mxu0
    %v1337 = vadd.f32 0.0, %v1336
    %v1338 = vpop.f32.mrb[0].mxu0
    %v1339 = vadd.f32 0.0, %v1338
    %1340 = vdwg.mxu0
    %1341 = vmatprep.subr.mxu0 %v401
    %1342 = vmatpush1.msra.mxu0 %v400
    %1343 = vmatprep.subr.mxu0 %v405
    %1344 = vmatpush1.msra.mxu0 %v404
    %1345 = vmatprep.subr.mxu0 %v409
    %1346 = vmatpush1.msra.mxu0 %v408
    %1347 = vmatprep.subr.mxu0 %v413
    %1348 = vmatpush1.msra.mxu0 %v412
    %1349 = vmatprep.subr.mxu0 %v417
    %1350 = vmatpush1.msra.mxu0 %v416
    %1351 = vmatprep.subr.mxu0 %v421
    %1352 = vmatpush1.msra.mxu0 %v420
    %1353 = vmatprep.subr.mxu0 %v425
    %1354 = vmatpush1.msra.mxu0 %v424
    %1355 = vmatprep.subr.mxu0 %v429
    %1356 = vmatpush1.msra.mxu0 %v428
    %1357 = vmatprep.subr.mxu0 %v433
    %1358 = vmatpush1.msra.mxu0 %v432
    %1359 = vmatprep.subr.mxu0 %v437
    %1360 = vmatpush1.msra.mxu0 %v436
    %1361 = vmatprep.subr.mxu0 %v441
    %1362 = vmatpush1.msra.mxu0 %v440
    %1363 = vmatprep.subr.mxu0 %v445
    %1364 = vmatpush1.msra.mxu0 %v444
    %1365 = vmatprep.subr.mxu0 %v449
    %1366 = vmatpush1.msra.mxu0 %v448
    %1367 = vmatprep.subr.mxu0 %v453
    %1368 = vmatpush1.msra.mxu0 %v452
    %1369 = vmatprep.subr.mxu0 %v457
    %1370 = vmatpush1.msra.mxu0 %v456
    %1371 = vmatprep.subr.mxu0 %v461
    %1372 = vmatpush1.msra.mxu0 %v460
    %1373 = vmatprep.subr.mxu0 %v465
    %1374 = vmatpush1.msra.mxu0 %v464
    %1375 = vmatprep.subr.mxu0 %v469
    %1376 = vmatpush1.msra.mxu0 %v468
    %1377 = vmatprep.subr.mxu0 %v473
    %1378 = vmatpush1.msra.mxu0 %v472
    %1379 = vmatprep.subr.mxu0 %v477
    %1380 = vmatpush1.msra.mxu0 %v476
    %1381 = vmatprep.subr.mxu0 %v481
    %1382 = vmatpush1.msra.mxu0 %v480
    %1383 = vmatprep.subr.mxu0 %v485
    %1384 = vmatpush1.msra.mxu0 %v484
    %1385 = vmatprep.subr.mxu0 %v489
    %1386 = vmatpush1.msra.mxu0 %v488
    %1387 = vmatprep.subr.mxu0 %v493
    %1388 = vmatpush1.msra.mxu0 %v492
    %1389 = vmatprep.subr.mxu0 %v497
    %1390 = vmatpush1.msra.mxu0 %v496
    %1391 = vmatprep.subr.mxu0 %v501
    %1392 = vmatpush1.msra.mxu0 %v500
    %1393 = vmatprep.subr.mxu0 %v505
    %1394 = vmatpush1.msra.mxu0 %v504
    %1395 = vmatprep.subr.mxu0 %v509
    %1396 = vmatpush1.msra.mxu0 %v508
    %1397 = vmatprep.subr.mxu0 %v513
    %1398 = vmatpush1.msra.mxu0 %v512
    %1399 = vmatprep.subr.mxu0 %v517
    %1400 = vmatpush1.msra.mxu0 %v516
    %1401 = vmatprep.subr.mxu0 %v521
    %1402 = vmatpush1.msra.mxu0 %v520
    %1403 = vmatprep.subr.mxu0 %v525
    %1404 = vmatpush1.msra.mxu0 %v524
    %1405 = vmatprep.mubr.f32.mxu0 %v1061
    %1406 = vmatmul.mubr.f32.gmra.mrb[0].mxu0 %v1269
    %v1407 = vpop.f32.mrb[0].mxu0
    %v1408 = vadd.f32 0.0, %v1407
    %v1409 = vpop.f32.mrb[0].mxu0
    %v1410 = vadd.f32 0.0, %v1409
    %1411 = vdwg.mxu0
    %v1412 = vadd.f32 %v1337, %v119
    %v1413 = vadd.f32 %v1339, %v123
    %v1414 = vxor.u32 %v1412, 2147483648
    %v1415 = vxor.u32 %v1413, 2147483648
    %v1416 = vmul.f32 %v1414, 1.442695
    %v1417 = vpow.pop %v1416
    %v1418 = vmul.f32 %v1415, 1.442695
    %v1419 = vpow.pop %v1418
    %v1420 = vadd.f32 %v1417, 1.0
    %v1421 = vadd.f32 %v1419, 1.0
    %v1422 = vrcp.pop %v1420
    %v1423 = vmul.f32 1.0, %v1422
    %v1424 = vrcp.pop %v1421
    %v1425 = vmul.f32 1.0, %v1424
    %v1426 = vadd.f32 %v1408, %v131
    %v1427 = vadd.f32 %v1410, %v138
    %v1428 = vmul.f32 %v1423, %v1427
    %v1429 = vadd.f32 %v1426, %v1428
    %v1430 = vtanh.pop %v1429
    %v1431 = vsub.f32 %v1061, %v1430
    %v1432 = vmul.f32 %v1425, %v1431
    %v1433 = vadd.f32 %v1430, %v1432
    %s1434 = sld [smem:[#allocation2 + $0x6]]
    %s1435 = smul.u32 %s1434, 3
    %s1436 = scalar_lea.vmem [#allocation5], %s1435
    %v1437 = vld [vmem:[%s1436] sm:$0x7]
    %s1438 = sld [smem:[#allocation2 + $0x7]]
    %s1439 = smul.u32 %s1438, 3
    %s1440 = scalar_lea.vmem [#allocation5], %s1439
    %v1441 = vld [vmem:[%s1440] sm:$0x7]
    %v1443 = vlaneseq
    %v1444 = vshrl.u32 %v1443, 7
    %v1445 = vsub.s32 0, %v1444
    %v1446 = vrot.slane %v1437, %v1445
    %v1447 = vlaneseq
    %v1448 = vshrl.u32 %v1447, 7
    %v1449 = vsub.s32 1, %v1448
    %v1450 = vrot.slane %v1437, %v1449
    %v1451 = vlaneseq
    %v1452 = vshrl.u32 %v1451, 7
    %v1453 = vsub.s32 2, %v1452
    %v1454 = vrot.slane %v1437, %v1453
    %v1459 = vlaneseq
    %v1460 = vshrl.u32 %v1459, 7
    %v1461 = vsub.s32 0, %v1460
    %v1462 = vrot.slane %v1441, %v1461
    %v1463 = vlaneseq
    %v1464 = vshrl.u32 %v1463, 7
    %v1465 = vsub.s32 1, %v1464
    %v1466 = vrot.slane %v1441, %v1465
    %v1467 = vlaneseq
    %v1468 = vshrl.u32 %v1467, 7
    %v1469 = vsub.s32 2, %v1468
    %v1470 = vrot.slane %v1441, %v1469
    %v1474 = vsel %vm180, %v1446, %v1462
    %v1475 = vsel %vm180, %v1450, %v1466
    %v1476 = vsel %vm180, %v1454, %v1470
    %v1477 = vsel %vm184, %v1474, 0.0
    %v1478 = vsel %vm184, %v1475, 0.0
    %v1479 = vsel %vm184, %v1476, 0.0
    %1480 = vmatprep.subr.mxu0 %v189
    %1481 = vmatpush1.msra.mxu0 %v188
    %1482 = vmatprep.subr.mxu0 %v192
    %1483 = vmatpush1.msra.mxu0 %v191
    %1484 = vmatprep.subr.mxu0 %v195
    %1485 = vmatpush1.msra.mxu0 %v194
    %1486 = vmatprep.subr.mxu0 %v198
    %1487 = vmatpush1.msra.mxu0 %v197
    %1488 = vmatprep.subr.mxu0 %v201
    %1489 = vmatpush1.msra.mxu0 %v200
    %1490 = vmatprep.subr.mxu0 %v204
    %1491 = vmatpush1.msra.mxu0 %v203
    %1492 = vmatprep.subr.mxu0 %v207
    %1493 = vmatpush1.msra.mxu0 %v206
    %1494 = vmatprep.subr.mxu0 %v210
    %1495 = vmatpush1.msra.mxu0 %v209
    %1496 = vmatprep.subr.mxu0 %v213
    %1497 = vmatpush1.msra.mxu0 %v212
    %1498 = vmatprep.subr.mxu0 %v216
    %1499 = vmatpush1.msra.mxu0 %v215
    %1500 = vmatprep.subr.mxu0 %v219
    %1501 = vmatpush1.msra.mxu0 %v218
    %1502 = vmatprep.subr.mxu0 %v222
    %1503 = vmatpush1.msra.mxu0 %v221
    %1504 = vmatprep.subr.mxu0 %v225
    %1505 = vmatpush1.msra.mxu0 %v224
    %1506 = vmatprep.subr.mxu0 %v228
    %1507 = vmatpush1.msra.mxu0 %v227
    %1508 = vmatprep.subr.mxu0 %v231
    %1509 = vmatpush1.msra.mxu0 %v230
    %1510 = vmatprep.subr.mxu0 %v234
    %1511 = vmatpush1.msra.mxu0 %v233
    %1512 = vmatprep.subr.mxu0 0.0
    %1513 = vmatpush1.msra.mxu0 0.0
    %1514 = vmatprep.subr.mxu0 0.0
    %1515 = vmatpush1.msra.mxu0 0.0
    %1516 = vmatprep.subr.mxu0 0.0
    %1517 = vmatpush1.msra.mxu0 0.0
    %1518 = vmatprep.subr.mxu0 0.0
    %1519 = vmatpush1.msra.mxu0 0.0
    %1520 = vmatprep.subr.mxu0 0.0
    %1521 = vmatpush1.msra.mxu0 0.0
    %1522 = vmatprep.subr.mxu0 0.0
    %1523 = vmatpush1.msra.mxu0 0.0
    %1524 = vmatprep.subr.mxu0 0.0
    %1525 = vmatpush1.msra.mxu0 0.0
    %1526 = vmatprep.subr.mxu0 0.0
    %1527 = vmatpush1.msra.mxu0 0.0
    %1528 = vmatprep.subr.mxu0 0.0
    %1529 = vmatpush1.msra.mxu0 0.0
    %1530 = vmatprep.subr.mxu0 0.0
    %1531 = vmatpush1.msra.mxu0 0.0
    %1532 = vmatprep.subr.mxu0 0.0
    %1533 = vmatpush1.msra.mxu0 0.0
    %1534 = vmatprep.subr.mxu0 0.0
    %1535 = vmatpush1.msra.mxu0 0.0
    %1536 = vmatprep.subr.mxu0 0.0
    %1537 = vmatpush1.msra.mxu0 0.0
    %1538 = vmatprep.subr.mxu0 0.0
    %1539 = vmatpush1.msra.mxu0 0.0
    %1540 = vmatprep.subr.mxu0 0.0
    %1541 = vmatpush1.msra.mxu0 0.0
    %1542 = vmatprep.subr.mxu0 0.0
    %1543 = vmatpush1.msra.mxu0 0.0
    %1544 = vmatprep.mubr.f32.mxu0 0.0
    %1545 = vmatmul.mubr.f32.gmra.mrb[0].mxu0 %v1269
    %v1546 = vpop.f32.mrb[0].mxu0
    %v1547 = vadd.f32 0.0, %v1546
    %v1548 = vpop.f32.mrb[0].mxu0
    %v1549 = vadd.f32 0.0, %v1548
    %1550 = vdwg.mxu0
    %1551 = vmatprep.subr.mxu0 0.0
    %1552 = vmatpush1.msra.mxu0 %v190
    %1553 = vmatprep.subr.mxu0 0.0
    %1554 = vmatpush1.msra.mxu0 %v193
    %1555 = vmatprep.subr.mxu0 0.0
    %1556 = vmatpush1.msra.mxu0 %v196
    %1557 = vmatprep.subr.mxu0 0.0
    %1558 = vmatpush1.msra.mxu0 %v199
    %1559 = vmatprep.subr.mxu0 0.0
    %1560 = vmatpush1.msra.mxu0 %v202
    %1561 = vmatprep.subr.mxu0 0.0
    %1562 = vmatpush1.msra.mxu0 %v205
    %1563 = vmatprep.subr.mxu0 0.0
    %1564 = vmatpush1.msra.mxu0 %v208
    %1565 = vmatprep.subr.mxu0 0.0
    %1566 = vmatpush1.msra.mxu0 %v211
    %1567 = vmatprep.subr.mxu0 0.0
    %1568 = vmatpush1.msra.mxu0 %v214
    %1569 = vmatprep.subr.mxu0 0.0
    %1570 = vmatpush1.msra.mxu0 %v217
    %1571 = vmatprep.subr.mxu0 0.0
    %1572 = vmatpush1.msra.mxu0 %v220
    %1573 = vmatprep.subr.mxu0 0.0
    %1574 = vmatpush1.msra.mxu0 %v223
    %1575 = vmatprep.subr.mxu0 0.0
    %1576 = vmatpush1.msra.mxu0 %v226
    %1577 = vmatprep.subr.mxu0 0.0
    %1578 = vmatpush1.msra.mxu0 %v229
    %1579 = vmatprep.subr.mxu0 0.0
    %1580 = vmatpush1.msra.mxu0 %v232
    %1581 = vmatprep.subr.mxu0 0.0
    %1582 = vmatpush1.msra.mxu0 %v235
    %1583 = vmatprep.subr.mxu0 0.0
    %1584 = vmatpush1.msra.mxu0 0.0
    %1585 = vmatprep.subr.mxu0 0.0
    %1586 = vmatpush1.msra.mxu0 0.0
    %1587 = vmatprep.subr.mxu0 0.0
    %1588 = vmatpush1.msra.mxu0 0.0
    %1589 = vmatprep.subr.mxu0 0.0
    %1590 = vmatpush1.msra.mxu0 0.0
    %1591 = vmatprep.subr.mxu0 0.0
    %1592 = vmatpush1.msra.mxu0 0.0
    %1593 = vmatprep.subr.mxu0 0.0
    %1594 = vmatpush1.msra.mxu0 0.0
    %1595 = vmatprep.subr.mxu0 0.0
    %1596 = vmatpush1.msra.mxu0 0.0
    %1597 = vmatprep.subr.mxu0 0.0
    %1598 = vmatpush1.msra.mxu0 0.0
    %1599 = vmatprep.subr.mxu0 0.0
    %1600 = vmatpush1.msra.mxu0 0.0
    %1601 = vmatprep.subr.mxu0 0.0
    %1602 = vmatpush1.msra.mxu0 0.0
    %1603 = vmatprep.subr.mxu0 0.0
    %1604 = vmatpush1.msra.mxu0 0.0
    %1605 = vmatprep.subr.mxu0 0.0
    %1606 = vmatpush1.msra.mxu0 0.0
    %1607 = vmatprep.subr.mxu0 0.0
    %1608 = vmatpush1.msra.mxu0 0.0
    %1609 = vmatprep.subr.mxu0 0.0
    %1610 = vmatpush1.msra.mxu0 0.0
    %1611 = vmatprep.subr.mxu0 0.0
    %1612 = vmatpush1.msra.mxu0 0.0
    %1613 = vmatprep.subr.mxu0 0.0
    %1614 = vmatpush1.msra.mxu0 0.0
    %1615 = vmatprep.mubr.f32.mxu0 0.0
    %1616 = vmatmul.mubr.f32.gmra.mrb[0].mxu0 %v1269
    %v1617 = vpop.f32.mrb[0].mxu0
    %v1618 = vadd.f32 0.0, %v1617
    %v1619 = vpop.f32.mrb[0].mxu0
    %1620 = vdwg.mxu0
    %v1621 = vadd.f32 %v1477, %v1547
    %v1622 = vadd.f32 %v1478, %v1549
    %v1623 = vxor.u32 %v1621, 2147483648
    %v1624 = vxor.u32 %v1622, 2147483648
    %v1625 = vmul.f32 %v1623, 1.442695
    %v1626 = vpow.pop %v1625
    %v1627 = vmul.f32 %v1624, 1.442695
    %v1628 = vpow.pop %v1627
    %v1629 = vadd.f32 %v1626, 1.0
    %v1630 = vadd.f32 %v1628, 1.0
    %v1631 = vrcp.pop %v1629
    %v1632 = vmul.f32 1.0, %v1631
    %v1633 = vrcp.pop %v1630
    %v1634 = vmul.f32 1.0, %v1633
    %v1635 = vadd.f32 %v1618, %v112
    %v1636 = vmul.f32 %v1632, %v1635
    %v1637 = vadd.f32 %v1479, %v1636
    %v1638 = vtanh.pop %v1637
    %v1639 = vsub.f32 %v1269, %v1638
    %v1640 = vmul.f32 %v1634, %v1639
    %v1641 = vadd.f32 %v1638, %v1640
    %1642 = vmatprep.subr.mxu0 %v399
    %1643 = vmatpush1.msra.mxu0 %v398
    %1644 = vmatprep.subr.mxu0 %v403
    %1645 = vmatpush1.msra.mxu0 %v402
    %1646 = vmatprep.subr.mxu0 %v407
    %1647 = vmatpush1.msra.mxu0 %v406
    %1648 = vmatprep.subr.mxu0 %v411
    %1649 = vmatpush1.msra.mxu0 %v410
    %1650 = vmatprep.subr.mxu0 %v415
    %1651 = vmatpush1.msra.mxu0 %v414
    %1652 = vmatprep.subr.mxu0 %v419
    %1653 = vmatpush1.msra.mxu0 %v418
    %1654 = vmatprep.subr.mxu0 %v423
    %1655 = vmatpush1.msra.mxu0 %v422
    %1656 = vmatprep.subr.mxu0 %v427
    %1657 = vmatpush1.msra.mxu0 %v426
    %1658 = vmatprep.subr.mxu0 %v431
    %1659 = vmatpush1.msra.mxu0 %v430
    %1660 = vmatprep.subr.mxu0 %v435
    %1661 = vmatpush1.msra.mxu0 %v434
    %1662 = vmatprep.subr.mxu0 %v439
    %1663 = vmatpush1.msra.mxu0 %v438
    %1664 = vmatprep.subr.mxu0 %v443
    %1665 = vmatpush1.msra.mxu0 %v442
    %1666 = vmatprep.subr.mxu0 %v447
    %1667 = vmatpush1.msra.mxu0 %v446
    %1668 = vmatprep.subr.mxu0 %v451
    %1669 = vmatpush1.msra.mxu0 %v450
    %1670 = vmatprep.subr.mxu0 %v455
    %1671 = vmatpush1.msra.mxu0 %v454
    %1672 = vmatprep.subr.mxu0 %v459
    %1673 = vmatpush1.msra.mxu0 %v458
    %1674 = vmatprep.subr.mxu0 %v463
    %1675 = vmatpush1.msra.mxu0 %v462
    %1676 = vmatprep.subr.mxu0 %v467
    %1677 = vmatpush1.msra.mxu0 %v466
    %1678 = vmatprep.subr.mxu0 %v471
    %1679 = vmatpush1.msra.mxu0 %v470
    %1680 = vmatprep.subr.mxu0 %v475
    %1681 = vmatpush1.msra.mxu0 %v474
    %1682 = vmatprep.subr.mxu0 %v479
    %1683 = vmatpush1.msra.mxu0 %v478
    %1684 = vmatprep.subr.mxu0 %v483
    %1685 = vmatpush1.msra.mxu0 %v482
    %1686 = vmatprep.subr.mxu0 %v487
    %1687 = vmatpush1.msra.mxu0 %v486
    %1688 = vmatprep.subr.mxu0 %v491
    %1689 = vmatpush1.msra.mxu0 %v490
    %1690 = vmatprep.subr.mxu0 %v495
    %1691 = vmatpush1.msra.mxu0 %v494
    %1692 = vmatprep.subr.mxu0 %v499
    %1693 = vmatpush1.msra.mxu0 %v498
    %1694 = vmatprep.subr.mxu0 %v503
    %1695 = vmatpush1.msra.mxu0 %v502
    %1696 = vmatprep.subr.mxu0 %v507
    %1697 = vmatpush1.msra.mxu0 %v506
    %1698 = vmatprep.subr.mxu0 %v511
    %1699 = vmatpush1.msra.mxu0 %v510
    %1700 = vmatprep.subr.mxu0 %v515
    %1701 = vmatpush1.msra.mxu0 %v514
    %1702 = vmatprep.subr.mxu0 %v519
    %1703 = vmatpush1.msra.mxu0 %v518
    %1704 = vmatprep.subr.mxu0 %v523
    %1705 = vmatpush1.msra.mxu0 %v522
    %1706 = vmatprep.mubr.f32.mxu0 %v1433
    %1707 = vmatmul.mubr.f32.gmra.mrb[0].mxu0 %v1641
    %v1708 = vpop.f32.mrb[0].mxu0
    %v1709 = vadd.f32 0.0, %v1708
    %v1710 = vpop.f32.mrb[0].mxu0
    %v1711 = vadd.f32 0.0, %v1710
    %1712 = vdwg.mxu0
    %1713 = vmatprep.subr.mxu0 %v401
    %1714 = vmatpush1.msra.mxu0 %v400
    %1715 = vmatprep.subr.mxu0 %v405
    %1716 = vmatpush1.msra.mxu0 %v404
    %1717 = vmatprep.subr.mxu0 %v409
    %1718 = vmatpush1.msra.mxu0 %v408
    %1719 = vmatprep.subr.mxu0 %v413
    %1720 = vmatpush1.msra.mxu0 %v412
    %1721 = vmatprep.subr.mxu0 %v417
    %1722 = vmatpush1.msra.mxu0 %v416
    %1723 = vmatprep.subr.mxu0 %v421
    %1724 = vmatpush1.msra.mxu0 %v420
    %1725 = vmatprep.subr.mxu0 %v425
    %1726 = vmatpush1.msra.mxu0 %v424
    %1727 = vmatprep.subr.mxu0 %v429
    %1728 = vmatpush1.msra.mxu0 %v428
    %1729 = vmatprep.subr.mxu0 %v433
    %1730 = vmatpush1.msra.mxu0 %v432
    %1731 = vmatprep.subr.mxu0 %v437
    %1732 = vmatpush1.msra.mxu0 %v436
    %1733 = vmatprep.subr.mxu0 %v441
    %1734 = vmatpush1.msra.mxu0 %v440
    %1735 = vmatprep.subr.mxu0 %v445
    %1736 = vmatpush1.msra.mxu0 %v444
    %1737 = vmatprep.subr.mxu0 %v449
    %1738 = vmatpush1.msra.mxu0 %v448
    %1739 = vmatprep.subr.mxu0 %v453
    %1740 = vmatpush1.msra.mxu0 %v452
    %1741 = vmatprep.subr.mxu0 %v457
    %1742 = vmatpush1.msra.mxu0 %v456
    %1743 = vmatprep.subr.mxu0 %v461
    %1744 = vmatpush1.msra.mxu0 %v460
    %1745 = vmatprep.subr.mxu0 %v465
    %1746 = vmatpush1.msra.mxu0 %v464
    %1747 = vmatprep.subr.mxu0 %v469
    %1748 = vmatpush1.msra.mxu0 %v468
    %1749 = vmatprep.subr.mxu0 %v473
    %1750 = vmatpush1.msra.mxu0 %v472
    %1751 = vmatprep.subr.mxu0 %v477
    %1752 = vmatpush1.msra.mxu0 %v476
    %1753 = vmatprep.subr.mxu0 %v481
    %1754 = vmatpush1.msra.mxu0 %v480
    %1755 = vmatprep.subr.mxu0 %v485
    %1756 = vmatpush1.msra.mxu0 %v484
    %1757 = vmatprep.subr.mxu0 %v489
    %1758 = vmatpush1.msra.mxu0 %v488
    %1759 = vmatprep.subr.mxu0 %v493
    %1760 = vmatpush1.msra.mxu0 %v492
    %1761 = vmatprep.subr.mxu0 %v497
    %1762 = vmatpush1.msra.mxu0 %v496
    %1763 = vmatprep.subr.mxu0 %v501
    %1764 = vmatpush1.msra.mxu0 %v500
    %1765 = vmatprep.subr.mxu0 %v505
    %1766 = vmatpush1.msra.mxu0 %v504
    %1767 = vmatprep.subr.mxu0 %v509
    %1768 = vmatpush1.msra.mxu0 %v508
    %1769 = vmatprep.subr.mxu0 %v513
    %1770 = vmatpush1.msra.mxu0 %v512
    %1771 = vmatprep.subr.mxu0 %v517
    %1772 = vmatpush1.msra.mxu0 %v516
    %1773 = vmatprep.subr.mxu0 %v521
    %1774 = vmatpush1.msra.mxu0 %v520
    %1775 = vmatprep.subr.mxu0 %v525
    %1776 = vmatpush1.msra.mxu0 %v524
    %1777 = vmatprep.mubr.f32.mxu0 %v1433
    %1778 = vmatmul.mubr.f32.gmra.mrb[0].mxu0 %v1641
    %v1779 = vpop.f32.mrb[0].mxu0
    %v1780 = vadd.f32 0.0, %v1779
    %v1781 = vpop.f32.mrb[0].mxu0
    %v1782 = vadd.f32 0.0, %v1781
    %1783 = vdwg.mxu0
    %v1784 = vadd.f32 %v1709, %v119
    %v1785 = vadd.f32 %v1711, %v123
    %v1786 = vxor.u32 %v1784, 2147483648
    %v1787 = vxor.u32 %v1785, 2147483648
    %v1788 = vmul.f32 %v1786, 1.442695
    %v1789 = vpow.pop %v1788
    %v1790 = vmul.f32 %v1787, 1.442695
    %v1791 = vpow.pop %v1790
    %v1792 = vadd.f32 %v1789, 1.0
    %v1793 = vadd.f32 %v1791, 1.0
    %v1794 = vrcp.pop %v1792
    %v1795 = vmul.f32 1.0, %v1794
    %v1796 = vrcp.pop %v1793
    %v1797 = vmul.f32 1.0, %v1796
    %v1798 = vadd.f32 %v1780, %v131
    %v1799 = vadd.f32 %v1782, %v138
    %v1800 = vmul.f32 %v1795, %v1799
    %v1801 = vadd.f32 %v1798, %v1800
    %v1802 = vtanh.pop %v1801
    %v1803 = vsub.f32 %v1433, %v1802
    %v1804 = vmul.f32 %v1797, %v1803
    %v1805 = vadd.f32 %v1802, %v1804
    %s1806 = sld [smem:[#allocation2 + $0x8]]
    %s1807 = smul.u32 %s1806, 3
    %s1808 = scalar_lea.vmem [#allocation5], %s1807
    %v1809 = vld [vmem:[%s1808] sm:$0x7]
    %s1810 = sld [smem:[#allocation2 + $0x9]]
    %s1811 = smul.u32 %s1810, 3
    %s1812 = scalar_lea.vmem [#allocation5], %s1811
    %v1813 = vld [vmem:[%s1812] sm:$0x7]
    %v1815 = vlaneseq
    %v1816 = vshrl.u32 %v1815, 7
    %v1817 = vsub.s32 0, %v1816
    %v1818 = vrot.slane %v1809, %v1817
    %v1819 = vlaneseq
    %v1820 = vshrl.u32 %v1819, 7
    %v1821 = vsub.s32 1, %v1820
    %v1822 = vrot.slane %v1809, %v1821
    %v1823 = vlaneseq
    %v1824 = vshrl.u32 %v1823, 7
    %v1825 = vsub.s32 2, %v1824
    %v1826 = vrot.slane %v1809, %v1825
    %v1831 = vlaneseq
    %v1832 = vshrl.u32 %v1831, 7
    %v1833 = vsub.s32 0, %v1832
    %v1834 = vrot.slane %v1813, %v1833
    %v1835 = vlaneseq
    %v1836 = vshrl.u32 %v1835, 7
    %v1837 = vsub.s32 1, %v1836
    %v1838 = vrot.slane %v1813, %v1837
    %v1839 = vlaneseq
    %v1840 = vshrl.u32 %v1839, 7
    %v1841 = vsub.s32 2, %v1840
    %v1842 = vrot.slane %v1813, %v1841
    %v1846 = vsel %vm180, %v1818, %v1834
    %v1847 = vsel %vm180, %v1822, %v1838
    %v1848 = vsel %vm180, %v1826, %v1842
    %v1849 = vsel %vm184, %v1846, 0.0
    %v1850 = vsel %vm184, %v1847, 0.0
    %v1851 = vsel %vm184, %v1848, 0.0
    %1852 = vmatprep.subr.mxu0 %v189
    %1853 = vmatpush1.msra.mxu0 %v188
    %1854 = vmatprep.subr.mxu0 %v192
    %1855 = vmatpush1.msra.mxu0 %v191
    %1856 = vmatprep.subr.mxu0 %v195
    %1857 = vmatpush1.msra.mxu0 %v194
    %1858 = vmatprep.subr.mxu0 %v198
    %1859 = vmatpush1.msra.mxu0 %v197
    %1860 = vmatprep.subr.mxu0 %v201
    %1861 = vmatpush1.msra.mxu0 %v200
    %1862 = vmatprep.subr.mxu0 %v204
    %1863 = vmatpush1.msra.mxu0 %v203
    %1864 = vmatprep.subr.mxu0 %v207
    %1865 = vmatpush1.msra.mxu0 %v206
    %1866 = vmatprep.subr.mxu0 %v210
    %1867 = vmatpush1.msra.mxu0 %v209
    %1868 = vmatprep.subr.mxu0 %v213
    %1869 = vmatpush1.msra.mxu0 %v212
    %1870 = vmatprep.subr.mxu0 %v216
    %1871 = vmatpush1.msra.mxu0 %v215
    %1872 = vmatprep.subr.mxu0 %v219
    %1873 = vmatpush1.msra.mxu0 %v218
    %1874 = vmatprep.subr.mxu0 %v222
    %1875 = vmatpush1.msra.mxu0 %v221
    %1876 = vmatprep.subr.mxu0 %v225
    %1877 = vmatpush1.msra.mxu0 %v224
    %1878 = vmatprep.subr.mxu0 %v228
    %1879 = vmatpush1.msra.mxu0 %v227
    %1880 = vmatprep.subr.mxu0 %v231
    %1881 = vmatpush1.msra.mxu0 %v230
    %1882 = vmatprep.subr.mxu0 %v234
    %1883 = vmatpush1.msra.mxu0 %v233
    %1884 = vmatprep.subr.mxu0 0.0
    %1885 = vmatpush1.msra.mxu0 0.0
    %1886 = vmatprep.subr.mxu0 0.0
    %1887 = vmatpush1.msra.mxu0 0.0
    %1888 = vmatprep.subr.mxu0 0.0
    %1889 = vmatpush1.msra.mxu0 0.0
    %1890 = vmatprep.subr.mxu0 0.0
    %1891 = vmatpush1.msra.mxu0 0.0
    %1892 = vmatprep.subr.mxu0 0.0
    %1893 = vmatpush1.msra.mxu0 0.0
    %1894 = vmatprep.subr.mxu0 0.0
    %1895 = vmatpush1.msra.mxu0 0.0
    %1896 = vmatprep.subr.mxu0 0.0
    %1897 = vmatpush1.msra.mxu0 0.0
    %1898 = vmatprep.subr.mxu0 0.0
    %1899 = vmatpush1.msra.mxu0 0.0
    %1900 = vmatprep.subr.mxu0 0.0
    %1901 = vmatpush1.msra.mxu0 0.0
    %1902 = vmatprep.subr.mxu0 0.0
    %1903 = vmatpush1.msra.mxu0 0.0
    %1904 = vmatprep.subr.mxu0 0.0
    %1905 = vmatpush1.msra.mxu0 0.0
    %1906 = vmatprep.subr.mxu0 0.0
    %1907 = vmatpush1.msra.mxu0 0.0
    %1908 = vmatprep.subr.mxu0 0.0
    %1909 = vmatpush1.msra.mxu0 0.0
    %1910 = vmatprep.subr.mxu0 0.0
    %1911 = vmatpush1.msra.mxu0 0.0
    %1912 = vmatprep.subr.mxu0 0.0
    %1913 = vmatpush1.msra.mxu0 0.0
    %1914 = vmatprep.subr.mxu0 0.0
    %1915 = vmatpush1.msra.mxu0 0.0
    %1916 = vmatprep.mubr.f32.mxu0 0.0
    %1917 = vmatmul.mubr.f32.gmra.mrb[0].mxu0 %v1641
    %v1918 = vpop.f32.mrb[0].mxu0
    %v1919 = vadd.f32 0.0, %v1918
    %v1920 = vpop.f32.mrb[0].mxu0
    %v1921 = vadd.f32 0.0, %v1920
    %1922 = vdwg.mxu0
    %1923 = vmatprep.subr.mxu0 0.0
    %1924 = vmatpush1.msra.mxu0 %v190
    %1925 = vmatprep.subr.mxu0 0.0
    %1926 = vmatpush1.msra.mxu0 %v193
    %1927 = vmatprep.subr.mxu0 0.0
    %1928 = vmatpush1.msra.mxu0 %v196
    %1929 = vmatprep.subr.mxu0 0.0
    %1930 = vmatpush1.msra.mxu0 %v199
    %1931 = vmatprep.subr.mxu0 0.0
    %1932 = vmatpush1.msra.mxu0 %v202
    %1933 = vmatprep.subr.mxu0 0.0
    %1934 = vmatpush1.msra.mxu0 %v205
    %1935 = vmatprep.subr.mxu0 0.0
    %1936 = vmatpush1.msra.mxu0 %v208
    %1937 = vmatprep.subr.mxu0 0.0
    %1938 = vmatpush1.msra.mxu0 %v211
    %1939 = vmatprep.subr.mxu0 0.0
    %1940 = vmatpush1.msra.mxu0 %v214
    %1941 = vmatprep.subr.mxu0 0.0
    %1942 = vmatpush1.msra.mxu0 %v217
    %1943 = vmatprep.subr.mxu0 0.0
    %1944 = vmatpush1.msra.mxu0 %v220
    %1945 = vmatprep.subr.mxu0 0.0
    %1946 = vmatpush1.msra.mxu0 %v223
    %1947 = vmatprep.subr.mxu0 0.0
    %1948 = vmatpush1.msra.mxu0 %v226
    %1949 = vmatprep.subr.mxu0 0.0
    %1950 = vmatpush1.msra.mxu0 %v229
    %1951 = vmatprep.subr.mxu0 0.0
    %1952 = vmatpush1.msra.mxu0 %v232
    %1953 = vmatprep.subr.mxu0 0.0
    %1954 = vmatpush1.msra.mxu0 %v235
    %1955 = vmatprep.subr.mxu0 0.0
    %1956 = vmatpush1.msra.mxu0 0.0
    %1957 = vmatprep.subr.mxu0 0.0
    %1958 = vmatpush1.msra.mxu0 0.0
    %1959 = vmatprep.subr.mxu0 0.0
    %1960 = vmatpush1.msra.mxu0 0.0
    %1961 = vmatprep.subr.mxu0 0.0
    %1962 = vmatpush1.msra.mxu0 0.0
    %1963 = vmatprep.subr.mxu0 0.0
    %1964 = vmatpush1.msra.mxu0 0.0
    %1965 = vmatprep.subr.mxu0 0.0
    %1966 = vmatpush1.msra.mxu0 0.0
    %1967 = vmatprep.subr.mxu0 0.0
    %1968 = vmatpush1.msra.mxu0 0.0
    %1969 = vmatprep.subr.mxu0 0.0
    %1970 = vmatpush1.msra.mxu0 0.0
    %1971 = vmatprep.subr.mxu0 0.0
    %1972 = vmatpush1.msra.mxu0 0.0
    %1973 = vmatprep.subr.mxu0 0.0
    %1974 = vmatpush1.msra.mxu0 0.0
    %1975 = vmatprep.subr.mxu0 0.0
    %1976 = vmatpush1.msra.mxu0 0.0
    %1977 = vmatprep.subr.mxu0 0.0
    %1978 = vmatpush1.msra.mxu0 0.0
    %1979 = vmatprep.subr.mxu0 0.0
    %1980 = vmatpush1.msra.mxu0 0.0
    %1981 = vmatprep.subr.mxu0 0.0
    %1982 = vmatpush1.msra.mxu0 0.0
    %1983 = vmatprep.subr.mxu0 0.0
    %1984 = vmatpush1.msra.mxu0 0.0
    %1985 = vmatprep.subr.mxu0 0.0
    %1986 = vmatpush1.msra.mxu0 0.0
    %1987 = vmatprep.mubr.f32.mxu0 0.0
    %1988 = vmatmul.mubr.f32.gmra.mrb[0].mxu0 %v1641
    %v1989 = vpop.f32.mrb[0].mxu0
    %v1990 = vadd.f32 0.0, %v1989
    %v1991 = vpop.f32.mrb[0].mxu0
    %1992 = vdwg.mxu0
    %v1993 = vadd.f32 %v1849, %v1919
    %v1994 = vadd.f32 %v1850, %v1921
    %v1995 = vxor.u32 %v1993, 2147483648
    %v1996 = vxor.u32 %v1994, 2147483648
    %v1997 = vmul.f32 %v1995, 1.442695
    %v1998 = vpow.pop %v1997
    %v1999 = vmul.f32 %v1996, 1.442695
    %v2000 = vpow.pop %v1999
    %v2001 = vadd.f32 %v1998, 1.0
    %v2002 = vadd.f32 %v2000, 1.0
    %v2003 = vrcp.pop %v2001
    %v2004 = vmul.f32 1.0, %v2003
    %v2005 = vrcp.pop %v2002
    %v2006 = vmul.f32 1.0, %v2005
    %v2007 = vadd.f32 %v1990, %v112
    %v2008 = vmul.f32 %v2004, %v2007
    %v2009 = vadd.f32 %v1851, %v2008
    %v2010 = vtanh.pop %v2009
    %v2011 = vsub.f32 %v1641, %v2010
    %v2012 = vmul.f32 %v2006, %v2011
    %v2013 = vadd.f32 %v2010, %v2012
    %2014 = vmatprep.subr.mxu0 %v399
    %2015 = vmatpush1.msra.mxu0 %v398
    %2016 = vmatprep.subr.mxu0 %v403
    %2017 = vmatpush1.msra.mxu0 %v402
    %2018 = vmatprep.subr.mxu0 %v407
    %2019 = vmatpush1.msra.mxu0 %v406
    %2020 = vmatprep.subr.mxu0 %v411
    %2021 = vmatpush1.msra.mxu0 %v410
    %2022 = vmatprep.subr.mxu0 %v415
    %2023 = vmatpush1.msra.mxu0 %v414
    %2024 = vmatprep.subr.mxu0 %v419
    %2025 = vmatpush1.msra.mxu0 %v418
    %2026 = vmatprep.subr.mxu0 %v423
    %2027 = vmatpush1.msra.mxu0 %v422
    %2028 = vmatprep.subr.mxu0 %v427
    %2029 = vmatpush1.msra.mxu0 %v426
    %2030 = vmatprep.subr.mxu0 %v431
    %2031 = vmatpush1.msra.mxu0 %v430
    %2032 = vmatprep.subr.mxu0 %v435
    %2033 = vmatpush1.msra.mxu0 %v434
    %2034 = vmatprep.subr.mxu0 %v439
    %2035 = vmatpush1.msra.mxu0 %v438
    %2036 = vmatprep.subr.mxu0 %v443
    %2037 = vmatpush1.msra.mxu0 %v442
    %2038 = vmatprep.subr.mxu0 %v447
    %2039 = vmatpush1.msra.mxu0 %v446
    %2040 = vmatprep.subr.mxu0 %v451
    %2041 = vmatpush1.msra.mxu0 %v450
    %2042 = vmatprep.subr.mxu0 %v455
    %2043 = vmatpush1.msra.mxu0 %v454
    %2044 = vmatprep.subr.mxu0 %v459
    %2045 = vmatpush1.msra.mxu0 %v458
    %2046 = vmatprep.subr.mxu0 %v463
    %2047 = vmatpush1.msra.mxu0 %v462
    %2048 = vmatprep.subr.mxu0 %v467
    %2049 = vmatpush1.msra.mxu0 %v466
    %2050 = vmatprep.subr.mxu0 %v471
    %2051 = vmatpush1.msra.mxu0 %v470
    %2052 = vmatprep.subr.mxu0 %v475
    %2053 = vmatpush1.msra.mxu0 %v474
    %2054 = vmatprep.subr.mxu0 %v479
    %2055 = vmatpush1.msra.mxu0 %v478
    %2056 = vmatprep.subr.mxu0 %v483
    %2057 = vmatpush1.msra.mxu0 %v482
    %2058 = vmatprep.subr.mxu0 %v487
    %2059 = vmatpush1.msra.mxu0 %v486
    %2060 = vmatprep.subr.mxu0 %v491
    %2061 = vmatpush1.msra.mxu0 %v490
    %2062 = vmatprep.subr.mxu0 %v495
    %2063 = vmatpush1.msra.mxu0 %v494
    %2064 = vmatprep.subr.mxu0 %v499
    %2065 = vmatpush1.msra.mxu0 %v498
    %2066 = vmatprep.subr.mxu0 %v503
    %2067 = vmatpush1.msra.mxu0 %v502
    %2068 = vmatprep.subr.mxu0 %v507
    %2069 = vmatpush1.msra.mxu0 %v506
    %2070 = vmatprep.subr.mxu0 %v511
    %2071 = vmatpush1.msra.mxu0 %v510
    %2072 = vmatprep.subr.mxu0 %v515
    %2073 = vmatpush1.msra.mxu0 %v514
    %2074 = vmatprep.subr.mxu0 %v519
    %2075 = vmatpush1.msra.mxu0 %v518
    %2076 = vmatprep.subr.mxu0 %v523
    %2077 = vmatpush1.msra.mxu0 %v522
    %2078 = vmatprep.mubr.f32.mxu0 %v1805
    %2079 = vmatmul.mubr.f32.gmra.mrb[0].mxu0 %v2013
    %v2080 = vpop.f32.mrb[0].mxu0
    %v2081 = vadd.f32 0.0, %v2080
    %v2082 = vpop.f32.mrb[0].mxu0
    %v2083 = vadd.f32 0.0, %v2082
    %2084 = vdwg.mxu0
    %2085 = vmatprep.subr.mxu0 %v401
    %2086 = vmatpush1.msra.mxu0 %v400
    %2087 = vmatprep.subr.mxu0 %v405
    %2088 = vmatpush1.msra.mxu0 %v404
    %2089 = vmatprep.subr.mxu0 %v409
    %2090 = vmatpush1.msra.mxu0 %v408
    %2091 = vmatprep.subr.mxu0 %v413
    %2092 = vmatpush1.msra.mxu0 %v412
    %2093 = vmatprep.subr.mxu0 %v417
    %2094 = vmatpush1.msra.mxu0 %v416
    %2095 = vmatprep.subr.mxu0 %v421
    %2096 = vmatpush1.msra.mxu0 %v420
    %2097 = vmatprep.subr.mxu0 %v425
    %2098 = vmatpush1.msra.mxu0 %v424
    %2099 = vmatprep.subr.mxu0 %v429
    %2100 = vmatpush1.msra.mxu0 %v428
    %2101 = vmatprep.subr.mxu0 %v433
    %2102 = vmatpush1.msra.mxu0 %v432
    %2103 = vmatprep.subr.mxu0 %v437
    %2104 = vmatpush1.msra.mxu0 %v436
    %2105 = vmatprep.subr.mxu0 %v441
    %2106 = vmatpush1.msra.mxu0 %v440
    %2107 = vmatprep.subr.mxu0 %v445
    %2108 = vmatpush1.msra.mxu0 %v444
    %2109 = vmatprep.subr.mxu0 %v449
    %2110 = vmatpush1.msra.mxu0 %v448
    %2111 = vmatprep.subr.mxu0 %v453
    %2112 = vmatpush1.msra.mxu0 %v452
    %2113 = vmatprep.subr.mxu0 %v457
    %2114 = vmatpush1.msra.mxu0 %v456
    %2115 = vmatprep.subr.mxu0 %v461
    %2116 = vmatpush1.msra.mxu0 %v460
    %2117 = vmatprep.subr.mxu0 %v465
    %2118 = vmatpush1.msra.mxu0 %v464
    %2119 = vmatprep.subr.mxu0 %v469
    %2120 = vmatpush1.msra.mxu0 %v468
    %2121 = vmatprep.subr.mxu0 %v473
    %2122 = vmatpush1.msra.mxu0 %v472
    %2123 = vmatprep.subr.mxu0 %v477
    %2124 = vmatpush1.msra.mxu0 %v476
    %2125 = vmatprep.subr.mxu0 %v481
    %2126 = vmatpush1.msra.mxu0 %v480
    %2127 = vmatprep.subr.mxu0 %v485
    %2128 = vmatpush1.msra.mxu0 %v484
    %2129 = vmatprep.subr.mxu0 %v489
    %2130 = vmatpush1.msra.mxu0 %v488
    %2131 = vmatprep.subr.mxu0 %v493
    %2132 = vmatpush1.msra.mxu0 %v492
    %2133 = vmatprep.subr.mxu0 %v497
    %2134 = vmatpush1.msra.mxu0 %v496
    %2135 = vmatprep.subr.mxu0 %v501
    %2136 = vmatpush1.msra.mxu0 %v500
    %2137 = vmatprep.subr.mxu0 %v505
    %2138 = vmatpush1.msra.mxu0 %v504
    %2139 = vmatprep.subr.mxu0 %v509
    %2140 = vmatpush1.msra.mxu0 %v508
    %2141 = vmatprep.subr.mxu0 %v513
    %2142 = vmatpush1.msra.mxu0 %v512
    %2143 = vmatprep.subr.mxu0 %v517
    %2144 = vmatpush1.msra.mxu0 %v516
    %2145 = vmatprep.subr.mxu0 %v521
    %2146 = vmatpush1.msra.mxu0 %v520
    %2147 = vmatprep.subr.mxu0 %v525
    %2148 = vmatpush1.msra.mxu0 %v524
    %2149 = vmatprep.mubr.f32.mxu0 %v1805
    %2150 = vmatmul.mubr.f32.gmra.mrb[0].mxu0 %v2013
    %v2151 = vpop.f32.mrb[0].mxu0
    %v2152 = vadd.f32 0.0, %v2151
    %v2153 = vpop.f32.mrb[0].mxu0
    %v2154 = vadd.f32 0.0, %v2153
    %2155 = vdwg.mxu0
    %v2156 = vadd.f32 %v2081, %v119
    %v2157 = vadd.f32 %v2083, %v123
    %v2158 = vxor.u32 %v2156, 2147483648
    %v2159 = vxor.u32 %v2157, 2147483648
    %v2160 = vmul.f32 %v2158, 1.442695
    %v2161 = vpow.pop %v2160
    %v2162 = vmul.f32 %v2159, 1.442695
    %v2163 = vpow.pop %v2162
    %v2164 = vadd.f32 %v2161, 1.0
    %v2165 = vadd.f32 %v2163, 1.0
    %v2166 = vrcp.pop %v2164
    %v2167 = vmul.f32 1.0, %v2166
    %v2168 = vrcp.pop %v2165
    %v2169 = vmul.f32 1.0, %v2168
    %v2170 = vadd.f32 %v2152, %v131
    %v2171 = vadd.f32 %v2154, %v138
    %v2172 = vmul.f32 %v2167, %v2171
    %v2173 = vadd.f32 %v2170, %v2172
    %v2174 = vtanh.pop %v2173
    %v2175 = vsub.f32 %v1805, %v2174
    %v2176 = vmul.f32 %v2169, %v2175
    %v2177 = vadd.f32 %v2174, %v2176
    %s2178 = sld [smem:[#allocation2 + $0xa]]
    %s2179 = smul.u32 %s2178, 3
    %s2180 = scalar_lea.vmem [#allocation5], %s2179
    %v2181 = vld [vmem:[%s2180] sm:$0x7]
    %s2182 = sld [smem:[#allocation2 + $0xb]]
    %s2183 = smul.u32 %s2182, 3
    %s2184 = scalar_lea.vmem [#allocation5], %s2183
    %v2185 = vld [vmem:[%s2184] sm:$0x7]
    %v2187 = vlaneseq
    %v2188 = vshrl.u32 %v2187, 7
    %v2189 = vsub.s32 0, %v2188
    %v2190 = vrot.slane %v2181, %v2189
    %v2191 = vlaneseq
    %v2192 = vshrl.u32 %v2191, 7
    %v2193 = vsub.s32 1, %v2192
    %v2194 = vrot.slane %v2181, %v2193
    %v2195 = vlaneseq
    %v2196 = vshrl.u32 %v2195, 7
    %v2197 = vsub.s32 2, %v2196
    %v2198 = vrot.slane %v2181, %v2197
    %v2203 = vlaneseq
    %v2204 = vshrl.u32 %v2203, 7
    %v2205 = vsub.s32 0, %v2204
    %v2206 = vrot.slane %v2185, %v2205
    %v2207 = vlaneseq
    %v2208 = vshrl.u32 %v2207, 7
    %v2209 = vsub.s32 1, %v2208
    %v2210 = vrot.slane %v2185, %v2209
    %v2211 = vlaneseq
    %v2212 = vshrl.u32 %v2211, 7
    %v2213 = vsub.s32 2, %v2212
    %v2214 = vrot.slane %v2185, %v2213
    %v2218 = vsel %vm180, %v2190, %v2206
    %v2219 = vsel %vm180, %v2194, %v2210
    %v2220 = vsel %vm180, %v2198, %v2214
    %v2221 = vsel %vm184, %v2218, 0.0
    %v2222 = vsel %vm184, %v2219, 0.0
    %v2223 = vsel %vm184, %v2220, 0.0
    %2224 = vmatprep.subr.mxu0 %v189
    %2225 = vmatpush1.msra.mxu0 %v188
    %2226 = vmatprep.subr.mxu0 %v192
    %2227 = vmatpush1.msra.mxu0 %v191
    %2228 = vmatprep.subr.mxu0 %v195
    %2229 = vmatpush1.msra.mxu0 %v194
    %2230 = vmatprep.subr.mxu0 %v198
    %2231 = vmatpush1.msra.mxu0 %v197
    %2232 = vmatprep.subr.mxu0 %v201
    %2233 = vmatpush1.msra.mxu0 %v200
    %2234 = vmatprep.subr.mxu0 %v204
    %2235 = vmatpush1.msra.mxu0 %v203
    %2236 = vmatprep.subr.mxu0 %v207
    %2237 = vmatpush1.msra.mxu0 %v206
    %2238 = vmatprep.subr.mxu0 %v210
    %2239 = vmatpush1.msra.mxu0 %v209
    %2240 = vmatprep.subr.mxu0 %v213
    %2241 = vmatpush1.msra.mxu0 %v212
    %2242 = vmatprep.subr.mxu0 %v216
    %2243 = vmatpush1.msra.mxu0 %v215
    %2244 = vmatprep.subr.mxu0 %v219
    %2245 = vmatpush1.msra.mxu0 %v218
    %2246 = vmatprep.subr.mxu0 %v222
    %2247 = vmatpush1.msra.mxu0 %v221
    %2248 = vmatprep.subr.mxu0 %v225
    %2249 = vmatpush1.msra.mxu0 %v224
    %2250 = vmatprep.subr.mxu0 %v228
    %2251 = vmatpush1.msra.mxu0 %v227
    %2252 = vmatprep.subr.mxu0 %v231
    %2253 = vmatpush1.msra.mxu0 %v230
    %2254 = vmatprep.subr.mxu0 %v234
    %2255 = vmatpush1.msra.mxu0 %v233
    %2256 = vmatprep.subr.mxu0 0.0
    %2257 = vmatpush1.msra.mxu0 0.0
    %2258 = vmatprep.subr.mxu0 0.0
    %2259 = vmatpush1.msra.mxu0 0.0
    %2260 = vmatprep.subr.mxu0 0.0
    %2261 = vmatpush1.msra.mxu0 0.0
    %2262 = vmatprep.subr.mxu0 0.0
    %2263 = vmatpush1.msra.mxu0 0.0
    %2264 = vmatprep.subr.mxu0 0.0
    %2265 = vmatpush1.msra.mxu0 0.0
    %2266 = vmatprep.subr.mxu0 0.0
    %2267 = vmatpush1.msra.mxu0 0.0
    %2268 = vmatprep.subr.mxu0 0.0
    %2269 = vmatpush1.msra.mxu0 0.0
    %2270 = vmatprep.subr.mxu0 0.0
    %2271 = vmatpush1.msra.mxu0 0.0
    %2272 = vmatprep.subr.mxu0 0.0
    %2273 = vmatpush1.msra.mxu0 0.0
    %2274 = vmatprep.subr.mxu0 0.0
    %2275 = vmatpush1.msra.mxu0 0.0
    %2276 = vmatprep.subr.mxu0 0.0
    %2277 = vmatpush1.msra.mxu0 0.0
    %2278 = vmatprep.subr.mxu0 0.0
    %2279 = vmatpush1.msra.mxu0 0.0
    %2280 = vmatprep.subr.mxu0 0.0
    %2281 = vmatpush1.msra.mxu0 0.0
    %2282 = vmatprep.subr.mxu0 0.0
    %2283 = vmatpush1.msra.mxu0 0.0
    %2284 = vmatprep.subr.mxu0 0.0
    %2285 = vmatpush1.msra.mxu0 0.0
    %2286 = vmatprep.subr.mxu0 0.0
    %2287 = vmatpush1.msra.mxu0 0.0
    %2288 = vmatprep.mubr.f32.mxu0 0.0
    %2289 = vmatmul.mubr.f32.gmra.mrb[0].mxu0 %v2013
    %v2290 = vpop.f32.mrb[0].mxu0
    %v2291 = vadd.f32 0.0, %v2290
    %v2292 = vpop.f32.mrb[0].mxu0
    %v2293 = vadd.f32 0.0, %v2292
    %2294 = vdwg.mxu0
    %2295 = vmatprep.subr.mxu0 0.0
    %2296 = vmatpush1.msra.mxu0 %v190
    %2297 = vmatprep.subr.mxu0 0.0
    %2298 = vmatpush1.msra.mxu0 %v193
    %2299 = vmatprep.subr.mxu0 0.0
    %2300 = vmatpush1.msra.mxu0 %v196
    %2301 = vmatprep.subr.mxu0 0.0
    %2302 = vmatpush1.msra.mxu0 %v199
    %2303 = vmatprep.subr.mxu0 0.0
    %2304 = vmatpush1.msra.mxu0 %v202
    %2305 = vmatprep.subr.mxu0 0.0
    %2306 = vmatpush1.msra.mxu0 %v205
    %2307 = vmatprep.subr.mxu0 0.0
    %2308 = vmatpush1.msra.mxu0 %v208
    %2309 = vmatprep.subr.mxu0 0.0
    %2310 = vmatpush1.msra.mxu0 %v211
    %2311 = vmatprep.subr.mxu0 0.0
    %2312 = vmatpush1.msra.mxu0 %v214
    %2313 = vmatprep.subr.mxu0 0.0
    %2314 = vmatpush1.msra.mxu0 %v217
    %2315 = vmatprep.subr.mxu0 0.0
    %2316 = vmatpush1.msra.mxu0 %v220
    %2317 = vmatprep.subr.mxu0 0.0
    %2318 = vmatpush1.msra.mxu0 %v223
    %2319 = vmatprep.subr.mxu0 0.0
    %2320 = vmatpush1.msra.mxu0 %v226
    %2321 = vmatprep.subr.mxu0 0.0
    %2322 = vmatpush1.msra.mxu0 %v229
    %2323 = vmatprep.subr.mxu0 0.0
    %2324 = vmatpush1.msra.mxu0 %v232
    %2325 = vmatprep.subr.mxu0 0.0
    %2326 = vmatpush1.msra.mxu0 %v235
    %2327 = vmatprep.subr.mxu0 0.0
    %2328 = vmatpush1.msra.mxu0 0.0
    %2329 = vmatprep.subr.mxu0 0.0
    %2330 = vmatpush1.msra.mxu0 0.0
    %2331 = vmatprep.subr.mxu0 0.0
    %2332 = vmatpush1.msra.mxu0 0.0
    %2333 = vmatprep.subr.mxu0 0.0
    %2334 = vmatpush1.msra.mxu0 0.0
    %2335 = vmatprep.subr.mxu0 0.0
    %2336 = vmatpush1.msra.mxu0 0.0
    %2337 = vmatprep.subr.mxu0 0.0
    %2338 = vmatpush1.msra.mxu0 0.0
    %2339 = vmatprep.subr.mxu0 0.0
    %2340 = vmatpush1.msra.mxu0 0.0
    %2341 = vmatprep.subr.mxu0 0.0
    %2342 = vmatpush1.msra.mxu0 0.0
    %2343 = vmatprep.subr.mxu0 0.0
    %2344 = vmatpush1.msra.mxu0 0.0
    %2345 = vmatprep.subr.mxu0 0.0
    %2346 = vmatpush1.msra.mxu0 0.0
    %2347 = vmatprep.subr.mxu0 0.0
    %2348 = vmatpush1.msra.mxu0 0.0
    %2349 = vmatprep.subr.mxu0 0.0
    %2350 = vmatpush1.msra.mxu0 0.0
    %2351 = vmatprep.subr.mxu0 0.0
    %2352 = vmatpush1.msra.mxu0 0.0
    %2353 = vmatprep.subr.mxu0 0.0
    %2354 = vmatpush1.msra.mxu0 0.0
    %2355 = vmatprep.subr.mxu0 0.0
    %2356 = vmatpush1.msra.mxu0 0.0
    %2357 = vmatprep.subr.mxu0 0.0
    %2358 = vmatpush1.msra.mxu0 0.0
    %2359 = vmatprep.mubr.f32.mxu0 0.0
    %2360 = vmatmul.mubr.f32.gmra.mrb[0].mxu0 %v2013
    %v2361 = vpop.f32.mrb[0].mxu0
    %v2362 = vadd.f32 0.0, %v2361
    %v2363 = vpop.f32.mrb[0].mxu0
    %2364 = vdwg.mxu0
    %v2365 = vadd.f32 %v2221, %v2291
    %v2366 = vadd.f32 %v2222, %v2293
    %v2367 = vxor.u32 %v2365, 2147483648
    %v2368 = vxor.u32 %v2366, 2147483648
    %v2369 = vmul.f32 %v2367, 1.442695
    %v2370 = vpow.pop %v2369
    %v2371 = vmul.f32 %v2368, 1.442695
    %v2372 = vpow.pop %v2371
    %v2373 = vadd.f32 %v2370, 1.0
    %v2374 = vadd.f32 %v2372, 1.0
    %v2375 = vrcp.pop %v2373
    %v2376 = vmul.f32 1.0, %v2375
    %v2377 = vrcp.pop %v2374
    %v2378 = vmul.f32 1.0, %v2377
    %v2379 = vadd.f32 %v2362, %v112
    %v2380 = vmul.f32 %v2376, %v2379
    %v2381 = vadd.f32 %v2223, %v2380
    %v2382 = vtanh.pop %v2381
    %v2383 = vsub.f32 %v2013, %v2382
    %v2384 = vmul.f32 %v2378, %v2383
    %v2385 = vadd.f32 %v2382, %v2384
    %2386 = vmatprep.subr.mxu0 %v399
    %2387 = vmatpush1.msra.mxu0 %v398
    %2388 = vmatprep.subr.mxu0 %v403
    %2389 = vmatpush1.msra.mxu0 %v402
    %2390 = vmatprep.subr.mxu0 %v407
    %2391 = vmatpush1.msra.mxu0 %v406
    %2392 = vmatprep.subr.mxu0 %v411
    %2393 = vmatpush1.msra.mxu0 %v410
    %2394 = vmatprep.subr.mxu0 %v415
    %2395 = vmatpush1.msra.mxu0 %v414
    %2396 = vmatprep.subr.mxu0 %v419
    %2397 = vmatpush1.msra.mxu0 %v418
    %2398 = vmatprep.subr.mxu0 %v423
    %2399 = vmatpush1.msra.mxu0 %v422
    %2400 = vmatprep.subr.mxu0 %v427
    %2401 = vmatpush1.msra.mxu0 %v426
    %2402 = vmatprep.subr.mxu0 %v431
    %2403 = vmatpush1.msra.mxu0 %v430
    %2404 = vmatprep.subr.mxu0 %v435
    %2405 = vmatpush1.msra.mxu0 %v434
    %2406 = vmatprep.subr.mxu0 %v439
    %2407 = vmatpush1.msra.mxu0 %v438
    %2408 = vmatprep.subr.mxu0 %v443
    %2409 = vmatpush1.msra.mxu0 %v442
    %2410 = vmatprep.subr.mxu0 %v447
    %2411 = vmatpush1.msra.mxu0 %v446
    %2412 = vmatprep.subr.mxu0 %v451
    %2413 = vmatpush1.msra.mxu0 %v450
    %2414 = vmatprep.subr.mxu0 %v455
    %2415 = vmatpush1.msra.mxu0 %v454
    %2416 = vmatprep.subr.mxu0 %v459
    %2417 = vmatpush1.msra.mxu0 %v458
    %2418 = vmatprep.subr.mxu0 %v463
    %2419 = vmatpush1.msra.mxu0 %v462
    %2420 = vmatprep.subr.mxu0 %v467
    %2421 = vmatpush1.msra.mxu0 %v466
    %2422 = vmatprep.subr.mxu0 %v471
    %2423 = vmatpush1.msra.mxu0 %v470
    %2424 = vmatprep.subr.mxu0 %v475
    %2425 = vmatpush1.msra.mxu0 %v474
    %2426 = vmatprep.subr.mxu0 %v479
    %2427 = vmatpush1.msra.mxu0 %v478
    %2428 = vmatprep.subr.mxu0 %v483
    %2429 = vmatpush1.msra.mxu0 %v482
    %2430 = vmatprep.subr.mxu0 %v487
    %2431 = vmatpush1.msra.mxu0 %v486
    %2432 = vmatprep.subr.mxu0 %v491
    %2433 = vmatpush1.msra.mxu0 %v490
    %2434 = vmatprep.subr.mxu0 %v495
    %2435 = vmatpush1.msra.mxu0 %v494
    %2436 = vmatprep.subr.mxu0 %v499
    %2437 = vmatpush1.msra.mxu0 %v498
    %2438 = vmatprep.subr.mxu0 %v503
    %2439 = vmatpush1.msra.mxu0 %v502
    %2440 = vmatprep.subr.mxu0 %v507
    %2441 = vmatpush1.msra.mxu0 %v506
    %2442 = vmatprep.subr.mxu0 %v511
    %2443 = vmatpush1.msra.mxu0 %v510
    %2444 = vmatprep.subr.mxu0 %v515
    %2445 = vmatpush1.msra.mxu0 %v514
    %2446 = vmatprep.subr.mxu0 %v519
    %2447 = vmatpush1.msra.mxu0 %v518
    %2448 = vmatprep.subr.mxu0 %v523
    %2449 = vmatpush1.msra.mxu0 %v522
    %2450 = vmatprep.mubr.f32.mxu0 %v2177
    %2451 = vmatmul.mubr.f32.gmra.mrb[0].mxu0 %v2385
    %v2452 = vpop.f32.mrb[0].mxu0
    %v2453 = vadd.f32 0.0, %v2452
    %v2454 = vpop.f32.mrb[0].mxu0
    %v2455 = vadd.f32 0.0, %v2454
    %2456 = vdwg.mxu0
    %2457 = vmatprep.subr.mxu0 %v401
    %2458 = vmatpush1.msra.mxu0 %v400
    %2459 = vmatprep.subr.mxu0 %v405
    %2460 = vmatpush1.msra.mxu0 %v404
    %2461 = vmatprep.subr.mxu0 %v409
    %2462 = vmatpush1.msra.mxu0 %v408
    %2463 = vmatprep.subr.mxu0 %v413
    %2464 = vmatpush1.msra.mxu0 %v412
    %2465 = vmatprep.subr.mxu0 %v417
    %2466 = vmatpush1.msra.mxu0 %v416
    %2467 = vmatprep.subr.mxu0 %v421
    %2468 = vmatpush1.msra.mxu0 %v420
    %2469 = vmatprep.subr.mxu0 %v425
    %2470 = vmatpush1.msra.mxu0 %v424
    %2471 = vmatprep.subr.mxu0 %v429
    %2472 = vmatpush1.msra.mxu0 %v428
    %2473 = vmatprep.subr.mxu0 %v433
    %2474 = vmatpush1.msra.mxu0 %v432
    %2475 = vmatprep.subr.mxu0 %v437
    %2476 = vmatpush1.msra.mxu0 %v436
    %2477 = vmatprep.subr.mxu0 %v441
    %2478 = vmatpush1.msra.mxu0 %v440
    %2479 = vmatprep.subr.mxu0 %v445
    %2480 = vmatpush1.msra.mxu0 %v444
    %2481 = vmatprep.subr.mxu0 %v449
    %2482 = vmatpush1.msra.mxu0 %v448
    %2483 = vmatprep.subr.mxu0 %v453
    %2484 = vmatpush1.msra.mxu0 %v452
    %2485 = vmatprep.subr.mxu0 %v457
    %2486 = vmatpush1.msra.mxu0 %v456
    %2487 = vmatprep.subr.mxu0 %v461
    %2488 = vmatpush1.msra.mxu0 %v460
    %2489 = vmatprep.subr.mxu0 %v465
    %2490 = vmatpush1.msra.mxu0 %v464
    %2491 = vmatprep.subr.mxu0 %v469
    %2492 = vmatpush1.msra.mxu0 %v468
    %2493 = vmatprep.subr.mxu0 %v473
    %2494 = vmatpush1.msra.mxu0 %v472
    %2495 = vmatprep.subr.mxu0 %v477
    %2496 = vmatpush1.msra.mxu0 %v476
    %2497 = vmatprep.subr.mxu0 %v481
    %2498 = vmatpush1.msra.mxu0 %v480
    %2499 = vmatprep.subr.mxu0 %v485
    %2500 = vmatpush1.msra.mxu0 %v484
    %2501 = vmatprep.subr.mxu0 %v489
    %2502 = vmatpush1.msra.mxu0 %v488
    %2503 = vmatprep.subr.mxu0 %v493
    %2504 = vmatpush1.msra.mxu0 %v492
    %2505 = vmatprep.subr.mxu0 %v497
    %2506 = vmatpush1.msra.mxu0 %v496
    %2507 = vmatprep.subr.mxu0 %v501
    %2508 = vmatpush1.msra.mxu0 %v500
    %2509 = vmatprep.subr.mxu0 %v505
    %2510 = vmatpush1.msra.mxu0 %v504
    %2511 = vmatprep.subr.mxu0 %v509
    %2512 = vmatpush1.msra.mxu0 %v508
    %2513 = vmatprep.subr.mxu0 %v513
    %2514 = vmatpush1.msra.mxu0 %v512
    %2515 = vmatprep.subr.mxu0 %v517
    %2516 = vmatpush1.msra.mxu0 %v516
    %2517 = vmatprep.subr.mxu0 %v521
    %2518 = vmatpush1.msra.mxu0 %v520
    %2519 = vmatprep.subr.mxu0 %v525
    %2520 = vmatpush1.msra.mxu0 %v524
    %2521 = vmatprep.mubr.f32.mxu0 %v2177
    %2522 = vmatmul.mubr.f32.gmra.mrb[0].mxu0 %v2385
    %v2523 = vpop.f32.mrb[0].mxu0
    %v2524 = vadd.f32 0.0, %v2523
    %v2525 = vpop.f32.mrb[0].mxu0
    %v2526 = vadd.f32 0.0, %v2525
    %2527 = vdwg.mxu0
    %v2528 = vadd.f32 %v2453, %v119
    %v2529 = vadd.f32 %v2455, %v123
    %v2530 = vxor.u32 %v2528, 2147483648
    %v2531 = vxor.u32 %v2529, 2147483648
    %v2532 = vmul.f32 %v2530, 1.442695
    %v2533 = vpow.pop %v2532
    %v2534 = vmul.f32 %v2531, 1.442695
    %v2535 = vpow.pop %v2534
    %v2536 = vadd.f32 %v2533, 1.0
    %v2537 = vadd.f32 %v2535, 1.0
    %v2538 = vrcp.pop %v2536
    %v2539 = vmul.f32 1.0, %v2538
    %v2540 = vrcp.pop %v2537
    %v2541 = vmul.f32 1.0, %v2540
    %v2542 = vadd.f32 %v2524, %v131
    %v2543 = vadd.f32 %v2526, %v138
    %v2544 = vmul.f32 %v2539, %v2543
    %v2545 = vadd.f32 %v2542, %v2544
    %v2546 = vtanh.pop %v2545
    %v2547 = vsub.f32 %v2177, %v2546
    %v2548 = vmul.f32 %v2541, %v2547
    %v2549 = vadd.f32 %v2546, %v2548
    %s2550 = sld [smem:[#allocation2 + $0xc]]
    %s2551 = smul.u32 %s2550, 3
    %s2552 = scalar_lea.vmem [#allocation5], %s2551
    %v2553 = vld [vmem:[%s2552] sm:$0x7]
    %s2554 = sld [smem:[#allocation2 + $0xd]]
    %s2555 = smul.u32 %s2554, 3
    %s2556 = scalar_lea.vmem [#allocation5], %s2555
    %v2557 = vld [vmem:[%s2556] sm:$0x7]
    %v2559 = vlaneseq
    %v2560 = vshrl.u32 %v2559, 7
    %v2561 = vsub.s32 0, %v2560
    %v2562 = vrot.slane %v2553, %v2561
    %v2563 = vlaneseq
    %v2564 = vshrl.u32 %v2563, 7
    %v2565 = vsub.s32 1, %v2564
    %v2566 = vrot.slane %v2553, %v2565
    %v2567 = vlaneseq
    %v2568 = vshrl.u32 %v2567, 7
    %v2569 = vsub.s32 2, %v2568
    %v2570 = vrot.slane %v2553, %v2569
    %v2575 = vlaneseq
    %v2576 = vshrl.u32 %v2575, 7
    %v2577 = vsub.s32 0, %v2576
    %v2578 = vrot.slane %v2557, %v2577
    %v2579 = vlaneseq
    %v2580 = vshrl.u32 %v2579, 7
    %v2581 = vsub.s32 1, %v2580
    %v2582 = vrot.slane %v2557, %v2581
    %v2583 = vlaneseq
    %v2584 = vshrl.u32 %v2583, 7
    %v2585 = vsub.s32 2, %v2584
    %v2586 = vrot.slane %v2557, %v2585
    %v2590 = vsel %vm180, %v2562, %v2578
    %v2591 = vsel %vm180, %v2566, %v2582
    %v2592 = vsel %vm180, %v2570, %v2586
    %v2593 = vsel %vm184, %v2590, 0.0
    %v2594 = vsel %vm184, %v2591, 0.0
    %v2595 = vsel %vm184, %v2592, 0.0
    %2596 = vmatprep.subr.mxu0 %v189
    %2597 = vmatpush1.msra.mxu0 %v188
    %2598 = vmatprep.subr.mxu0 %v192
    %2599 = vmatpush1.msra.mxu0 %v191
    %2600 = vmatprep.subr.mxu0 %v195
    %2601 = vmatpush1.msra.mxu0 %v194
    %2602 = vmatprep.subr.mxu0 %v198
    %2603 = vmatpush1.msra.mxu0 %v197
    %2604 = vmatprep.subr.mxu0 %v201
    %2605 = vmatpush1.msra.mxu0 %v200
    %2606 = vmatprep.subr.mxu0 %v204
    %2607 = vmatpush1.msra.mxu0 %v203
    %2608 = vmatprep.subr.mxu0 %v207
    %2609 = vmatpush1.msra.mxu0 %v206
    %2610 = vmatprep.subr.mxu0 %v210
    %2611 = vmatpush1.msra.mxu0 %v209
    %2612 = vmatprep.subr.mxu0 %v213
    %2613 = vmatpush1.msra.mxu0 %v212
    %2614 = vmatprep.subr.mxu0 %v216
    %2615 = vmatpush1.msra.mxu0 %v215
    %2616 = vmatprep.subr.mxu0 %v219
    %2617 = vmatpush1.msra.mxu0 %v218
    %2618 = vmatprep.subr.mxu0 %v222
    %2619 = vmatpush1.msra.mxu0 %v221
    %2620 = vmatprep.subr.mxu0 %v225
    %2621 = vmatpush1.msra.mxu0 %v224
    %2622 = vmatprep.subr.mxu0 %v228
    %2623 = vmatpush1.msra.mxu0 %v227
    %2624 = vmatprep.subr.mxu0 %v231
    %2625 = vmatpush1.msra.mxu0 %v230
    %2626 = vmatprep.subr.mxu0 %v234
    %2627 = vmatpush1.msra.mxu0 %v233
    %2628 = vmatprep.subr.mxu0 0.0
    %2629 = vmatpush1.msra.mxu0 0.0
    %2630 = vmatprep.subr.mxu0 0.0
    %2631 = vmatpush1.msra.mxu0 0.0
    %2632 = vmatprep.subr.mxu0 0.0
    %2633 = vmatpush1.msra.mxu0 0.0
    %2634 = vmatprep.subr.mxu0 0.0
    %2635 = vmatpush1.msra.mxu0 0.0
    %2636 = vmatprep.subr.mxu0 0.0
    %2637 = vmatpush1.msra.mxu0 0.0
    %2638 = vmatprep.subr.mxu0 0.0
    %2639 = vmatpush1.msra.mxu0 0.0
    %2640 = vmatprep.subr.mxu0 0.0
    %2641 = vmatpush1.msra.mxu0 0.0
    %2642 = vmatprep.subr.mxu0 0.0
    %2643 = vmatpush1.msra.mxu0 0.0
    %2644 = vmatprep.subr.mxu0 0.0
    %2645 = vmatpush1.msra.mxu0 0.0
    %2646 = vmatprep.subr.mxu0 0.0
    %2647 = vmatpush1.msra.mxu0 0.0
    %2648 = vmatprep.subr.mxu0 0.0
    %2649 = vmatpush1.msra.mxu0 0.0
    %2650 = vmatprep.subr.mxu0 0.0
    %2651 = vmatpush1.msra.mxu0 0.0
    %2652 = vmatprep.subr.mxu0 0.0
    %2653 = vmatpush1.msra.mxu0 0.0
    %2654 = vmatprep.subr.mxu0 0.0
    %2655 = vmatpush1.msra.mxu0 0.0
    %2656 = vmatprep.subr.mxu0 0.0
    %2657 = vmatpush1.msra.mxu0 0.0
    %2658 = vmatprep.subr.mxu0 0.0
    %2659 = vmatpush1.msra.mxu0 0.0
    %2660 = vmatprep.mubr.f32.mxu0 0.0
    %2661 = vmatmul.mubr.f32.gmra.mrb[0].mxu0 %v2385
    %v2662 = vpop.f32.mrb[0].mxu0
    %v2663 = vadd.f32 0.0, %v2662
    %v2664 = vpop.f32.mrb[0].mxu0
    %v2665 = vadd.f32 0.0, %v2664
    %2666 = vdwg.mxu0
    %2667 = vmatprep.subr.mxu0 0.0
    %2668 = vmatpush1.msra.mxu0 %v190
    %2669 = vmatprep.subr.mxu0 0.0
    %2670 = vmatpush1.msra.mxu0 %v193
    %2671 = vmatprep.subr.mxu0 0.0
    %2672 = vmatpush1.msra.mxu0 %v196
    %2673 = vmatprep.subr.mxu0 0.0
    %2674 = vmatpush1.msra.mxu0 %v199
    %2675 = vmatprep.subr.mxu0 0.0
    %2676 = vmatpush1.msra.mxu0 %v202
    %2677 = vmatprep.subr.mxu0 0.0
    %2678 = vmatpush1.msra.mxu0 %v205
    %2679 = vmatprep.subr.mxu0 0.0
    %2680 = vmatpush1.msra.mxu0 %v208
    %2681 = vmatprep.subr.mxu0 0.0
    %2682 = vmatpush1.msra.mxu0 %v211
    %2683 = vmatprep.subr.mxu0 0.0
    %2684 = vmatpush1.msra.mxu0 %v214
    %2685 = vmatprep.subr.mxu0 0.0
    %2686 = vmatpush1.msra.mxu0 %v217
    %2687 = vmatprep.subr.mxu0 0.0
    %2688 = vmatpush1.msra.mxu0 %v220
    %2689 = vmatprep.subr.mxu0 0.0
    %2690 = vmatpush1.msra.mxu0 %v223
    %2691 = vmatprep.subr.mxu0 0.0
    %2692 = vmatpush1.msra.mxu0 %v226
    %2693 = vmatprep.subr.mxu0 0.0
    %2694 = vmatpush1.msra.mxu0 %v229
    %2695 = vmatprep.subr.mxu0 0.0
    %2696 = vmatpush1.msra.mxu0 %v232
    %2697 = vmatprep.subr.mxu0 0.0
    %2698 = vmatpush1.msra.mxu0 %v235
    %2699 = vmatprep.subr.mxu0 0.0
    %2700 = vmatpush1.msra.mxu0 0.0
    %2701 = vmatprep.subr.mxu0 0.0
    %2702 = vmatpush1.msra.mxu0 0.0
    %2703 = vmatprep.subr.mxu0 0.0
    %2704 = vmatpush1.msra.mxu0 0.0
    %2705 = vmatprep.subr.mxu0 0.0
    %2706 = vmatpush1.msra.mxu0 0.0
    %2707 = vmatprep.subr.mxu0 0.0
    %2708 = vmatpush1.msra.mxu0 0.0
    %2709 = vmatprep.subr.mxu0 0.0
    %2710 = vmatpush1.msra.mxu0 0.0
    %2711 = vmatprep.subr.mxu0 0.0
    %2712 = vmatpush1.msra.mxu0 0.0
    %2713 = vmatprep.subr.mxu0 0.0
    %2714 = vmatpush1.msra.mxu0 0.0
    %2715 = vmatprep.subr.mxu0 0.0
    %2716 = vmatpush1.msra.mxu0 0.0
    %2717 = vmatprep.subr.mxu0 0.0
    %2718 = vmatpush1.msra.mxu0 0.0
    %2719 = vmatprep.subr.mxu0 0.0
    %2720 = vmatpush1.msra.mxu0 0.0
    %2721 = vmatprep.subr.mxu0 0.0
    %2722 = vmatpush1.msra.mxu0 0.0
    %2723 = vmatprep.subr.mxu0 0.0
    %2724 = vmatpush1.msra.mxu0 0.0
    %2725 = vmatprep.subr.mxu0 0.0
    %2726 = vmatpush1.msra.mxu0 0.0
    %2727 = vmatprep.subr.mxu0 0.0
    %2728 = vmatpush1.msra.mxu0 0.0
    %2729 = vmatprep.subr.mxu0 0.0
    %2730 = vmatpush1.msra.mxu0 0.0
    %2731 = vmatprep.mubr.f32.mxu0 0.0
    %2732 = vmatmul.mubr.f32.gmra.mrb[0].mxu0 %v2385
    %v2733 = vpop.f32.mrb[0].mxu0
    %v2734 = vadd.f32 0.0, %v2733
    %v2735 = vpop.f32.mrb[0].mxu0
    %2736 = vdwg.mxu0
    %v2737 = vadd.f32 %v2593, %v2663
    %v2738 = vadd.f32 %v2594, %v2665
    %v2739 = vxor.u32 %v2737, 2147483648
    %v2740 = vxor.u32 %v2738, 2147483648
    %v2741 = vmul.f32 %v2739, 1.442695
    %v2742 = vpow.pop %v2741
    %v2743 = vmul.f32 %v2740, 1.442695
    %v2744 = vpow.pop %v2743
    %v2745 = vadd.f32 %v2742, 1.0
    %v2746 = vadd.f32 %v2744, 1.0
    %v2747 = vrcp.pop %v2745
    %v2748 = vmul.f32 1.0, %v2747
    %v2749 = vrcp.pop %v2746
    %v2750 = vmul.f32 1.0, %v2749
    %v2751 = vadd.f32 %v2734, %v112
    %v2752 = vmul.f32 %v2748, %v2751
    %v2753 = vadd.f32 %v2595, %v2752
    %v2754 = vtanh.pop %v2753
    %v2755 = vsub.f32 %v2385, %v2754
    %v2756 = vmul.f32 %v2750, %v2755
    %v2757 = vadd.f32 %v2754, %v2756
    %2758 = vmatprep.subr.mxu0 %v399
    %2759 = vmatpush1.msra.mxu0 %v398
    %2760 = vmatprep.subr.mxu0 %v403
    %2761 = vmatpush1.msra.mxu0 %v402
    %2762 = vmatprep.subr.mxu0 %v407
    %2763 = vmatpush1.msra.mxu0 %v406
    %2764 = vmatprep.subr.mxu0 %v411
    %2765 = vmatpush1.msra.mxu0 %v410
    %2766 = vmatprep.subr.mxu0 %v415
    %2767 = vmatpush1.msra.mxu0 %v414
    %2768 = vmatprep.subr.mxu0 %v419
    %2769 = vmatpush1.msra.mxu0 %v418
    %2770 = vmatprep.subr.mxu0 %v423
    %2771 = vmatpush1.msra.mxu0 %v422
    %2772 = vmatprep.subr.mxu0 %v427
    %2773 = vmatpush1.msra.mxu0 %v426
    %2774 = vmatprep.subr.mxu0 %v431
    %2775 = vmatpush1.msra.mxu0 %v430
    %2776 = vmatprep.subr.mxu0 %v435
    %2777 = vmatpush1.msra.mxu0 %v434
    %2778 = vmatprep.subr.mxu0 %v439
    %2779 = vmatpush1.msra.mxu0 %v438
    %2780 = vmatprep.subr.mxu0 %v443
    %2781 = vmatpush1.msra.mxu0 %v442
    %2782 = vmatprep.subr.mxu0 %v447
    %2783 = vmatpush1.msra.mxu0 %v446
    %2784 = vmatprep.subr.mxu0 %v451
    %2785 = vmatpush1.msra.mxu0 %v450
    %2786 = vmatprep.subr.mxu0 %v455
    %2787 = vmatpush1.msra.mxu0 %v454
    %2788 = vmatprep.subr.mxu0 %v459
    %2789 = vmatpush1.msra.mxu0 %v458
    %2790 = vmatprep.subr.mxu0 %v463
    %2791 = vmatpush1.msra.mxu0 %v462
    %2792 = vmatprep.subr.mxu0 %v467
    %2793 = vmatpush1.msra.mxu0 %v466
    %2794 = vmatprep.subr.mxu0 %v471
    %2795 = vmatpush1.msra.mxu0 %v470
    %2796 = vmatprep.subr.mxu0 %v475
    %2797 = vmatpush1.msra.mxu0 %v474
    %2798 = vmatprep.subr.mxu0 %v479
    %2799 = vmatpush1.msra.mxu0 %v478
    %2800 = vmatprep.subr.mxu0 %v483
    %2801 = vmatpush1.msra.mxu0 %v482
    %2802 = vmatprep.subr.mxu0 %v487
    %2803 = vmatpush1.msra.mxu0 %v486
    %2804 = vmatprep.subr.mxu0 %v491
    %2805 = vmatpush1.msra.mxu0 %v490
    %2806 = vmatprep.subr.mxu0 %v495
    %2807 = vmatpush1.msra.mxu0 %v494
    %2808 = vmatprep.subr.mxu0 %v499
    %2809 = vmatpush1.msra.mxu0 %v498
    %2810 = vmatprep.subr.mxu0 %v503
    %2811 = vmatpush1.msra.mxu0 %v502
    %2812 = vmatprep.subr.mxu0 %v507
    %2813 = vmatpush1.msra.mxu0 %v506
    %2814 = vmatprep.subr.mxu0 %v511
    %2815 = vmatpush1.msra.mxu0 %v510
    %2816 = vmatprep.subr.mxu0 %v515
    %2817 = vmatpush1.msra.mxu0 %v514
    %2818 = vmatprep.subr.mxu0 %v519
    %2819 = vmatpush1.msra.mxu0 %v518
    %2820 = vmatprep.subr.mxu0 %v523
    %2821 = vmatpush1.msra.mxu0 %v522
    %2822 = vmatprep.mubr.f32.mxu0 %v2549
    %2823 = vmatmul.mubr.f32.gmra.mrb[0].mxu0 %v2757
    %v2824 = vpop.f32.mrb[0].mxu0
    %v2825 = vadd.f32 0.0, %v2824
    %v2826 = vpop.f32.mrb[0].mxu0
    %v2827 = vadd.f32 0.0, %v2826
    %2828 = vdwg.mxu0
    %2829 = vmatprep.subr.mxu0 %v401
    %2830 = vmatpush1.msra.mxu0 %v400
    %2831 = vmatprep.subr.mxu0 %v405
    %2832 = vmatpush1.msra.mxu0 %v404
    %2833 = vmatprep.subr.mxu0 %v409
    %2834 = vmatpush1.msra.mxu0 %v408
    %2835 = vmatprep.subr.mxu0 %v413
    %2836 = vmatpush1.msra.mxu0 %v412
    %2837 = vmatprep.subr.mxu0 %v417
    %2838 = vmatpush1.msra.mxu0 %v416
    %2839 = vmatprep.subr.mxu0 %v421
    %2840 = vmatpush1.msra.mxu0 %v420
    %2841 = vmatprep.subr.mxu0 %v425
    %2842 = vmatpush1.msra.mxu0 %v424
    %2843 = vmatprep.subr.mxu0 %v429
    %2844 = vmatpush1.msra.mxu0 %v428
    %2845 = vmatprep.subr.mxu0 %v433
    %2846 = vmatpush1.msra.mxu0 %v432
    %2847 = vmatprep.subr.mxu0 %v437
    %2848 = vmatpush1.msra.mxu0 %v436
    %2849 = vmatprep.subr.mxu0 %v441
    %2850 = vmatpush1.msra.mxu0 %v440
    %2851 = vmatprep.subr.mxu0 %v445
    %2852 = vmatpush1.msra.mxu0 %v444
    %2853 = vmatprep.subr.mxu0 %v449
    %2854 = vmatpush1.msra.mxu0 %v448
    %2855 = vmatprep.subr.mxu0 %v453
    %2856 = vmatpush1.msra.mxu0 %v452
    %2857 = vmatprep.subr.mxu0 %v457
    %2858 = vmatpush1.msra.mxu0 %v456
    %2859 = vmatprep.subr.mxu0 %v461
    %2860 = vmatpush1.msra.mxu0 %v460
    %2861 = vmatprep.subr.mxu0 %v465
    %2862 = vmatpush1.msra.mxu0 %v464
    %2863 = vmatprep.subr.mxu0 %v469
    %2864 = vmatpush1.msra.mxu0 %v468
    %2865 = vmatprep.subr.mxu0 %v473
    %2866 = vmatpush1.msra.mxu0 %v472
    %2867 = vmatprep.subr.mxu0 %v477
    %2868 = vmatpush1.msra.mxu0 %v476
    %2869 = vmatprep.subr.mxu0 %v481
    %2870 = vmatpush1.msra.mxu0 %v480
    %2871 = vmatprep.subr.mxu0 %v485
    %2872 = vmatpush1.msra.mxu0 %v484
    %2873 = vmatprep.subr.mxu0 %v489
    %2874 = vmatpush1.msra.mxu0 %v488
    %2875 = vmatprep.subr.mxu0 %v493
    %2876 = vmatpush1.msra.mxu0 %v492
    %2877 = vmatprep.subr.mxu0 %v497
    %2878 = vmatpush1.msra.mxu0 %v496
    %2879 = vmatprep.subr.mxu0 %v501
    %2880 = vmatpush1.msra.mxu0 %v500
    %2881 = vmatprep.subr.mxu0 %v505
    %2882 = vmatpush1.msra.mxu0 %v504
    %2883 = vmatprep.subr.mxu0 %v509
    %2884 = vmatpush1.msra.mxu0 %v508
    %2885 = vmatprep.subr.mxu0 %v513
    %2886 = vmatpush1.msra.mxu0 %v512
    %2887 = vmatprep.subr.mxu0 %v517
    %2888 = vmatpush1.msra.mxu0 %v516
    %2889 = vmatprep.subr.mxu0 %v521
    %2890 = vmatpush1.msra.mxu0 %v520
    %2891 = vmatprep.subr.mxu0 %v525
    %2892 = vmatpush1.msra.mxu0 %v524
    %2893 = vmatprep.mubr.f32.mxu0 %v2549
    %2894 = vmatmul.mubr.f32.gmra.mrb[0].mxu0 %v2757
    %v2895 = vpop.f32.mrb[0].mxu0
    %v2896 = vadd.f32 0.0, %v2895
    %v2897 = vpop.f32.mrb[0].mxu0
    %v2898 = vadd.f32 0.0, %v2897
    %2899 = vdwg.mxu0
    %v2900 = vadd.f32 %v2825, %v119
    %v2901 = vadd.f32 %v2827, %v123
    %v2902 = vxor.u32 %v2900, 2147483648
    %v2903 = vxor.u32 %v2901, 2147483648
    %v2904 = vmul.f32 %v2902, 1.442695
    %v2905 = vpow.pop %v2904
    %v2906 = vmul.f32 %v2903, 1.442695
    %v2907 = vpow.pop %v2906
    %v2908 = vadd.f32 %v2905, 1.0
    %v2909 = vadd.f32 %v2907, 1.0
    %v2910 = vrcp.pop %v2908
    %v2911 = vmul.f32 1.0, %v2910
    %v2912 = vrcp.pop %v2909
    %v2913 = vmul.f32 1.0, %v2912
    %v2914 = vadd.f32 %v2896, %v131
    %v2915 = vadd.f32 %v2898, %v138
    %v2916 = vmul.f32 %v2911, %v2915
    %v2917 = vadd.f32 %v2914, %v2916
    %v2918 = vtanh.pop %v2917
    %v2919 = vsub.f32 %v2549, %v2918
    %v2920 = vmul.f32 %v2913, %v2919
    %v2921 = vadd.f32 %v2918, %v2920
    %s2922 = sld [smem:[#allocation2 + $0xe]]
    %s2923 = smul.u32 %s2922, 3
    %s2924 = scalar_lea.vmem [#allocation5], %s2923
    %v2925 = vld [vmem:[%s2924] sm:$0x7]
    %s2926 = sld [smem:[#allocation2 + $0xf]]
    %s2927 = smul.u32 %s2926, 3
    %s2928 = scalar_lea.vmem [#allocation5], %s2927
    %v2929 = vld [vmem:[%s2928] sm:$0x7]
    %v2931 = vlaneseq
    %v2932 = vshrl.u32 %v2931, 7
    %v2933 = vsub.s32 0, %v2932
    %v2934 = vrot.slane %v2925, %v2933
    %v2935 = vlaneseq
    %v2936 = vshrl.u32 %v2935, 7
    %v2937 = vsub.s32 1, %v2936
    %v2938 = vrot.slane %v2925, %v2937
    %v2939 = vlaneseq
    %v2940 = vshrl.u32 %v2939, 7
    %v2941 = vsub.s32 2, %v2940
    %v2942 = vrot.slane %v2925, %v2941
    %v2947 = vlaneseq
    %v2948 = vshrl.u32 %v2947, 7
    %v2949 = vsub.s32 0, %v2948
    %v2950 = vrot.slane %v2929, %v2949
    %v2951 = vlaneseq
    %v2952 = vshrl.u32 %v2951, 7
    %v2953 = vsub.s32 1, %v2952
    %v2954 = vrot.slane %v2929, %v2953
    %v2955 = vlaneseq
    %v2956 = vshrl.u32 %v2955, 7
    %v2957 = vsub.s32 2, %v2956
    %v2958 = vrot.slane %v2929, %v2957
    %v2962 = vsel %vm180, %v2934, %v2950
    %v2963 = vsel %vm180, %v2938, %v2954
    %v2964 = vsel %vm180, %v2942, %v2958
    %v2965 = vsel %vm184, %v2962, 0.0
    %v2966 = vsel %vm184, %v2963, 0.0
    %v2967 = vsel %vm184, %v2964, 0.0
    %2968 = vmatprep.subr.mxu0 %v189
    %2969 = vmatpush1.msra.mxu0 %v188
    %2970 = vmatprep.subr.mxu0 %v192
    %2971 = vmatpush1.msra.mxu0 %v191
    %2972 = vmatprep.subr.mxu0 %v195
    %2973 = vmatpush1.msra.mxu0 %v194
    %2974 = vmatprep.subr.mxu0 %v198
    %2975 = vmatpush1.msra.mxu0 %v197
    %2976 = vmatprep.subr.mxu0 %v201
    %2977 = vmatpush1.msra.mxu0 %v200
    %2978 = vmatprep.subr.mxu0 %v204
    %2979 = vmatpush1.msra.mxu0 %v203
    %2980 = vmatprep.subr.mxu0 %v207
    %2981 = vmatpush1.msra.mxu0 %v206
    %2982 = vmatprep.subr.mxu0 %v210
    %2983 = vmatpush1.msra.mxu0 %v209
    %2984 = vmatprep.subr.mxu0 %v213
    %2985 = vmatpush1.msra.mxu0 %v212
    %2986 = vmatprep.subr.mxu0 %v216
    %2987 = vmatpush1.msra.mxu0 %v215
    %2988 = vmatprep.subr.mxu0 %v219
    %2989 = vmatpush1.msra.mxu0 %v218
    %2990 = vmatprep.subr.mxu0 %v222
    %2991 = vmatpush1.msra.mxu0 %v221
    %2992 = vmatprep.subr.mxu0 %v225
    %2993 = vmatpush1.msra.mxu0 %v224
    %2994 = vmatprep.subr.mxu0 %v228
    %2995 = vmatpush1.msra.mxu0 %v227
    %2996 = vmatprep.subr.mxu0 %v231
    %2997 = vmatpush1.msra.mxu0 %v230
    %2998 = vmatprep.subr.mxu0 %v234
    %2999 = vmatpush1.msra.mxu0 %v233
    %3000 = vmatprep.subr.mxu0 0.0
    %3001 = vmatpush1.msra.mxu0 0.0
    %3002 = vmatprep.subr.mxu0 0.0
    %3003 = vmatpush1.msra.mxu0 0.0
    %3004 = vmatprep.subr.mxu0 0.0
    %3005 = vmatpush1.msra.mxu0 0.0
    %3006 = vmatprep.subr.mxu0 0.0
    %3007 = vmatpush1.msra.mxu0 0.0
    %3008 = vmatprep.subr.mxu0 0.0
    %3009 = vmatpush1.msra.mxu0 0.0
    %3010 = vmatprep.subr.mxu0 0.0
    %3011 = vmatpush1.msra.mxu0 0.0
    %3012 = vmatprep.subr.mxu0 0.0
    %3013 = vmatpush1.msra.mxu0 0.0
    %3014 = vmatprep.subr.mxu0 0.0
    %3015 = vmatpush1.msra.mxu0 0.0
    %3016 = vmatprep.subr.mxu0 0.0
    %3017 = vmatpush1.msra.mxu0 0.0
    %3018 = vmatprep.subr.mxu0 0.0
    %3019 = vmatpush1.msra.mxu0 0.0
    %3020 = vmatprep.subr.mxu0 0.0
    %3021 = vmatpush1.msra.mxu0 0.0
    %3022 = vmatprep.subr.mxu0 0.0
    %3023 = vmatpush1.msra.mxu0 0.0
    %3024 = vmatprep.subr.mxu0 0.0
    %3025 = vmatpush1.msra.mxu0 0.0
    %3026 = vmatprep.subr.mxu0 0.0
    %3027 = vmatpush1.msra.mxu0 0.0
    %3028 = vmatprep.subr.mxu0 0.0
    %3029 = vmatpush1.msra.mxu0 0.0
    %3030 = vmatprep.subr.mxu0 0.0
    %3031 = vmatpush1.msra.mxu0 0.0
    %3032 = vmatprep.mubr.f32.mxu0 0.0
    %3033 = vmatmul.mubr.f32.gmra.mrb[0].mxu0 %v2757
    %v3034 = vpop.f32.mrb[0].mxu0
    %v3035 = vadd.f32 0.0, %v3034
    %v3036 = vpop.f32.mrb[0].mxu0
    %v3037 = vadd.f32 0.0, %v3036
    %3038 = vdwg.mxu0
    %3039 = vmatprep.subr.mxu0 0.0
    %3040 = vmatpush1.msra.mxu0 %v190
    %3041 = vmatprep.subr.mxu0 0.0
    %3042 = vmatpush1.msra.mxu0 %v193
    %3043 = vmatprep.subr.mxu0 0.0
    %3044 = vmatpush1.msra.mxu0 %v196
    %3045 = vmatprep.subr.mxu0 0.0
    %3046 = vmatpush1.msra.mxu0 %v199
    %3047 = vmatprep.subr.mxu0 0.0
    %3048 = vmatpush1.msra.mxu0 %v202
    %3049 = vmatprep.subr.mxu0 0.0
    %3050 = vmatpush1.msra.mxu0 %v205
    %3051 = vmatprep.subr.mxu0 0.0
    %3052 = vmatpush1.msra.mxu0 %v208
    %3053 = vmatprep.subr.mxu0 0.0
    %3054 = vmatpush1.msra.mxu0 %v211
    %3055 = vmatprep.subr.mxu0 0.0
    %3056 = vmatpush1.msra.mxu0 %v214
    %3057 = vmatprep.subr.mxu0 0.0
    %3058 = vmatpush1.msra.mxu0 %v217
    %3059 = vmatprep.subr.mxu0 0.0
    %3060 = vmatpush1.msra.mxu0 %v220
    %3061 = vmatprep.subr.mxu0 0.0
    %3062 = vmatpush1.msra.mxu0 %v223
    %3063 = vmatprep.subr.mxu0 0.0
    %3064 = vmatpush1.msra.mxu0 %v226
    %3065 = vmatprep.subr.mxu0 0.0
    %3066 = vmatpush1.msra.mxu0 %v229
    %3067 = vmatprep.subr.mxu0 0.0
    %3068 = vmatpush1.msra.mxu0 %v232
    %3069 = vmatprep.subr.mxu0 0.0
    %3070 = vmatpush1.msra.mxu0 %v235
    %3071 = vmatprep.subr.mxu0 0.0
    %3072 = vmatpush1.msra.mxu0 0.0
    %3073 = vmatprep.subr.mxu0 0.0
    %3074 = vmatpush1.msra.mxu0 0.0
    %3075 = vmatprep.subr.mxu0 0.0
    %3076 = vmatpush1.msra.mxu0 0.0
    %3077 = vmatprep.subr.mxu0 0.0
    %3078 = vmatpush1.msra.mxu0 0.0
    %3079 = vmatprep.subr.mxu0 0.0
    %3080 = vmatpush1.msra.mxu0 0.0
    %3081 = vmatprep.subr.mxu0 0.0
    %3082 = vmatpush1.msra.mxu0 0.0
    %3083 = vmatprep.subr.mxu0 0.0
    %3084 = vmatpush1.msra.mxu0 0.0
    %3085 = vmatprep.subr.mxu0 0.0
    %3086 = vmatpush1.msra.mxu0 0.0
    %3087 = vmatprep.subr.mxu0 0.0
    %3088 = vmatpush1.msra.mxu0 0.0
    %3089 = vmatprep.subr.mxu0 0.0
    %3090 = vmatpush1.msra.mxu0 0.0
    %3091 = vmatprep.subr.mxu0 0.0
    %3092 = vmatpush1.msra.mxu0 0.0
    %3093 = vmatprep.subr.mxu0 0.0
    %3094 = vmatpush1.msra.mxu0 0.0
    %3095 = vmatprep.subr.mxu0 0.0
    %3096 = vmatpush1.msra.mxu0 0.0
    %3097 = vmatprep.subr.mxu0 0.0
    %3098 = vmatpush1.msra.mxu0 0.0
    %3099 = vmatprep.subr.mxu0 0.0
    %3100 = vmatpush1.msra.mxu0 0.0
    %3101 = vmatprep.subr.mxu0 0.0
    %3102 = vmatpush1.msra.mxu0 0.0
    %3103 = vmatprep.mubr.f32.mxu0 0.0
    %3104 = vmatmul.mubr.f32.gmra.mrb[0].mxu0 %v2757
    %v3105 = vpop.f32.mrb[0].mxu0
    %v3106 = vadd.f32 0.0, %v3105
    %v3107 = vpop.f32.mrb[0].mxu0
    %3108 = vdwg.mxu0
    %v3109 = vadd.f32 %v2965, %v3035
    %v3110 = vadd.f32 %v2966, %v3037
    %v3111 = vxor.u32 %v3109, 2147483648
    %v3112 = vxor.u32 %v3110, 2147483648
    %v3113 = vmul.f32 %v3111, 1.442695
    %v3114 = vpow.pop %v3113
    %v3115 = vmul.f32 %v3112, 1.442695
    %v3116 = vpow.pop %v3115
    %v3117 = vadd.f32 %v3114, 1.0
    %v3118 = vadd.f32 %v3116, 1.0
    %v3119 = vrcp.pop %v3117
    %v3120 = vmul.f32 1.0, %v3119
    %v3121 = vrcp.pop %v3118
    %v3122 = vmul.f32 1.0, %v3121
    %v3123 = vadd.f32 %v3106, %v112
    %v3124 = vmul.f32 %v3120, %v3123
    %v3125 = vadd.f32 %v2967, %v3124
    %v3126 = vtanh.pop %v3125
    %v3127 = vsub.f32 %v2757, %v3126
    %v3128 = vmul.f32 %v3122, %v3127
    %v3129 = vadd.f32 %v3126, %v3128
    %3130 = vmatprep.subr.mxu0 %v399
    %3131 = vmatpush1.msra.mxu0 %v398
    %3132 = vmatprep.subr.mxu0 %v403
    %3133 = vmatpush1.msra.mxu0 %v402
    %3134 = vmatprep.subr.mxu0 %v407
    %3135 = vmatpush1.msra.mxu0 %v406
    %3136 = vmatprep.subr.mxu0 %v411
    %3137 = vmatpush1.msra.mxu0 %v410
    %3138 = vmatprep.subr.mxu0 %v415
    %3139 = vmatpush1.msra.mxu0 %v414
    %3140 = vmatprep.subr.mxu0 %v419
    %3141 = vmatpush1.msra.mxu0 %v418
    %3142 = vmatprep.subr.mxu0 %v423
    %3143 = vmatpush1.msra.mxu0 %v422
    %3144 = vmatprep.subr.mxu0 %v427
    %3145 = vmatpush1.msra.mxu0 %v426
    %3146 = vmatprep.subr.mxu0 %v431
    %3147 = vmatpush1.msra.mxu0 %v430
    %3148 = vmatprep.subr.mxu0 %v435
    %3149 = vmatpush1.msra.mxu0 %v434
    %3150 = vmatprep.subr.mxu0 %v439
    %3151 = vmatpush1.msra.mxu0 %v438
    %3152 = vmatprep.subr.mxu0 %v443
    %3153 = vmatpush1.msra.mxu0 %v442
    %3154 = vmatprep.subr.mxu0 %v447
    %3155 = vmatpush1.msra.mxu0 %v446
    %3156 = vmatprep.subr.mxu0 %v451
    %3157 = vmatpush1.msra.mxu0 %v450
    %3158 = vmatprep.subr.mxu0 %v455
    %3159 = vmatpush1.msra.mxu0 %v454
    %3160 = vmatprep.subr.mxu0 %v459
    %3161 = vmatpush1.msra.mxu0 %v458
    %3162 = vmatprep.subr.mxu0 %v463
    %3163 = vmatpush1.msra.mxu0 %v462
    %3164 = vmatprep.subr.mxu0 %v467
    %3165 = vmatpush1.msra.mxu0 %v466
    %3166 = vmatprep.subr.mxu0 %v471
    %3167 = vmatpush1.msra.mxu0 %v470
    %3168 = vmatprep.subr.mxu0 %v475
    %3169 = vmatpush1.msra.mxu0 %v474
    %3170 = vmatprep.subr.mxu0 %v479
    %3171 = vmatpush1.msra.mxu0 %v478
    %3172 = vmatprep.subr.mxu0 %v483
    %3173 = vmatpush1.msra.mxu0 %v482
    %3174 = vmatprep.subr.mxu0 %v487
    %3175 = vmatpush1.msra.mxu0 %v486
    %3176 = vmatprep.subr.mxu0 %v491
    %3177 = vmatpush1.msra.mxu0 %v490
    %3178 = vmatprep.subr.mxu0 %v495
    %3179 = vmatpush1.msra.mxu0 %v494
    %3180 = vmatprep.subr.mxu0 %v499
    %3181 = vmatpush1.msra.mxu0 %v498
    %3182 = vmatprep.subr.mxu0 %v503
    %3183 = vmatpush1.msra.mxu0 %v502
    %3184 = vmatprep.subr.mxu0 %v507
    %3185 = vmatpush1.msra.mxu0 %v506
    %3186 = vmatprep.subr.mxu0 %v511
    %3187 = vmatpush1.msra.mxu0 %v510
    %3188 = vmatprep.subr.mxu0 %v515
    %3189 = vmatpush1.msra.mxu0 %v514
    %3190 = vmatprep.subr.mxu0 %v519
    %3191 = vmatpush1.msra.mxu0 %v518
    %3192 = vmatprep.subr.mxu0 %v523
    %3193 = vmatpush1.msra.mxu0 %v522
    %3194 = vmatprep.mubr.f32.mxu0 %v2921
    %3195 = vmatmul.mubr.f32.gmra.mrb[0].mxu0 %v3129
    %v3196 = vpop.f32.mrb[0].mxu0
    %v3197 = vadd.f32 0.0, %v3196
    %v3198 = vpop.f32.mrb[0].mxu0
    %v3199 = vadd.f32 0.0, %v3198
    %3200 = vdwg.mxu0
    %3201 = vmatprep.subr.mxu0 %v401
    %3202 = vmatpush1.msra.mxu0 %v400
    %3203 = vmatprep.subr.mxu0 %v405
    %3204 = vmatpush1.msra.mxu0 %v404
    %3205 = vmatprep.subr.mxu0 %v409
    %3206 = vmatpush1.msra.mxu0 %v408
    %3207 = vmatprep.subr.mxu0 %v413
    %3208 = vmatpush1.msra.mxu0 %v412
    %3209 = vmatprep.subr.mxu0 %v417
    %3210 = vmatpush1.msra.mxu0 %v416
    %3211 = vmatprep.subr.mxu0 %v421
    %3212 = vmatpush1.msra.mxu0 %v420
    %3213 = vmatprep.subr.mxu0 %v425
    %3214 = vmatpush1.msra.mxu0 %v424
    %3215 = vmatprep.subr.mxu0 %v429
    %3216 = vmatpush1.msra.mxu0 %v428
    %3217 = vmatprep.subr.mxu0 %v433
    %3218 = vmatpush1.msra.mxu0 %v432
    %3219 = vmatprep.subr.mxu0 %v437
    %3220 = vmatpush1.msra.mxu0 %v436
    %3221 = vmatprep.subr.mxu0 %v441
    %3222 = vmatpush1.msra.mxu0 %v440
    %3223 = vmatprep.subr.mxu0 %v445
    %3224 = vmatpush1.msra.mxu0 %v444
    %3225 = vmatprep.subr.mxu0 %v449
    %3226 = vmatpush1.msra.mxu0 %v448
    %3227 = vmatprep.subr.mxu0 %v453
    %3228 = vmatpush1.msra.mxu0 %v452
    %3229 = vmatprep.subr.mxu0 %v457
    %3230 = vmatpush1.msra.mxu0 %v456
    %3231 = vmatprep.subr.mxu0 %v461
    %3232 = vmatpush1.msra.mxu0 %v460
    %3233 = vmatprep.subr.mxu0 %v465
    %3234 = vmatpush1.msra.mxu0 %v464
    %3235 = vmatprep.subr.mxu0 %v469
    %3236 = vmatpush1.msra.mxu0 %v468
    %3237 = vmatprep.subr.mxu0 %v473
    %3238 = vmatpush1.msra.mxu0 %v472
    %3239 = vmatprep.subr.mxu0 %v477
    %3240 = vmatpush1.msra.mxu0 %v476
    %3241 = vmatprep.subr.mxu0 %v481
    %3242 = vmatpush1.msra.mxu0 %v480
    %3243 = vmatprep.subr.mxu0 %v485
    %3244 = vmatpush1.msra.mxu0 %v484
    %3245 = vmatprep.subr.mxu0 %v489
    %3246 = vmatpush1.msra.mxu0 %v488
    %3247 = vmatprep.subr.mxu0 %v493
    %3248 = vmatpush1.msra.mxu0 %v492
    %3249 = vmatprep.subr.mxu0 %v497
    %3250 = vmatpush1.msra.mxu0 %v496
    %3251 = vmatprep.subr.mxu0 %v501
    %3252 = vmatpush1.msra.mxu0 %v500
    %3253 = vmatprep.subr.mxu0 %v505
    %3254 = vmatpush1.msra.mxu0 %v504
    %3255 = vmatprep.subr.mxu0 %v509
    %3256 = vmatpush1.msra.mxu0 %v508
    %3257 = vmatprep.subr.mxu0 %v513
    %3258 = vmatpush1.msra.mxu0 %v512
    %3259 = vmatprep.subr.mxu0 %v517
    %3260 = vmatpush1.msra.mxu0 %v516
    %3261 = vmatprep.subr.mxu0 %v521
    %3262 = vmatpush1.msra.mxu0 %v520
    %3263 = vmatprep.subr.mxu0 %v525
    %3264 = vmatpush1.msra.mxu0 %v524
    %3265 = vmatprep.mubr.f32.mxu0 %v2921
    %3266 = vmatmul.mubr.f32.gmra.mrb[0].mxu0 %v3129
    %v3267 = vpop.f32.mrb[0].mxu0
    %v3268 = vadd.f32 0.0, %v3267
    %v3269 = vpop.f32.mrb[0].mxu0
    %v3270 = vadd.f32 0.0, %v3269
    %3271 = vdwg.mxu0
    %v3272 = vadd.f32 %v3197, %v119
    %v3273 = vadd.f32 %v3199, %v123
    %v3274 = vxor.u32 %v3272, 2147483648
    %v3275 = vxor.u32 %v3273, 2147483648
    %v3276 = vmul.f32 %v3274, 1.442695
    %v3277 = vpow.pop %v3276
    %v3278 = vmul.f32 %v3275, 1.442695
    %v3279 = vpow.pop %v3278
    %v3280 = vadd.f32 %v3277, 1.0
    %v3281 = vadd.f32 %v3279, 1.0
    %v3282 = vrcp.pop %v3280
    %v3283 = vmul.f32 1.0, %v3282
    %v3284 = vrcp.pop %v3281
    %v3285 = vmul.f32 1.0, %v3284
    %v3286 = vadd.f32 %v3268, %v131
    %v3287 = vadd.f32 %v3270, %v138
    %v3288 = vmul.f32 %v3283, %v3287
    %v3289 = vadd.f32 %v3286, %v3288
    %v3290 = vtanh.pop %v3289
    %v3291 = vsub.f32 %v2921, %v3290
    %v3292 = vmul.f32 %v3285, %v3291
    %v3293 = vadd.f32 %v3290, %v3292
    %v3294 = vmax.f32 %v3293, 0.0
    %v3295 = vld [vmem:[#allocation9] sm:$0xff]
    %v3296 = vld [vmem:[#allocation9 + $0x8] sm:$0xff]
    %v3297 = vld [vmem:[#allocation9 + $0x10] sm:$0xff]
    %v3298 = vld [vmem:[#allocation9 + $0x18] sm:$0xff]
    %v3299 = vld [vmem:[#allocation9 + $0x20] sm:$0xff]
    %v3300 = vld [vmem:[#allocation9 + $0x28] sm:$0xff]
    %v3301 = vld [vmem:[#allocation9 + $0x30] sm:$0xff]
    %v3302 = vld [vmem:[#allocation9 + $0x38] sm:$0xff]
    %v3303 = vld [vmem:[#allocation9 + $0x40] sm:$0xff]
    %v3304 = vld [vmem:[#allocation9 + $0x48] sm:$0xff]
    %v3305 = vld [vmem:[#allocation9 + $0x50] sm:$0xff]
    %v3306 = vld [vmem:[#allocation9 + $0x58] sm:$0xff]
    %v3307 = vld [vmem:[#allocation9 + $0x60] sm:$0xff]
    %v3308 = vld [vmem:[#allocation9 + $0x68] sm:$0xff]
    %v3309 = vld [vmem:[#allocation9 + $0x70] sm:$0xff]
    %v3310 = vld [vmem:[#allocation9 + $0x78] sm:$0xff]
    %v3311 = vld [vmem:[#allocation9 + $0x80] sm:$0xff]
    %v3312 = vld [vmem:[#allocation9 + $0x88] sm:$0xff]
    %v3313 = vld [vmem:[#allocation9 + $0x90] sm:$0xff]
    %v3314 = vld [vmem:[#allocation9 + $0x98] sm:$0xff]
    %v3315 = vld [vmem:[#allocation9 + $0xa0] sm:$0xff]
    %v3316 = vld [vmem:[#allocation9 + $0xa8] sm:$0xff]
    %v3317 = vld [vmem:[#allocation9 + $0xb0] sm:$0xff]
    %v3318 = vld [vmem:[#allocation9 + $0xb8] sm:$0xff]
    %v3319 = vld [vmem:[#allocation9 + $0xc0] sm:$0xff]
    %v3320 = vld [vmem:[#allocation9 + $0xc8] sm:$0xff]
    %v3321 = vld [vmem:[#allocation9 + $0xd0] sm:$0xff]
    %v3322 = vld [vmem:[#allocation9 + $0xd8] sm:$0xff]
    %v3323 = vld [vmem:[#allocation9 + $0xe0] sm:$0xff]
    %v3324 = vld [vmem:[#allocation9 + $0xe8] sm:$0xff]
    %v3325 = vld [vmem:[#allocation9 + $0xf0] sm:$0xff]
    %v3326 = vld [vmem:[#allocation9 + $0xf8] sm:$0xff]
    %v3327 = vld [vmem:[#allocation9 + $0x100] sm:$0xff]
    %v3328 = vld [vmem:[#allocation9 + $0x108] sm:$0xff]
    %v3329 = vld [vmem:[#allocation9 + $0x110] sm:$0xff]
    %v3330 = vld [vmem:[#allocation9 + $0x118] sm:$0xff]
    %v3331 = vld [vmem:[#allocation9 + $0x120] sm:$0xff]
    %v3332 = vld [vmem:[#allocation9 + $0x128] sm:$0xff]
    %v3333 = vld [vmem:[#allocation9 + $0x130] sm:$0xff]
    %v3334 = vld [vmem:[#allocation9 + $0x138] sm:$0xff]
    %v3335 = vld [vmem:[#allocation9 + $0x140] sm:$0xff]
    %v3336 = vld [vmem:[#allocation9 + $0x148] sm:$0xff]
    %v3337 = vld [vmem:[#allocation9 + $0x150] sm:$0xff]
    %v3338 = vld [vmem:[#allocation9 + $0x158] sm:$0xff]
    %v3339 = vld [vmem:[#allocation9 + $0x160] sm:$0xff]
    %v3340 = vld [vmem:[#allocation9 + $0x168] sm:$0xff]
    %v3341 = vld [vmem:[#allocation9 + $0x170] sm:$0xff]
    %v3342 = vld [vmem:[#allocation9 + $0x178] sm:$0xff]
    %v3343 = vld [vmem:[#allocation9 + $0x180] sm:$0xff]
    %v3344 = vld [vmem:[#allocation9 + $0x188] sm:$0xff]
    %v3345 = vld [vmem:[#allocation9 + $0x190] sm:$0xff]
    %v3346 = vld [vmem:[#allocation9 + $0x198] sm:$0xff]
    %v3347 = vld [vmem:[#allocation9 + $0x1a0] sm:$0xff]
    %v3348 = vld [vmem:[#allocation9 + $0x1a8] sm:$0xff]
    %v3349 = vld [vmem:[#allocation9 + $0x1b0] sm:$0xff]
    %v3350 = vld [vmem:[#allocation9 + $0x1b8] sm:$0xff]
    %v3351 = vld [vmem:[#allocation9 + $0x1c0] sm:$0xff]
    %v3352 = vld [vmem:[#allocation9 + $0x1c8] sm:$0xff]
    %v3353 = vld [vmem:[#allocation9 + $0x1d0] sm:$0xff]
    %v3354 = vld [vmem:[#allocation9 + $0x1d8] sm:$0xff]
    %v3355 = vld [vmem:[#allocation9 + $0x1e0] sm:$0xff]
    %v3356 = vld [vmem:[#allocation9 + $0x1e8] sm:$0xff]
    %v3357 = vld [vmem:[#allocation9 + $0x1f0] sm:$0xff]
    %v3358 = vld [vmem:[#allocation9 + $0x1f8] sm:$0xff]
    %v3359 = vld [vmem:[%s4 + $0x5] sm:$0xf]
    %v3361 = vlaneseq
    %v3362 = vshrl.u32 %v3361, 7
    %v3363 = vsub.s32 0, %v3362
    %v3364 = vrot.slane %v3359, %v3363
    %v3365 = vlaneseq
    %v3366 = vshrl.u32 %v3365, 7
    %v3367 = vsub.s32 1, %v3366
    %v3368 = vrot.slane %v3359, %v3367
    %v3369 = vlaneseq
    %v3370 = vshrl.u32 %v3369, 7
    %v3371 = vsub.s32 2, %v3370
    %v3372 = vrot.slane %v3359, %v3371
    %v3373 = vlaneseq
    %v3374 = vshrl.u32 %v3373, 7
    %v3375 = vsub.s32 3, %v3374
    %v3376 = vrot.slane %v3359, %v3375
    %3381 = vmatprep.subr.mxu0 %v3296
    %3382 = vmatpush1.msra.mxu0 %v3295
    %3383 = vmatprep.subr.mxu0 %v3300
    %3384 = vmatpush1.msra.mxu0 %v3299
    %3385 = vmatprep.subr.mxu0 %v3304
    %3386 = vmatpush1.msra.mxu0 %v3303
    %3387 = vmatprep.subr.mxu0 %v3308
    %3388 = vmatpush1.msra.mxu0 %v3307
    %3389 = vmatprep.subr.mxu0 %v3312
    %3390 = vmatpush1.msra.mxu0 %v3311
    %3391 = vmatprep.subr.mxu0 %v3316
    %3392 = vmatpush1.msra.mxu0 %v3315
    %3393 = vmatprep.subr.mxu0 %v3320
    %3394 = vmatpush1.msra.mxu0 %v3319
    %3395 = vmatprep.subr.mxu0 %v3324
    %3396 = vmatpush1.msra.mxu0 %v3323
    %3397 = vmatprep.subr.mxu0 %v3328
    %3398 = vmatpush1.msra.mxu0 %v3327
    %3399 = vmatprep.subr.mxu0 %v3332
    %3400 = vmatpush1.msra.mxu0 %v3331
    %3401 = vmatprep.subr.mxu0 %v3336
    %3402 = vmatpush1.msra.mxu0 %v3335
    %3403 = vmatprep.subr.mxu0 %v3340
    %3404 = vmatpush1.msra.mxu0 %v3339
    %3405 = vmatprep.subr.mxu0 %v3344
    %3406 = vmatpush1.msra.mxu0 %v3343
    %3407 = vmatprep.subr.mxu0 %v3348
    %3408 = vmatpush1.msra.mxu0 %v3347
    %3409 = vmatprep.subr.mxu0 %v3352
    %3410 = vmatpush1.msra.mxu0 %v3351
    %3411 = vmatprep.subr.mxu0 %v3356
    %3412 = vmatpush1.msra.mxu0 %v3355
    %3413 = vmatprep.subr.mxu0 0.0
    %3414 = vmatpush1.msra.mxu0 0.0
    %3415 = vmatprep.subr.mxu0 0.0
    %3416 = vmatpush1.msra.mxu0 0.0
    %3417 = vmatprep.subr.mxu0 0.0
    %3418 = vmatpush1.msra.mxu0 0.0
    %3419 = vmatprep.subr.mxu0 0.0
    %3420 = vmatpush1.msra.mxu0 0.0
    %3421 = vmatprep.subr.mxu0 0.0
    %3422 = vmatpush1.msra.mxu0 0.0
    %3423 = vmatprep.subr.mxu0 0.0
    %3424 = vmatpush1.msra.mxu0 0.0
    %3425 = vmatprep.subr.mxu0 0.0
    %3426 = vmatpush1.msra.mxu0 0.0
    %3427 = vmatprep.subr.mxu0 0.0
    %3428 = vmatpush1.msra.mxu0 0.0
    %3429 = vmatprep.subr.mxu0 0.0
    %3430 = vmatpush1.msra.mxu0 0.0
    %3431 = vmatprep.subr.mxu0 0.0
    %3432 = vmatpush1.msra.mxu0 0.0
    %3433 = vmatprep.subr.mxu0 0.0
    %3434 = vmatpush1.msra.mxu0 0.0
    %3435 = vmatprep.subr.mxu0 0.0
    %3436 = vmatpush1.msra.mxu0 0.0
    %3437 = vmatprep.subr.mxu0 0.0
    %3438 = vmatpush1.msra.mxu0 0.0
    %3439 = vmatprep.subr.mxu0 0.0
    %3440 = vmatpush1.msra.mxu0 0.0
    %3441 = vmatprep.subr.mxu0 0.0
    %3442 = vmatpush1.msra.mxu0 0.0
    %3443 = vmatprep.subr.mxu0 0.0
    %3444 = vmatpush1.msra.mxu0 0.0
    %3445 = vmatprep.mubr.f32.mxu0 0.0
    %3446 = vmatmul.mubr.f32.gmra.mrb[0].mxu0 %v3294
    %v3447 = vpop.f32.mrb[0].mxu0
    %v3448 = vadd.f32 %v3364, %v3447
    %v3449 = vpop.f32.mrb[0].mxu0
    %v3450 = vadd.f32 %v3368, %v3449
    %3451 = vdwg.mxu0
    %3452 = vmatprep.subr.mxu0 %v3298
    %3453 = vmatpush1.msra.mxu0 %v3297
    %3454 = vmatprep.subr.mxu0 %v3302
    %3455 = vmatpush1.msra.mxu0 %v3301
    %3456 = vmatprep.subr.mxu0 %v3306
    %3457 = vmatpush1.msra.mxu0 %v3305
    %3458 = vmatprep.subr.mxu0 %v3310
    %3459 = vmatpush1.msra.mxu0 %v3309
    %3460 = vmatprep.subr.mxu0 %v3314
    %3461 = vmatpush1.msra.mxu0 %v3313
    %3462 = vmatprep.subr.mxu0 %v3318
    %3463 = vmatpush1.msra.mxu0 %v3317
    %3464 = vmatprep.subr.mxu0 %v3322
    %3465 = vmatpush1.msra.mxu0 %v3321
    %3466 = vmatprep.subr.mxu0 %v3326
    %3467 = vmatpush1.msra.mxu0 %v3325
    %3468 = vmatprep.subr.mxu0 %v3330
    %3469 = vmatpush1.msra.mxu0 %v3329
    %3470 = vmatprep.subr.mxu0 %v3334
    %3471 = vmatpush1.msra.mxu0 %v3333
    %3472 = vmatprep.subr.mxu0 %v3338
    %3473 = vmatpush1.msra.mxu0 %v3337
    %3474 = vmatprep.subr.mxu0 %v3342
    %3475 = vmatpush1.msra.mxu0 %v3341
    %3476 = vmatprep.subr.mxu0 %v3346
    %3477 = vmatpush1.msra.mxu0 %v3345
    %3478 = vmatprep.subr.mxu0 %v3350
    %3479 = vmatpush1.msra.mxu0 %v3349
    %3480 = vmatprep.subr.mxu0 %v3354
    %3481 = vmatpush1.msra.mxu0 %v3353
    %3482 = vmatprep.subr.mxu0 %v3358
    %3483 = vmatpush1.msra.mxu0 %v3357
    %3484 = vmatprep.subr.mxu0 0.0
    %3485 = vmatpush1.msra.mxu0 0.0
    %3486 = vmatprep.subr.mxu0 0.0
    %3487 = vmatpush1.msra.mxu0 0.0
    %3488 = vmatprep.subr.mxu0 0.0
    %3489 = vmatpush1.msra.mxu0 0.0
    %3490 = vmatprep.subr.mxu0 0.0
    %3491 = vmatpush1.msra.mxu0 0.0
    %3492 = vmatprep.subr.mxu0 0.0
    %3493 = vmatpush1.msra.mxu0 0.0
    %3494 = vmatprep.subr.mxu0 0.0
    %3495 = vmatpush1.msra.mxu0 0.0
    %3496 = vmatprep.subr.mxu0 0.0
    %3497 = vmatpush1.msra.mxu0 0.0
    %3498 = vmatprep.subr.mxu0 0.0
    %3499 = vmatpush1.msra.mxu0 0.0
    %3500 = vmatprep.subr.mxu0 0.0
    %3501 = vmatpush1.msra.mxu0 0.0
    %3502 = vmatprep.subr.mxu0 0.0
    %3503 = vmatpush1.msra.mxu0 0.0
    %3504 = vmatprep.subr.mxu0 0.0
    %3505 = vmatpush1.msra.mxu0 0.0
    %3506 = vmatprep.subr.mxu0 0.0
    %3507 = vmatpush1.msra.mxu0 0.0
    %3508 = vmatprep.subr.mxu0 0.0
    %3509 = vmatpush1.msra.mxu0 0.0
    %3510 = vmatprep.subr.mxu0 0.0
    %3511 = vmatpush1.msra.mxu0 0.0
    %3512 = vmatprep.subr.mxu0 0.0
    %3513 = vmatpush1.msra.mxu0 0.0
    %3514 = vmatprep.subr.mxu0 0.0
    %3515 = vmatpush1.msra.mxu0 0.0
    %3516 = vmatprep.mubr.f32.mxu0 0.0
    %3517 = vmatmul.mubr.f32.gmra.mrb[0].mxu0 %v3294
    %v3518 = vpop.f32.mrb[0].mxu0
    %v3519 = vadd.f32 %v3372, %v3518
    %v3520 = vpop.f32.mrb[0].mxu0
    %v3521 = vadd.f32 %v3376, %v3520
    %3522 = vdwg.mxu0
    %v3523 = vmax.f32 %v3448, 0.0
    %v3524 = vmax.f32 %v3450, 0.0
    %v3525 = vmax.f32 %v3519, 0.0
    %v3526 = vmax.f32 %v3521, 0.0
    %v3527 = vld [vmem:[#allocation11] sm:$0xff]
    %v3528 = vld [vmem:[#allocation11 + $0x8] sm:$0xff]
    %v3529 = vld [vmem:[#allocation11 + $0x10] sm:$0xff]
    %v3530 = vld [vmem:[#allocation11 + $0x18] sm:$0xff]
    %v3531 = vld [vmem:[#allocation11 + $0x20] sm:$0xff]
    %v3532 = vld [vmem:[#allocation11 + $0x28] sm:$0xff]
    %v3533 = vld [vmem:[#allocation11 + $0x30] sm:$0xff]
    %v3534 = vld [vmem:[#allocation11 + $0x38] sm:$0xff]
    %v3535 = vld [vmem:[#allocation11 + $0x40] sm:$0xff]
    %v3536 = vld [vmem:[#allocation11 + $0x48] sm:$0xff]
    %v3537 = vld [vmem:[#allocation11 + $0x50] sm:$0xff]
    %v3538 = vld [vmem:[#allocation11 + $0x58] sm:$0xff]
    %v3539 = vld [vmem:[#allocation11 + $0x60] sm:$0xff]
    %v3540 = vld [vmem:[#allocation11 + $0x68] sm:$0xff]
    %v3541 = vld [vmem:[#allocation11 + $0x70] sm:$0xff]
    %v3542 = vld [vmem:[#allocation11 + $0x78] sm:$0xff]
    %v3543 = vld [vmem:[#allocation11 + $0x80] sm:$0xff]
    %v3544 = vld [vmem:[#allocation11 + $0x88] sm:$0xff]
    %v3545 = vld [vmem:[#allocation11 + $0x90] sm:$0xff]
    %v3546 = vld [vmem:[#allocation11 + $0x98] sm:$0xff]
    %v3547 = vld [vmem:[#allocation11 + $0xa0] sm:$0xff]
    %v3548 = vld [vmem:[#allocation11 + $0xa8] sm:$0xff]
    %v3549 = vld [vmem:[#allocation11 + $0xb0] sm:$0xff]
    %v3550 = vld [vmem:[#allocation11 + $0xb8] sm:$0xff]
    %v3551 = vld [vmem:[#allocation11 + $0xc0] sm:$0xff]
    %v3552 = vld [vmem:[#allocation11 + $0xc8] sm:$0xff]
    %v3553 = vld [vmem:[#allocation11 + $0xd0] sm:$0xff]
    %v3554 = vld [vmem:[#allocation11 + $0xd8] sm:$0xff]
    %v3555 = vld [vmem:[#allocation11 + $0xe0] sm:$0xff]
    %v3556 = vld [vmem:[#allocation11 + $0xe8] sm:$0xff]
    %v3557 = vld [vmem:[#allocation11 + $0xf0] sm:$0xff]
    %v3558 = vld [vmem:[#allocation11 + $0xf8] sm:$0xff]
    %v3559 = vld [vmem:[#allocation11 + $0x100] sm:$0xff]
    %v3560 = vld [vmem:[#allocation11 + $0x108] sm:$0xff]
    %v3561 = vld [vmem:[#allocation11 + $0x110] sm:$0xff]
    %v3562 = vld [vmem:[#allocation11 + $0x118] sm:$0xff]
    %v3563 = vld [vmem:[#allocation11 + $0x120] sm:$0xff]
    %v3564 = vld [vmem:[#allocation11 + $0x128] sm:$0xff]
    %v3565 = vld [vmem:[#allocation11 + $0x130] sm:$0xff]
    %v3566 = vld [vmem:[#allocation11 + $0x138] sm:$0xff]
    %v3567 = vld [vmem:[#allocation11 + $0x140] sm:$0xff]
    %v3568 = vld [vmem:[#allocation11 + $0x148] sm:$0xff]
    %v3569 = vld [vmem:[#allocation11 + $0x150] sm:$0xff]
    %v3570 = vld [vmem:[#allocation11 + $0x158] sm:$0xff]
    %v3571 = vld [vmem:[#allocation11 + $0x160] sm:$0xff]
    %v3572 = vld [vmem:[#allocation11 + $0x168] sm:$0xff]
    %v3573 = vld [vmem:[#allocation11 + $0x170] sm:$0xff]
    %v3574 = vld [vmem:[#allocation11 + $0x178] sm:$0xff]
    %v3575 = vld [vmem:[#allocation11 + $0x180] sm:$0xff]
    %v3576 = vld [vmem:[#allocation11 + $0x188] sm:$0xff]
    %v3577 = vld [vmem:[#allocation11 + $0x190] sm:$0xff]
    %v3578 = vld [vmem:[#allocation11 + $0x198] sm:$0xff]
    %v3579 = vld [vmem:[#allocation11 + $0x1a0] sm:$0xff]
    %v3580 = vld [vmem:[#allocation11 + $0x1a8] sm:$0xff]
    %v3581 = vld [vmem:[#allocation11 + $0x1b0] sm:$0xff]
    %v3582 = vld [vmem:[#allocation11 + $0x1b8] sm:$0xff]
    %v3583 = vld [vmem:[#allocation11 + $0x1c0] sm:$0xff]
    %v3584 = vld [vmem:[#allocation11 + $0x1c8] sm:$0xff]
    %v3585 = vld [vmem:[#allocation11 + $0x1d0] sm:$0xff]
    %v3586 = vld [vmem:[#allocation11 + $0x1d8] sm:$0xff]
    %v3587 = vld [vmem:[#allocation11 + $0x1e0] sm:$0xff]
    %v3588 = vld [vmem:[#allocation11 + $0x1e8] sm:$0xff]
    %v3589 = vld [vmem:[#allocation11 + $0x1f0] sm:$0xff]
    %v3590 = vld [vmem:[#allocation11 + $0x1f8] sm:$0xff]
    %v3591 = vld [vmem:[%s4 + $0x9] sm:$0x1]
    %v3593 = vlaneseq
    %v3594 = vshrl.u32 %v3593, 7
    %v3595 = vsub.s32 0, %v3594
    %v3596 = vrot.slane %v3591, %v3595
    %3598 = vmatprep.subr.mxu0 0.0
    %3599 = vmatpush1.msra.mxu0 %v3527
    %3600 = vmatprep.subr.mxu0 0.0
    %3601 = vmatpush1.msra.mxu0 %v3528
    %3602 = vmatprep.subr.mxu0 0.0
    %3603 = vmatpush1.msra.mxu0 %v3529
    %3604 = vmatprep.subr.mxu0 0.0
    %3605 = vmatpush1.msra.mxu0 %v3530
    %3606 = vmatprep.subr.mxu0 0.0
    %3607 = vmatpush1.msra.mxu0 %v3531
    %3608 = vmatprep.subr.mxu0 0.0
    %3609 = vmatpush1.msra.mxu0 %v3532
    %3610 = vmatprep.subr.mxu0 0.0
    %3611 = vmatpush1.msra.mxu0 %v3533
    %3612 = vmatprep.subr.mxu0 0.0
    %3613 = vmatpush1.msra.mxu0 %v3534
    %3614 = vmatprep.subr.mxu0 0.0
    %3615 = vmatpush1.msra.mxu0 %v3535
    %3616 = vmatprep.subr.mxu0 0.0
    %3617 = vmatpush1.msra.mxu0 %v3536
    %3618 = vmatprep.subr.mxu0 0.0
    %3619 = vmatpush1.msra.mxu0 %v3537
    %3620 = vmatprep.subr.mxu0 0.0
    %3621 = vmatpush1.msra.mxu0 %v3538
    %3622 = vmatprep.subr.mxu0 0.0
    %3623 = vmatpush1.msra.mxu0 %v3539
    %3624 = vmatprep.subr.mxu0 0.0
    %3625 = vmatpush1.msra.mxu0 %v3540
    %3626 = vmatprep.subr.mxu0 0.0
    %3627 = vmatpush1.msra.mxu0 %v3541
    %3628 = vmatprep.subr.mxu0 0.0
    %3629 = vmatpush1.msra.mxu0 %v3542
    %3630 = vmatprep.subr.mxu0 0.0
    %3631 = vmatpush1.msra.mxu0 %v3543
    %3632 = vmatprep.subr.mxu0 0.0
    %3633 = vmatpush1.msra.mxu0 %v3544
    %3634 = vmatprep.subr.mxu0 0.0
    %3635 = vmatpush1.msra.mxu0 %v3545
    %3636 = vmatprep.subr.mxu0 0.0
    %3637 = vmatpush1.msra.mxu0 %v3546
    %3638 = vmatprep.subr.mxu0 0.0
    %3639 = vmatpush1.msra.mxu0 %v3547
    %3640 = vmatprep.subr.mxu0 0.0
    %3641 = vmatpush1.msra.mxu0 %v3548
    %3642 = vmatprep.subr.mxu0 0.0
    %3643 = vmatpush1.msra.mxu0 %v3549
    %3644 = vmatprep.subr.mxu0 0.0
    %3645 = vmatpush1.msra.mxu0 %v3550
    %3646 = vmatprep.subr.mxu0 0.0
    %3647 = vmatpush1.msra.mxu0 %v3551
    %3648 = vmatprep.subr.mxu0 0.0
    %3649 = vmatpush1.msra.mxu0 %v3552
    %3650 = vmatprep.subr.mxu0 0.0
    %3651 = vmatpush1.msra.mxu0 %v3553
    %3652 = vmatprep.subr.mxu0 0.0
    %3653 = vmatpush1.msra.mxu0 %v3554
    %3654 = vmatprep.subr.mxu0 0.0
    %3655 = vmatpush1.msra.mxu0 %v3555
    %3656 = vmatprep.subr.mxu0 0.0
    %3657 = vmatpush1.msra.mxu0 %v3556
    %3658 = vmatprep.subr.mxu0 0.0
    %3659 = vmatpush1.msra.mxu0 %v3557
    %3660 = vmatprep.subr.mxu0 0.0
    %3661 = vmatpush1.msra.mxu0 %v3558
    %3662 = vmatprep.mubr.f32.mxu0 %v3524
    %3663 = vmatmul.mubr.f32.gmra.mrb[0].mxu0 %v3523
    %v3664 = vpop.f32.mrb[0].mxu0
    %v3665 = vadd.f32 %v3596, %v3664
    %v3666 = vpop.f32.mrb[0].mxu0
    %3667 = vdwg.mxu0
    %3668 = vmatprep.subr.mxu0 0.0
    %3669 = vmatpush1.msra.mxu0 %v3559
    %3670 = vmatprep.subr.mxu0 0.0
    %3671 = vmatpush1.msra.mxu0 %v3560
    %3672 = vmatprep.subr.mxu0 0.0
    %3673 = vmatpush1.msra.mxu0 %v3561
    %3674 = vmatprep.subr.mxu0 0.0
    %3675 = vmatpush1.msra.mxu0 %v3562
    %3676 = vmatprep.subr.mxu0 0.0
    %3677 = vmatpush1.msra.mxu0 %v3563
    %3678 = vmatprep.subr.mxu0 0.0
    %3679 = vmatpush1.msra.mxu0 %v3564
    %3680 = vmatprep.subr.mxu0 0.0
    %3681 = vmatpush1.msra.mxu0 %v3565
    %3682 = vmatprep.subr.mxu0 0.0
    %3683 = vmatpush1.msra.mxu0 %v3566
    %3684 = vmatprep.subr.mxu0 0.0
    %3685 = vmatpush1.msra.mxu0 %v3567
    %3686 = vmatprep.subr.mxu0 0.0
    %3687 = vmatpush1.msra.mxu0 %v3568
    %3688 = vmatprep.subr.mxu0 0.0
    %3689 = vmatpush1.msra.mxu0 %v3569
    %3690 = vmatprep.subr.mxu0 0.0
    %3691 = vmatpush1.msra.mxu0 %v3570
    %3692 = vmatprep.subr.mxu0 0.0
    %3693 = vmatpush1.msra.mxu0 %v3571
    %3694 = vmatprep.subr.mxu0 0.0
    %3695 = vmatpush1.msra.mxu0 %v3572
    %3696 = vmatprep.subr.mxu0 0.0
    %3697 = vmatpush1.msra.mxu0 %v3573
    %3698 = vmatprep.subr.mxu0 0.0
    %3699 = vmatpush1.msra.mxu0 %v3574
    %3700 = vmatprep.subr.mxu0 0.0
    %3701 = vmatpush1.msra.mxu0 %v3575
    %3702 = vmatprep.subr.mxu0 0.0
    %3703 = vmatpush1.msra.mxu0 %v3576
    %3704 = vmatprep.subr.mxu0 0.0
    %3705 = vmatpush1.msra.mxu0 %v3577
    %3706 = vmatprep.subr.mxu0 0.0
    %3707 = vmatpush1.msra.mxu0 %v3578
    %3708 = vmatprep.subr.mxu0 0.0
    %3709 = vmatpush1.msra.mxu0 %v3579
    %3710 = vmatprep.subr.mxu0 0.0
    %3711 = vmatpush1.msra.mxu0 %v3580
    %3712 = vmatprep.subr.mxu0 0.0
    %3713 = vmatpush1.msra.mxu0 %v3581
    %3714 = vmatprep.subr.mxu0 0.0
    %3715 = vmatpush1.msra.mxu0 %v3582
    %3716 = vmatprep.subr.mxu0 0.0
    %3717 = vmatpush1.msra.mxu0 %v3583
    %3718 = vmatprep.subr.mxu0 0.0
    %3719 = vmatpush1.msra.mxu0 %v3584
    %3720 = vmatprep.subr.mxu0 0.0
    %3721 = vmatpush1.msra.mxu0 %v3585
    %3722 = vmatprep.subr.mxu0 0.0
    %3723 = vmatpush1.msra.mxu0 %v3586
    %3724 = vmatprep.subr.mxu0 0.0
    %3725 = vmatpush1.msra.mxu0 %v3587
    %3726 = vmatprep.subr.mxu0 0.0
    %3727 = vmatpush1.msra.mxu0 %v3588
    %3728 = vmatprep.subr.mxu0 0.0
    %3729 = vmatpush1.msra.mxu0 %v3589
    %3730 = vmatprep.subr.mxu0 0.0
    %3731 = vmatpush1.msra.mxu0 %v3590
    %3732 = vmatprep.mubr.f32.mxu0 %v3526
    %3733 = vmatmul.mubr.f32.gmra.mrb[0].mxu0 %v3525
    %v3734 = vpop.f32.mrb[0].mxu0
    %v3735 = vadd.f32 %v3665, %v3734
    %v3736 = vpop.f32.mrb[0].mxu0
    %3737 = vdwg.mxu0
    %3738 = vmax.xlane.f32.xlu0 %v3735
    %v3739 = vpop.xlane.xlu0 %3738
    %v3740 = vsub.f32 %v3735, %v3739
    %v3741 = vmul.f32 %v3740, 1.442695
    %v3742 = vpow.pop %v3741
    %3743 = vadd.xlane.f32.xlu0 %v3742
    %v3744 = vpop.xlane.xlu0 %3743
    %v3745 = vrcp.pop %v3744
    %v3746 = vmul.f32 %v3744, %v3745
    %v3747 = vsub.f32 2.0, %v3746
    %v3748 = vmul.f32 %v3745, %v3747
    %v3749 = vmul.f32 %v3742, %v3748
    %3750 = vst [vmem:[%s7] sm:$0xff] %v3749
    // Predicated region
    $region54: #{lm_forward.1} parent=1 // pred_check
      _
    $region55: #{lm_forward.1} parent=1 // pred_check_branch
      %3752 = sbr.rel (0) target = $region57
    $region56: #{lm_forward.1} parent=1 // pred_region
      _
    $region57: #{lm_forward.1} parent=1 // pred_fallthru
      _
    // Predicated region
    $region58: #{lm_forward.1} parent=1 // pred_check
      _
    $region59: #{lm_forward.1} parent=1 // pred_check_branch
      %3754 = sbr.rel (0) target = $region61
    $region60: #{lm_forward.1} parent=1 // pred_region
      _
    $region61: #{lm_forward.1} parent=1 // pred_fallthru
      _
    %3755 = vsyncpa [#allocation3], 1
    %3756 = vsyncpa [#allocation7], 1
    %3757 = vsyncpa [#allocation10], 1
    %3758 = vsyncpa [#allocation4], 1

</llo_original>
